<compile_context>
chip_gen: v7x
topology: tpu7x:2x2x1
jax: 0.10.0
libtpu: 0.0.40
codegen_flags: <defaults>
</compile_context>

<pallas_src>
import jax
import jax.numpy as jnp
from jax.experimental import pallas as pl
from jax.experimental.pallas import tpu as pltpu


def _round_up(x, m):
    return ((x + m - 1) // m) * m


# -----------------------------------------------------------------------------
# Fused forward kernel: one grid step == one super-block of NB samples.
# Activations are (C, NB*T) f32 inside the kernel.
# -----------------------------------------------------------------------------
def _make_fused_kernel(layout, T, NB, k, mxu_dtype):
    stacks, norms, head = layout["stacks"], layout["norms"], layout["head"]
    inv_T = 1.0 / float(T)

    def kernel(x_ref, aux_ref, alphas_ref, w_ref, v_ref, o_ref):
        pos = aux_ref[0:1, :]          # (1, NB*T) i32: time index within sample
        seg = aux_ref[1:2, :]          # (1, NB*T) i32: packed-sample id

        def wmat(e):                   # static slice of the matmul-weight slab
            off, r, c = e
            return w_ref[off:off + r, 0:c]

        def vvec(e):                   # (C, 1) f32 bias / gamma / beta slice
            off, r, _ = e
            return v_ref[off:off + r, 0:1]

        def prelu(y, idx):
            a = alphas_ref[idx]        # scalar read from SMEM (nn.PReLU())
            return jnp.where(y >= 0.0, y, a * y)

        def causal_conv(h, taps, b_entry, d):
            # h: (C_in, M) f32.  out[:, t] = sum_j W_j @ h[:, t-(k-1-j)*d] + b,
            # with zeros before the start of each packed sample (== left pad +
            # Chomp1d).  Each shifted tap is an XLU lane-roll + one VPU select:
            # no zero-padded activation copies, no lane-axis im2col concat.
            acc = None
            for j in range(k):
                s = (k - 1 - j) * d
                if s == 0:
                    hj = h
                else:
                    hj = jnp.where(pos >= s, pltpu.roll(h, s, axis=1), 0.0)
                part = jnp.dot(wmat(taps[j]), hj.astype(mxu_dtype),
                               preferred_element_type=jnp.float32)
                acc = part if acc is None else acc + part
            return acc + vvec(b_entry)

        def temporal_block(h, blk):
            a0, d = blk["a_base"], blk["d"]
            out = prelu(causal_conv(h, blk["w1"], blk["b1"], d), a0)
            out = prelu(causal_conv(out, blk["w2"], blk["b2"], d), a0 + 1)
            if blk["wd"] is not None:          # 1x1-conv downsample residual
                res = jnp.dot(wmat(blk["wd"]), h.astype(mxu_dtype),
                              preferred_element_type=jnp.float32) + vvec(blk["bd"])
            else:
                res = h
            return prelu(out + res, a0 + 2)

        def group_norm(h, g_entry, b_entry):
            # nn.GroupNorm(C, C): one channel per group -> per-(sample, channel)
            # statistics over time.  Packed samples are separated with lane
            # masks; statistics stay in f32.
            out = jnp.zeros_like(h)
            for nb in range(NB):
                in_seg = seg == nb
                mean = jnp.sum(jnp.where(in_seg, h, 0.0), axis=1,
                               keepdims=True) * inv_T
                diff = jnp.where(in_seg, h - mean, 0.0)
                var = jnp.sum(diff * diff, axis=1, keepdims=True) * inv_T
                out = out + diff * jax.lax.rsqrt(var + 1e-5)
            return out * vvec(g_entry) + vvec(b_entry)

        h = x_ref[0]                                   # (C_in, NB*T) f32
        for blk in stacks[0]:
            h = temporal_block(h, blk)
        h = group_norm(h, *norms[0])
        for blk in stacks[1]:
            h = temporal_block(h, blk)
        h = group_norm(h, *norms[1])
        for blk in stacks[2]:
            h = temporal_block(h, blk)

        wl, bl = head                                  # Linear + Sigmoid head
        y = jnp.dot(wmat(wl), h.astype(mxu_dtype),
                    preferred_element_type=jnp.float32) + vvec(bl)
        o_ref[0] = jax.nn.sigmoid(y)

    return kernel


# -----------------------------------------------------------------------------
# Parameter packing: two VMEM slabs + one SMEM alpha vector.
# -----------------------------------------------------------------------------
def _make_packer(row_align):
    arrays, entries = [], []
    state = {"off": 0, "maxc": 1}

    def add(a):
        a = jnp.asarray(a, jnp.float32)
        if a.ndim == 1:
            a = a.reshape(-1, 1)
        r, c = a.shape
        entry = (state["off"], r, c)
        arrays.append(a)
        entries.append(entry)
        state["off"] += _round_up(r, row_align)
        state["maxc"] = max(state["maxc"], c)
        return entry

    def finalize(dtype):
        rows = max(state["off"], row_align)
        slab = jnp.zeros((rows, state["maxc"]), dtype)
        for (off, r, c), a in zip(entries, arrays):
            slab = slab.at[off:off + r, :c].set(a.astype(dtype))
        return slab

    return add, finalize


def pack_wiener_params(params, kernel_size, mxu_dtype=jnp.bfloat16):
    """Pack all weights into kernel-ready slabs.

    Matmul weights are stored per-tap as (C_out, C_in) row-blocks of a single
    `mxu_dtype` slab; biases / GroupNorm gamma,beta are (C, 1) row-blocks of
    one f32 slab; PReLU alphas become one SMEM f32 vector.
    """
    w_align = 8 * (4 // jnp.dtype(mxu_dtype).itemsize)   # 8 rows f32, 16 bf16
    add_w, fin_w = _make_packer(w_align)
    add_v, fin_v = _make_packer(8)
    alphas = []

    def pack_stack(blocks):
        descs = []
        for i, p in enumerate(blocks):
            kk = p["w1"].shape[0]
            co = p["w1"].shape[2]
            blk = dict(
                d=2 ** i,
                w1=[add_w(p["w1"][j].T) for j in range(kk)],   # (C_out, C_in)
                b1=add_v(p["b1"].reshape(co, 1)),
                w2=[add_w(p["w2"][j].T) for j in range(kk)],
                b2=add_v(p["b2"].reshape(co, 1)),
                wd=add_w(p["wd"].T) if "wd" in p else None,
                bd=add_v(p["bd"].reshape(co, 1)) if "bd" in p else None,
                a_base=len(alphas),
            )
            alphas.extend([p["a1"], p["a2"], p["a3"]])
            descs.append(blk)
        return descs

    layout = {"stacks": [], "norms": [], "head": None}
    layout["stacks"].append(pack_stack(params["tcn1"]))
    layout["norms"].append((add_v(params["norm1"]["gamma"].reshape(-1, 1)),
                            add_v(params["norm1"]["beta"].reshape(-1, 1))))
    layout["stacks"].append(pack_stack(params["tcn2"]))
    layout["norms"].append((add_v(params["norm2"]["gamma"].reshape(-1, 1)),
                            add_v(params["norm2"]["beta"].reshape(-1, 1))))
    layout["stacks"].append(pack_stack(params["tcn3"]))
    layout["head"] = (add_w(params["line3"]["w"].T),
                      add_v(params["line3"]["b"].reshape(-1, 1)))

    return dict(
        layout=layout,
        w_slab=fin_w(mxu_dtype),
        v_slab=fin_v(jnp.float32),
        alphas=jnp.asarray(alphas, jnp.float32),
        k=kernel_size,
        mxu_dtype=mxu_dtype,
        c_in=params["tcn1"][0]["w1"].shape[1],
        c_out=params["line3"]["w"].shape[1],
        max_shift=(kernel_size - 1) * 2 ** (len(params["tcn1"]) - 1),
    )


# -----------------------------------------------------------------------------
# Wrapper: x (B, T, C_in) -> (B, T, C_out), one pallas_call.
# -----------------------------------------------------------------------------
def wiener_tcn_forward(x, packed, *, batch_block=2):
    B, T, c_in = x.shape
    assert c_in == packed["c_in"]
    # TODO(synk): for (k-1)*2^(L-1) >= T or very long T, tile the time axis
    # with a dilated halo and split GroupNorm into a stats pass + normalize
    # pass (stats carried in scratch) instead of asserting here.
    assert packed["max_shift"] < T

    # Pack NB samples per grid step (amortizes per-step overhead, raises the
    # MXU N dim).  Keep the parallel grid extent >= 2 where possible so v7x's
    # two TensorCores both get work (no-op on v5e/v6e).
    NB = max(1, min(batch_block, B))
    while NB > 1 and (B % NB != 0 or B // NB < 2):
        NB -= 1
    G, M = B // NB, NB * T
    c_out = packed["c_out"]

    # Lane-dense HBM layout: channels -> sublanes, (sample, time) -> lanes.
    x_pk = (x.astype(jnp.float32)
             .reshape(G, NB, T, c_in).transpose(0, 3, 1, 2).reshape(G, c_in, M))
    # Per-lane time-within-sample / sample-id vectors: avoids in-kernel integer
    # div/mod; drives the causal masks and per-sample GroupNorm statistics.
    aux = jnp.stack([jnp.tile(jnp.arange(T, dtype=jnp.int32), NB),
                     jnp.repeat(jnp.arange(NB, dtype=jnp.int32), T)], axis=0)

    const = lambda g: (0, 0)
    out_pk = pl.pallas_call(
        _make_fused_kernel(packed["layout"], T, NB, packed["k"],
                           packed["mxu_dtype"]),
        grid=(G,),
        in_specs=[
            pl.BlockSpec((1, c_in, M), lambda g: (g, 0, 0)),
            pl.BlockSpec(aux.shape, const),
            pl.BlockSpec(memory_space=pltpu.MemorySpace.SMEM),       # alphas
            # Grid-invariant parameter slabs (constant index map -> fetched
            # once).  TODO(synk): single-buffer them (pl.Buffered(1)) to drop
            # the double-buffer copies of the slabs.
            pl.BlockSpec(packed["w_slab"].shape, const),
            pl.BlockSpec(packed["v_slab"].shape, const),
        ],
        out_specs=pl.BlockSpec((1, c_out, M), lambda g: (g, 0, 0)),
        out_shape=jax.ShapeDtypeStruct((G, c_out, M), jnp.float32),
        compiler_params=pltpu.CompilerParams(
            dimension_semantics=("parallel",),
            vmem_limit_bytes=32 * 1024 * 1024),    # explicit v7x-safe budget
    )(x_pk, aux, packed["alphas"], packed["w_slab"], packed["v_slab"])

    return (out_pk.reshape(G, c_out, NB, T)
                  .transpose(0, 2, 3, 1).reshape(B, T, c_out))


# -----------------------------------------------------------------------------
# Synthetic parameters.  Conv weights are (k, C_in, C_out); real PyTorch
# weight_norm Conv1d weights are (C_out, C_in, k) plus g/v factors and would
# be folded + transposed on import.
# -----------------------------------------------------------------------------
def init_tcn_params(key, num_inputs, num_channels, kernel_size):
    blocks = []
    for i, c_out in enumerate(num_channels):
        c_in = num_inputs if i == 0 else num_channels[i - 1]
        key, k1, k2, k3, k4 = jax.random.split(key, 5)
        p = {
            "w1": 0.1 * jax.random.normal(k1, (kernel_size, c_in, c_out), jnp.float32),
            "b1": 0.1 * jax.random.normal(k2, (1, c_out), jnp.float32),
            "a1": 0.25,
            "w2": 0.1 * jax.random.normal(k3, (kernel_size, c_out, c_out), jnp.float32),
            "b2": 0.1 * jax.random.normal(k4, (1, c_out), jnp.float32),
            "a2": 0.25,
            "a3": 0.25,
        }
        if c_in != c_out:                 # nn.Conv1d(c_in, c_out, 1) downsample
            key, k5, k6 = jax.random.split(key, 3)
            p["wd"] = 0.1 * jax.random.normal(k5, (c_in, c_out), jnp.float32)
            p["bd"] = 0.1 * jax.random.normal(k6, (1, c_out), jnp.float32)
        blocks.append(p)
    return key, blocks


def init_wiener_params(key, input_size, output_size, num_channels, kernel_size):
    assert num_channels[-1] == input_size == output_size, \
        "Wiener_TCN wiring requires num_channels[-1] == input_size == output_size"
    params = {}
    key, params["tcn1"] = init_tcn_params(key, input_size, num_channels, kernel_size)
    key, params["tcn2"] = init_tcn_params(key, input_size, num_channels, kernel_size)
    key, params["tcn3"] = init_tcn_params(key, input_size, num_channels, kernel_size)
    key, g1, b1, g2, b2, wl, bl = jax.random.split(key, 7)
    params["norm1"] = {
        "gamma": 1.0 + 0.05 * jax.random.normal(g1, (1, output_size), jnp.float32),
        "beta": 0.05 * jax.random.normal(b1, (1, output_size), jnp.float32),
    }
    params["norm2"] = {
        "gamma": 1.0 + 0.05 * jax.random.normal(g2, (1, output_size), jnp.float32),
        "beta": 0.05 * jax.random.normal(b2, (1, output_size), jnp.float32),
    }
    params["line3"] = {
        "w": 0.1 * jax.random.normal(wl, (input_size, output_size), jnp.float32),
        "b": 0.1 * jax.random.normal(bl, (1, output_size), jnp.float32),
    }
    return params


# -----------------------------------------------------------------------------
# Pure-JAX reference (channel-last), with the same MXU-feed dtype as the
# kernel so the comparison isolates kernel correctness from bf16 rounding.
# -----------------------------------------------------------------------------
def wiener_tcn_reference(x, params, k, mxu_dtype=jnp.float32):
    def mm(h, w):    # (B,T,I) @ (I,O), cast operands at the MXU feed only
        return jnp.einsum("bti,io->bto", h.astype(mxu_dtype), w.astype(mxu_dtype),
                          precision=jax.lax.Precision.HIGHEST,
                          preferred_element_type=jnp.float32)

    def causal_conv(h, w, b, d):
        T = h.shape[1]
        pad = (k - 1) * d
        hp = jnp.pad(h, ((0, 0), (pad, 0), (0, 0)))
        out = None
        for j in range(k):
            part = mm(hp[:, j * d:j * d + T, :], w[j])
            out = part if out is None else out + part
        return out + b

    def prelu(y, a):
        return jnp.where(y >= 0, y, a * y)

    def block(h, p, d):
        out = prelu(causal_conv(h, p["w1"], p["b1"], d), p["a1"])
        out = prelu(causal_conv(out, p["w2"], p["b2"], d), p["a2"])
        res = (mm(h, p["wd"]) + p["bd"]) if "wd" in p else h
        return prelu(out + res, p["a3"])

    def stack(h, blocks):
        for i, p in enumerate(blocks):
            h = block(h, p, 2 ** i)
        return h

    def gnorm(h, p):
        mean = jnp.mean(h, axis=1, keepdims=True)
        var = jnp.mean((h - mean) ** 2, axis=1, keepdims=True)
        return (h - mean) * jax.lax.rsqrt(var + 1e-5) * p["gamma"] + p["beta"]

    h = stack(x, params["tcn1"]); h = gnorm(h, params["norm1"])
    h = stack(h, params["tcn2"]); h = gnorm(h, params["norm2"])
    h = stack(h, params["tcn3"])
    y = mm(h, params["line3"]["w"]) + params["line3"]["b"]
    return jax.nn.sigmoid(y)


if __name__ == "__main__":
    # Small configuration; T chosen as a multiple of 128 so the packed lane
    # dimension is lane-dense.  num_channels exercises both the identity and
    # the 1x1-conv downsample residual paths (dilations 1, 2, 4).
    B, T = 4, 128
    input_size = output_size = 8
    num_channels = [8, 16, 8]
    kernel_size = 2
    # causal=True is baked in: per-sample zero left context + chomp.

    key = jax.random.PRNGKey(0)
    key, xkey = jax.random.split(key)
    x = jax.random.normal(xkey, (B, T, input_size), jnp.float32)

    params = init_wiener_params(key, input_size, output_size,
                                num_channels, kernel_size)
    packed = pack_wiener_params(params, kernel_size, mxu_dtype=jnp.bfloat16)

    fwd = jax.jit(lambda xx: wiener_tcn_forward(xx, packed, batch_block=2))
    y = fwd(x)
    jax.block_until_ready(y)

    y_ref = wiener_tcn_reference(x, params, kernel_size, mxu_dtype=jnp.bfloat16)

    assert y.shape == (B, T, output_size)
    assert bool(jnp.all(jnp.isfinite(y)))
    assert bool(jnp.all((y > 0.0) & (y < 1.0)))          # sigmoid range sanity
    err = float(jnp.max(jnp.abs(y - y_ref)))
    assert err < 2e-3, err
    print("KERNEL_OK")
</pallas_src>

<mosaic_0001>
module attributes {stable_mosaic.version = 11 : i64} {
  func.func @kernel(%arg0: i32, %arg1: memref<1x8x256xf32, #tpu.memory_space<vmem>>, %arg2: memref<2x256xi32, #tpu.memory_space<vmem>>, %arg3: memref<27xf32, #tpu.memory_space<smem>>, %arg4: memref<688x16xbf16, #tpu.memory_space<vmem>>, %arg5: memref<304x1xf32, #tpu.memory_space<vmem>>, %arg6: memref<1x8x256xf32, #tpu.memory_space<vmem>>) attributes {dimension_semantics = [#tpu.dimension_semantics<parallel>], iteration_bounds = array<i64: 2>, scalar_prefetch = 0 : i64, scratch_operands = 0 : i64, tpu.core_type = #tpu.core_type<tc>, window_params = [{transform_indices = @transform_0, window_bounds = array<i64: 1, 8, 256>}, {pipeline_mode = #tpu.pipeline_mode<synchronous>, transform_indices = @transform_1, window_bounds = array<i64: 2, 256>}, {transform_indices = @transform_2, window_bounds = array<i64: 27>}, {pipeline_mode = #tpu.pipeline_mode<synchronous>, transform_indices = @transform_3, window_bounds = array<i64: 688, 16>}, {pipeline_mode = #tpu.pipeline_mode<synchronous>, transform_indices = @transform_4, window_bounds = array<i64: 304, 1>}, {transform_indices = @transform_5, window_bounds = array<i64: 1, 8, 256>}]} {
    %c0 = arith.constant 0 : index
    %c0_0 = arith.constant 0 : index
    %0 = vector.load %arg2[%c0, %c0_0] : memref<2x256xi32, #tpu.memory_space<vmem>>, vector<1x256xi32>
    %c1 = arith.constant 1 : index
    %c0_1 = arith.constant 0 : index
    %1 = vector.load %arg2[%c1, %c0_1] : memref<2x256xi32, #tpu.memory_space<vmem>>, vector<1x256xi32>
    %c0_2 = arith.constant 0 : index
    %c0_3 = arith.constant 0 : index
    %c0_4 = arith.constant 0 : index
    %2 = vector.load %arg1[%c0_2, %c0_3, %c0_4] : memref<1x8x256xf32, #tpu.memory_space<vmem>>, vector<1x8x256xf32>
    %3 = vector.shape_cast %2 : vector<1x8x256xf32> to vector<8x256xf32>
    %c1_i32 = arith.constant 1 : i32
    %4 = vector.broadcast %c1_i32 : i32 to vector<1x256xi32>
    %5 = arith.cmpi sge, %0, %4 : vector<1x256xi32>
    %c1_i32_5 = arith.constant 1 : i32
    %6 = tpu.dynamic_rotate %3 by %c1_i32_5 dim 1 : vector<8x256xf32>, i32 -> vector<8x256xf32>
    %cst = arith.constant 0.000000e+00 : f32
    %7 = vector.shape_cast %5 : vector<1x256xi1> to vector<1x256xi1>
    %8 = vector.broadcast %7 : vector<1x256xi1> to vector<8x256xi1>
    %9 = vector.broadcast %cst : f32 to vector<8x256xf32>
    %10 = arith.select %8, %6, %9 : vector<8x256xi1>, vector<8x256xf32>
    %c0_6 = arith.constant 0 : index
    %c0_7 = arith.constant 0 : index
    %11 = vector.load %arg4[%c0_6, %c0_7] : memref<688x16xbf16, #tpu.memory_space<vmem>>, vector<8x8xbf16>
    %12 = arith.truncf %10 : vector<8x256xf32> to vector<8x256xbf16>
    %cst_8 = arith.constant dense<0.000000e+00> : vector<8x256xf32>
    %13 = tpu.matmul %11, %12, %cst_8 {dimension_numbers = #tpu.dot_dimension_numbers<[1], [0], [0], [1], [0, 0, 1, 1], [], []>} : vector<8x8xbf16>, vector<8x256xbf16>, vector<8x256xf32> -> vector<8x256xf32>
    %c16 = arith.constant 16 : index
    %c0_9 = arith.constant 0 : index
    %14 = vector.load %arg4[%c16, %c0_9] : memref<688x16xbf16, #tpu.memory_space<vmem>>, vector<8x8xbf16>
    %15 = arith.truncf %3 : vector<8x256xf32> to vector<8x256xbf16>
    %cst_10 = arith.constant dense<0.000000e+00> : vector<8x256xf32>
    %16 = tpu.matmul %14, %15, %cst_10 {dimension_numbers = #tpu.dot_dimension_numbers<[1], [0], [0], [1], [0, 0, 1, 1], [], []>} : vector<8x8xbf16>, vector<8x256xbf16>, vector<8x256xf32> -> vector<8x256xf32>
    %17 = arith.addf %13, %16 : vector<8x256xf32>
    %c0_11 = arith.constant 0 : index
    %c0_12 = arith.constant 0 : index
    %18 = vector.load %arg5[%c0_11, %c0_12] : memref<304x1xf32, #tpu.memory_space<vmem>>, vector<8x1xf32>
    %19 = vector.broadcast %18 : vector<8x1xf32> to vector<8x256xf32>
    %20 = arith.addf %17, %19 : vector<8x256xf32>
    %c0_13 = arith.constant 0 : index
    %21 = memref.load %arg3[%c0_13] : memref<27xf32, #tpu.memory_space<smem>>
    %cst_14 = arith.constant 0.000000e+00 : f32
    %22 = vector.broadcast %cst_14 : f32 to vector<8x256xf32>
    %23 = arith.cmpf oge, %20, %22 : vector<8x256xf32>
    %24 = vector.broadcast %21 : f32 to vector<8x256xf32>
    %25 = arith.mulf %24, %20 : vector<8x256xf32>
    %26 = arith.select %23, %20, %25 : vector<8x256xi1>, vector<8x256xf32>
    %c1_i32_15 = arith.constant 1 : i32
    %27 = vector.broadcast %c1_i32_15 : i32 to vector<1x256xi32>
    %28 = arith.cmpi sge, %0, %27 : vector<1x256xi32>
    %c1_i32_16 = arith.constant 1 : i32
    %29 = tpu.dynamic_rotate %26 by %c1_i32_16 dim 1 : vector<8x256xf32>, i32 -> vector<8x256xf32>
    %cst_17 = arith.constant 0.000000e+00 : f32
    %30 = vector.shape_cast %28 : vector<1x256xi1> to vector<1x256xi1>
    %31 = vector.broadcast %30 : vector<1x256xi1> to vector<8x256xi1>
    %32 = vector.broadcast %cst_17 : f32 to vector<8x256xf32>
    %33 = arith.select %31, %29, %32 : vector<8x256xi1>, vector<8x256xf32>
    %c32 = arith.constant 32 : index
    %c0_18 = arith.constant 0 : index
    %34 = vector.load %arg4[%c32, %c0_18] : memref<688x16xbf16, #tpu.memory_space<vmem>>, vector<8x8xbf16>
    %35 = arith.truncf %33 : vector<8x256xf32> to vector<8x256xbf16>
    %cst_19 = arith.constant dense<0.000000e+00> : vector<8x256xf32>
    %36 = tpu.matmul %34, %35, %cst_19 {dimension_numbers = #tpu.dot_dimension_numbers<[1], [0], [0], [1], [0, 0, 1, 1], [], []>} : vector<8x8xbf16>, vector<8x256xbf16>, vector<8x256xf32> -> vector<8x256xf32>
    %c48 = arith.constant 48 : index
    %c0_20 = arith.constant 0 : index
    %37 = vector.load %arg4[%c48, %c0_20] : memref<688x16xbf16, #tpu.memory_space<vmem>>, vector<8x8xbf16>
    %38 = arith.truncf %26 : vector<8x256xf32> to vector<8x256xbf16>
    %cst_21 = arith.constant dense<0.000000e+00> : vector<8x256xf32>
    %39 = tpu.matmul %37, %38, %cst_21 {dimension_numbers = #tpu.dot_dimension_numbers<[1], [0], [0], [1], [0, 0, 1, 1], [], []>} : vector<8x8xbf16>, vector<8x256xbf16>, vector<8x256xf32> -> vector<8x256xf32>
    %40 = arith.addf %36, %39 : vector<8x256xf32>
    %c8 = arith.constant 8 : index
    %c0_22 = arith.constant 0 : index
    %41 = vector.load %arg5[%c8, %c0_22] : memref<304x1xf32, #tpu.memory_space<vmem>>, vector<8x1xf32>
    %42 = vector.broadcast %41 : vector<8x1xf32> to vector<8x256xf32>
    %43 = arith.addf %40, %42 : vector<8x256xf32>
    %c1_23 = arith.constant 1 : index
    %44 = memref.load %arg3[%c1_23] : memref<27xf32, #tpu.memory_space<smem>>
    %cst_24 = arith.constant 0.000000e+00 : f32
    %45 = vector.broadcast %cst_24 : f32 to vector<8x256xf32>
    %46 = arith.cmpf oge, %43, %45 : vector<8x256xf32>
    %47 = vector.broadcast %44 : f32 to vector<8x256xf32>
    %48 = arith.mulf %47, %43 : vector<8x256xf32>
    %49 = arith.select %46, %43, %48 : vector<8x256xi1>, vector<8x256xf32>
    %50 = arith.addf %49, %3 : vector<8x256xf32>
    %c2 = arith.constant 2 : index
    %51 = memref.load %arg3[%c2] : memref<27xf32, #tpu.memory_space<smem>>
    %cst_25 = arith.constant 0.000000e+00 : f32
    %52 = vector.broadcast %cst_25 : f32 to vector<8x256xf32>
    %53 = arith.cmpf oge, %50, %52 : vector<8x256xf32>
    %54 = vector.broadcast %51 : f32 to vector<8x256xf32>
    %55 = arith.mulf %54, %50 : vector<8x256xf32>
    %56 = arith.select %53, %50, %55 : vector<8x256xi1>, vector<8x256xf32>
    %c2_i32 = arith.constant 2 : i32
    %57 = vector.broadcast %c2_i32 : i32 to vector<1x256xi32>
    %58 = arith.cmpi sge, %0, %57 : vector<1x256xi32>
    %c2_i32_26 = arith.constant 2 : i32
    %59 = tpu.dynamic_rotate %56 by %c2_i32_26 dim 1 : vector<8x256xf32>, i32 -> vector<8x256xf32>
    %cst_27 = arith.constant 0.000000e+00 : f32
    %60 = vector.shape_cast %58 : vector<1x256xi1> to vector<1x256xi1>
    %61 = vector.broadcast %60 : vector<1x256xi1> to vector<8x256xi1>
    %62 = vector.broadcast %cst_27 : f32 to vector<8x256xf32>
    %63 = arith.select %61, %59, %62 : vector<8x256xi1>, vector<8x256xf32>
    %c64 = arith.constant 64 : index
    %c0_28 = arith.constant 0 : index
    %64 = vector.load %arg4[%c64, %c0_28] : memref<688x16xbf16, #tpu.memory_space<vmem>>, vector<16x8xbf16>
    %65 = arith.truncf %63 : vector<8x256xf32> to vector<8x256xbf16>
    %cst_29 = arith.constant dense<0.000000e+00> : vector<16x256xf32>
    %66 = tpu.matmul %64, %65, %cst_29 {dimension_numbers = #tpu.dot_dimension_numbers<[1], [0], [0], [1], [0, 0, 1, 1], [], []>} : vector<16x8xbf16>, vector<8x256xbf16>, vector<16x256xf32> -> vector<16x256xf32>
    %c80 = arith.constant 80 : index
    %c0_30 = arith.constant 0 : index
    %67 = vector.load %arg4[%c80, %c0_30] : memref<688x16xbf16, #tpu.memory_space<vmem>>, vector<16x8xbf16>
    %68 = arith.truncf %56 : vector<8x256xf32> to vector<8x256xbf16>
    %cst_31 = arith.constant dense<0.000000e+00> : vector<16x256xf32>
    %69 = tpu.matmul %67, %68, %cst_31 {dimension_numbers = #tpu.dot_dimension_numbers<[1], [0], [0], [1], [0, 0, 1, 1], [], []>} : vector<16x8xbf16>, vector<8x256xbf16>, vector<16x256xf32> -> vector<16x256xf32>
    %70 = arith.addf %66, %69 : vector<16x256xf32>
    %c16_32 = arith.constant 16 : index
    %c0_33 = arith.constant 0 : index
    %71 = vector.load %arg5[%c16_32, %c0_33] : memref<304x1xf32, #tpu.memory_space<vmem>>, vector<16x1xf32>
    %72 = vector.broadcast %71 : vector<16x1xf32> to vector<16x256xf32>
    %73 = arith.addf %70, %72 : vector<16x256xf32>
    %c3 = arith.constant 3 : index
    %74 = memref.load %arg3[%c3] : memref<27xf32, #tpu.memory_space<smem>>
    %cst_34 = arith.constant 0.000000e+00 : f32
    %75 = vector.broadcast %cst_34 : f32 to vector<16x256xf32>
    %76 = arith.cmpf oge, %73, %75 : vector<16x256xf32>
    %77 = vector.broadcast %74 : f32 to vector<16x256xf32>
    %78 = arith.mulf %77, %73 : vector<16x256xf32>
    %79 = arith.select %76, %73, %78 : vector<16x256xi1>, vector<16x256xf32>
    %c2_i32_35 = arith.constant 2 : i32
    %80 = vector.broadcast %c2_i32_35 : i32 to vector<1x256xi32>
    %81 = arith.cmpi sge, %0, %80 : vector<1x256xi32>
    %c2_i32_36 = arith.constant 2 : i32
    %82 = tpu.dynamic_rotate %79 by %c2_i32_36 dim 1 : vector<16x256xf32>, i32 -> vector<16x256xf32>
    %cst_37 = arith.constant 0.000000e+00 : f32
    %83 = vector.shape_cast %81 : vector<1x256xi1> to vector<1x256xi1>
    %84 = vector.broadcast %83 : vector<1x256xi1> to vector<16x256xi1>
    %85 = vector.broadcast %cst_37 : f32 to vector<16x256xf32>
    %86 = arith.select %84, %82, %85 : vector<16x256xi1>, vector<16x256xf32>
    %c96 = arith.constant 96 : index
    %c0_38 = arith.constant 0 : index
    %87 = vector.load %arg4[%c96, %c0_38] : memref<688x16xbf16, #tpu.memory_space<vmem>>, vector<16x16xbf16>
    %88 = arith.truncf %86 : vector<16x256xf32> to vector<16x256xbf16>
    %cst_39 = arith.constant dense<0.000000e+00> : vector<16x256xf32>
    %89 = tpu.matmul %87, %88, %cst_39 {dimension_numbers = #tpu.dot_dimension_numbers<[1], [0], [0], [1], [0, 0, 1, 1], [], []>} : vector<16x16xbf16>, vector<16x256xbf16>, vector<16x256xf32> -> vector<16x256xf32>
    %c112 = arith.constant 112 : index
    %c0_40 = arith.constant 0 : index
    %90 = vector.load %arg4[%c112, %c0_40] : memref<688x16xbf16, #tpu.memory_space<vmem>>, vector<16x16xbf16>
    %91 = arith.truncf %79 : vector<16x256xf32> to vector<16x256xbf16>
    %cst_41 = arith.constant dense<0.000000e+00> : vector<16x256xf32>
    %92 = tpu.matmul %90, %91, %cst_41 {dimension_numbers = #tpu.dot_dimension_numbers<[1], [0], [0], [1], [0, 0, 1, 1], [], []>} : vector<16x16xbf16>, vector<16x256xbf16>, vector<16x256xf32> -> vector<16x256xf32>
    %93 = arith.addf %89, %92 : vector<16x256xf32>
    %c32_42 = arith.constant 32 : index
    %c0_43 = arith.constant 0 : index
    %94 = vector.load %arg5[%c32_42, %c0_43] : memref<304x1xf32, #tpu.memory_space<vmem>>, vector<16x1xf32>
    %95 = vector.broadcast %94 : vector<16x1xf32> to vector<16x256xf32>
    %96 = arith.addf %93, %95 : vector<16x256xf32>
    %c4 = arith.constant 4 : index
    %97 = memref.load %arg3[%c4] : memref<27xf32, #tpu.memory_space<smem>>
    %cst_44 = arith.constant 0.000000e+00 : f32
    %98 = vector.broadcast %cst_44 : f32 to vector<16x256xf32>
    %99 = arith.cmpf oge, %96, %98 : vector<16x256xf32>
    %100 = vector.broadcast %97 : f32 to vector<16x256xf32>
    %101 = arith.mulf %100, %96 : vector<16x256xf32>
    %102 = arith.select %99, %96, %101 : vector<16x256xi1>, vector<16x256xf32>
    %c128 = arith.constant 128 : index
    %c0_45 = arith.constant 0 : index
    %103 = vector.load %arg4[%c128, %c0_45] : memref<688x16xbf16, #tpu.memory_space<vmem>>, vector<16x8xbf16>
    %104 = arith.truncf %56 : vector<8x256xf32> to vector<8x256xbf16>
    %cst_46 = arith.constant dense<0.000000e+00> : vector<16x256xf32>
    %105 = tpu.matmul %103, %104, %cst_46 {dimension_numbers = #tpu.dot_dimension_numbers<[1], [0], [0], [1], [0, 0, 1, 1], [], []>} : vector<16x8xbf16>, vector<8x256xbf16>, vector<16x256xf32> -> vector<16x256xf32>
    %c48_47 = arith.constant 48 : index
    %c0_48 = arith.constant 0 : index
    %106 = vector.load %arg5[%c48_47, %c0_48] : memref<304x1xf32, #tpu.memory_space<vmem>>, vector<16x1xf32>
    %107 = vector.broadcast %106 : vector<16x1xf32> to vector<16x256xf32>
    %108 = arith.addf %105, %107 : vector<16x256xf32>
    %109 = arith.addf %102, %108 : vector<16x256xf32>
    %c5 = arith.constant 5 : index
    %110 = memref.load %arg3[%c5] : memref<27xf32, #tpu.memory_space<smem>>
    %cst_49 = arith.constant 0.000000e+00 : f32
    %111 = vector.broadcast %cst_49 : f32 to vector<16x256xf32>
    %112 = arith.cmpf oge, %109, %111 : vector<16x256xf32>
    %113 = vector.broadcast %110 : f32 to vector<16x256xf32>
    %114 = arith.mulf %113, %109 : vector<16x256xf32>
    %115 = arith.select %112, %109, %114 : vector<16x256xi1>, vector<16x256xf32>
    %c4_i32 = arith.constant 4 : i32
    %116 = vector.broadcast %c4_i32 : i32 to vector<1x256xi32>
    %117 = arith.cmpi sge, %0, %116 : vector<1x256xi32>
    %c4_i32_50 = arith.constant 4 : i32
    %118 = tpu.dynamic_rotate %115 by %c4_i32_50 dim 1 : vector<16x256xf32>, i32 -> vector<16x256xf32>
    %cst_51 = arith.constant 0.000000e+00 : f32
    %119 = vector.shape_cast %117 : vector<1x256xi1> to vector<1x256xi1>
    %120 = vector.broadcast %119 : vector<1x256xi1> to vector<16x256xi1>
    %121 = vector.broadcast %cst_51 : f32 to vector<16x256xf32>
    %122 = arith.select %120, %118, %121 : vector<16x256xi1>, vector<16x256xf32>
    %c144 = arith.constant 144 : index
    %c0_52 = arith.constant 0 : index
    %123 = vector.load %arg4[%c144, %c0_52] : memref<688x16xbf16, #tpu.memory_space<vmem>>, vector<8x16xbf16>
    %124 = arith.truncf %122 : vector<16x256xf32> to vector<16x256xbf16>
    %cst_53 = arith.constant dense<0.000000e+00> : vector<8x256xf32>
    %125 = tpu.matmul %123, %124, %cst_53 {dimension_numbers = #tpu.dot_dimension_numbers<[1], [0], [0], [1], [0, 0, 1, 1], [], []>} : vector<8x16xbf16>, vector<16x256xbf16>, vector<8x256xf32> -> vector<8x256xf32>
    %c160 = arith.constant 160 : index
    %c0_54 = arith.constant 0 : index
    %126 = vector.load %arg4[%c160, %c0_54] : memref<688x16xbf16, #tpu.memory_space<vmem>>, vector<8x16xbf16>
    %127 = arith.truncf %115 : vector<16x256xf32> to vector<16x256xbf16>
    %cst_55 = arith.constant dense<0.000000e+00> : vector<8x256xf32>
    %128 = tpu.matmul %126, %127, %cst_55 {dimension_numbers = #tpu.dot_dimension_numbers<[1], [0], [0], [1], [0, 0, 1, 1], [], []>} : vector<8x16xbf16>, vector<16x256xbf16>, vector<8x256xf32> -> vector<8x256xf32>
    %129 = arith.addf %125, %128 : vector<8x256xf32>
    %c64_56 = arith.constant 64 : index
    %c0_57 = arith.constant 0 : index
    %130 = vector.load %arg5[%c64_56, %c0_57] : memref<304x1xf32, #tpu.memory_space<vmem>>, vector<8x1xf32>
    %131 = vector.broadcast %130 : vector<8x1xf32> to vector<8x256xf32>
    %132 = arith.addf %129, %131 : vector<8x256xf32>
    %c6 = arith.constant 6 : index
    %133 = memref.load %arg3[%c6] : memref<27xf32, #tpu.memory_space<smem>>
    %cst_58 = arith.constant 0.000000e+00 : f32
    %134 = vector.broadcast %cst_58 : f32 to vector<8x256xf32>
    %135 = arith.cmpf oge, %132, %134 : vector<8x256xf32>
    %136 = vector.broadcast %133 : f32 to vector<8x256xf32>
    %137 = arith.mulf %136, %132 : vector<8x256xf32>
    %138 = arith.select %135, %132, %137 : vector<8x256xi1>, vector<8x256xf32>
    %c4_i32_59 = arith.constant 4 : i32
    %139 = vector.broadcast %c4_i32_59 : i32 to vector<1x256xi32>
    %140 = arith.cmpi sge, %0, %139 : vector<1x256xi32>
    %c4_i32_60 = arith.constant 4 : i32
    %141 = tpu.dynamic_rotate %138 by %c4_i32_60 dim 1 : vector<8x256xf32>, i32 -> vector<8x256xf32>
    %cst_61 = arith.constant 0.000000e+00 : f32
    %142 = vector.shape_cast %140 : vector<1x256xi1> to vector<1x256xi1>
    %143 = vector.broadcast %142 : vector<1x256xi1> to vector<8x256xi1>
    %144 = vector.broadcast %cst_61 : f32 to vector<8x256xf32>
    %145 = arith.select %143, %141, %144 : vector<8x256xi1>, vector<8x256xf32>
    %c176 = arith.constant 176 : index
    %c0_62 = arith.constant 0 : index
    %146 = vector.load %arg4[%c176, %c0_62] : memref<688x16xbf16, #tpu.memory_space<vmem>>, vector<8x8xbf16>
    %147 = arith.truncf %145 : vector<8x256xf32> to vector<8x256xbf16>
    %cst_63 = arith.constant dense<0.000000e+00> : vector<8x256xf32>
    %148 = tpu.matmul %146, %147, %cst_63 {dimension_numbers = #tpu.dot_dimension_numbers<[1], [0], [0], [1], [0, 0, 1, 1], [], []>} : vector<8x8xbf16>, vector<8x256xbf16>, vector<8x256xf32> -> vector<8x256xf32>
    %c192 = arith.constant 192 : index
    %c0_64 = arith.constant 0 : index
    %149 = vector.load %arg4[%c192, %c0_64] : memref<688x16xbf16, #tpu.memory_space<vmem>>, vector<8x8xbf16>
    %150 = arith.truncf %138 : vector<8x256xf32> to vector<8x256xbf16>
    %cst_65 = arith.constant dense<0.000000e+00> : vector<8x256xf32>
    %151 = tpu.matmul %149, %150, %cst_65 {dimension_numbers = #tpu.dot_dimension_numbers<[1], [0], [0], [1], [0, 0, 1, 1], [], []>} : vector<8x8xbf16>, vector<8x256xbf16>, vector<8x256xf32> -> vector<8x256xf32>
    %152 = arith.addf %148, %151 : vector<8x256xf32>
    %c72 = arith.constant 72 : index
    %c0_66 = arith.constant 0 : index
    %153 = vector.load %arg5[%c72, %c0_66] : memref<304x1xf32, #tpu.memory_space<vmem>>, vector<8x1xf32>
    %154 = vector.broadcast %153 : vector<8x1xf32> to vector<8x256xf32>
    %155 = arith.addf %152, %154 : vector<8x256xf32>
    %c7 = arith.constant 7 : index
    %156 = memref.load %arg3[%c7] : memref<27xf32, #tpu.memory_space<smem>>
    %cst_67 = arith.constant 0.000000e+00 : f32
    %157 = vector.broadcast %cst_67 : f32 to vector<8x256xf32>
    %158 = arith.cmpf oge, %155, %157 : vector<8x256xf32>
    %159 = vector.broadcast %156 : f32 to vector<8x256xf32>
    %160 = arith.mulf %159, %155 : vector<8x256xf32>
    %161 = arith.select %158, %155, %160 : vector<8x256xi1>, vector<8x256xf32>
    %c208 = arith.constant 208 : index
    %c0_68 = arith.constant 0 : index
    %162 = vector.load %arg4[%c208, %c0_68] : memref<688x16xbf16, #tpu.memory_space<vmem>>, vector<8x16xbf16>
    %163 = arith.truncf %115 : vector<16x256xf32> to vector<16x256xbf16>
    %cst_69 = arith.constant dense<0.000000e+00> : vector<8x256xf32>
    %164 = tpu.matmul %162, %163, %cst_69 {dimension_numbers = #tpu.dot_dimension_numbers<[1], [0], [0], [1], [0, 0, 1, 1], [], []>} : vector<8x16xbf16>, vector<16x256xbf16>, vector<8x256xf32> -> vector<8x256xf32>
    %c80_70 = arith.constant 80 : index
    %c0_71 = arith.constant 0 : index
    %165 = vector.load %arg5[%c80_70, %c0_71] : memref<304x1xf32, #tpu.memory_space<vmem>>, vector<8x1xf32>
    %166 = vector.broadcast %165 : vector<8x1xf32> to vector<8x256xf32>
    %167 = arith.addf %164, %166 : vector<8x256xf32>
    %168 = arith.addf %161, %167 : vector<8x256xf32>
    %c8_72 = arith.constant 8 : index
    %169 = memref.load %arg3[%c8_72] : memref<27xf32, #tpu.memory_space<smem>>
    %cst_73 = arith.constant 0.000000e+00 : f32
    %170 = vector.broadcast %cst_73 : f32 to vector<8x256xf32>
    %171 = arith.cmpf oge, %168, %170 : vector<8x256xf32>
    %172 = vector.broadcast %169 : f32 to vector<8x256xf32>
    %173 = arith.mulf %172, %168 : vector<8x256xf32>
    %174 = arith.select %171, %168, %173 : vector<8x256xi1>, vector<8x256xf32>
    %cst_74 = arith.constant 0.000000e+00 : f32
    %175 = vector.broadcast %cst_74 : f32 to vector<8x256xf32>
    %c0_i32 = arith.constant 0 : i32
    %176 = vector.broadcast %c0_i32 : i32 to vector<1x256xi32>
    %177 = arith.cmpi eq, %1, %176 : vector<1x256xi32>
    %cst_75 = arith.constant 0.000000e+00 : f32
    %178 = vector.shape_cast %177 : vector<1x256xi1> to vector<1x256xi1>
    %179 = vector.broadcast %178 : vector<1x256xi1> to vector<8x256xi1>
    %180 = vector.broadcast %cst_75 : f32 to vector<8x256xf32>
    %181 = arith.select %179, %174, %180 : vector<8x256xi1>, vector<8x256xf32>
    %cst_76 = arith.constant dense<0.000000e+00> : vector<8xf32>
    %182 = vector.multi_reduction <add>, %181, %cst_76 [1] : vector<8x256xf32> to vector<8xf32>
    %183 = vector.shape_cast %182 : vector<8xf32> to vector<8x1xf32>
    %cst_77 = arith.constant 7.812500e-03 : f32
    %184 = vector.broadcast %cst_77 : f32 to vector<8x1xf32>
    %185 = arith.mulf %183, %184 : vector<8x1xf32>
    %186 = vector.broadcast %185 : vector<8x1xf32> to vector<8x256xf32>
    %187 = arith.subf %174, %186 : vector<8x256xf32>
    %cst_78 = arith.constant 0.000000e+00 : f32
    %188 = vector.shape_cast %177 : vector<1x256xi1> to vector<1x256xi1>
    %189 = vector.broadcast %188 : vector<1x256xi1> to vector<8x256xi1>
    %190 = vector.broadcast %cst_78 : f32 to vector<8x256xf32>
    %191 = arith.select %189, %187, %190 : vector<8x256xi1>, vector<8x256xf32>
    %192 = arith.mulf %191, %191 : vector<8x256xf32>
    %cst_79 = arith.constant dense<0.000000e+00> : vector<8xf32>
    %193 = vector.multi_reduction <add>, %192, %cst_79 [1] : vector<8x256xf32> to vector<8xf32>
    %194 = vector.shape_cast %193 : vector<8xf32> to vector<8x1xf32>
    %cst_80 = arith.constant 7.812500e-03 : f32
    %195 = vector.broadcast %cst_80 : f32 to vector<8x1xf32>
    %196 = arith.mulf %194, %195 : vector<8x1xf32>
    %cst_81 = arith.constant 9.99999974E-6 : f32
    %197 = vector.broadcast %cst_81 : f32 to vector<8x1xf32>
    %198 = arith.addf %196, %197 : vector<8x1xf32>
    %199 = math.rsqrt %198 : vector<8x1xf32>
    %200 = vector.broadcast %199 : vector<8x1xf32> to vector<8x256xf32>
    %201 = arith.mulf %191, %200 : vector<8x256xf32>
    %202 = arith.addf %175, %201 : vector<8x256xf32>
    %c1_i32_82 = arith.constant 1 : i32
    %203 = vector.broadcast %c1_i32_82 : i32 to vector<1x256xi32>
    %204 = arith.cmpi eq, %1, %203 : vector<1x256xi32>
    %cst_83 = arith.constant 0.000000e+00 : f32
    %205 = vector.shape_cast %204 : vector<1x256xi1> to vector<1x256xi1>
    %206 = vector.broadcast %205 : vector<1x256xi1> to vector<8x256xi1>
    %207 = vector.broadcast %cst_83 : f32 to vector<8x256xf32>
    %208 = arith.select %206, %174, %207 : vector<8x256xi1>, vector<8x256xf32>
    %cst_84 = arith.constant dense<0.000000e+00> : vector<8xf32>
    %209 = vector.multi_reduction <add>, %208, %cst_84 [1] : vector<8x256xf32> to vector<8xf32>
    %210 = vector.shape_cast %209 : vector<8xf32> to vector<8x1xf32>
    %cst_85 = arith.constant 7.812500e-03 : f32
    %211 = vector.broadcast %cst_85 : f32 to vector<8x1xf32>
    %212 = arith.mulf %210, %211 : vector<8x1xf32>
    %213 = vector.broadcast %212 : vector<8x1xf32> to vector<8x256xf32>
    %214 = arith.subf %174, %213 : vector<8x256xf32>
    %cst_86 = arith.constant 0.000000e+00 : f32
    %215 = vector.shape_cast %204 : vector<1x256xi1> to vector<1x256xi1>
    %216 = vector.broadcast %215 : vector<1x256xi1> to vector<8x256xi1>
    %217 = vector.broadcast %cst_86 : f32 to vector<8x256xf32>
    %218 = arith.select %216, %214, %217 : vector<8x256xi1>, vector<8x256xf32>
    %219 = arith.mulf %218, %218 : vector<8x256xf32>
    %cst_87 = arith.constant dense<0.000000e+00> : vector<8xf32>
    %220 = vector.multi_reduction <add>, %219, %cst_87 [1] : vector<8x256xf32> to vector<8xf32>
    %221 = vector.shape_cast %220 : vector<8xf32> to vector<8x1xf32>
    %cst_88 = arith.constant 7.812500e-03 : f32
    %222 = vector.broadcast %cst_88 : f32 to vector<8x1xf32>
    %223 = arith.mulf %221, %222 : vector<8x1xf32>
    %cst_89 = arith.constant 9.99999974E-6 : f32
    %224 = vector.broadcast %cst_89 : f32 to vector<8x1xf32>
    %225 = arith.addf %223, %224 : vector<8x1xf32>
    %226 = math.rsqrt %225 : vector<8x1xf32>
    %227 = vector.broadcast %226 : vector<8x1xf32> to vector<8x256xf32>
    %228 = arith.mulf %218, %227 : vector<8x256xf32>
    %229 = arith.addf %202, %228 : vector<8x256xf32>
    %c88 = arith.constant 88 : index
    %c0_90 = arith.constant 0 : index
    %230 = vector.load %arg5[%c88, %c0_90] : memref<304x1xf32, #tpu.memory_space<vmem>>, vector<8x1xf32>
    %231 = vector.broadcast %230 : vector<8x1xf32> to vector<8x256xf32>
    %232 = arith.mulf %229, %231 : vector<8x256xf32>
    %c96_91 = arith.constant 96 : index
    %c0_92 = arith.constant 0 : index
    %233 = vector.load %arg5[%c96_91, %c0_92] : memref<304x1xf32, #tpu.memory_space<vmem>>, vector<8x1xf32>
    %234 = vector.broadcast %233 : vector<8x1xf32> to vector<8x256xf32>
    %235 = arith.addf %232, %234 : vector<8x256xf32>
    %c1_i32_93 = arith.constant 1 : i32
    %236 = vector.broadcast %c1_i32_93 : i32 to vector<1x256xi32>
    %237 = arith.cmpi sge, %0, %236 : vector<1x256xi32>
    %c1_i32_94 = arith.constant 1 : i32
    %238 = tpu.dynamic_rotate %235 by %c1_i32_94 dim 1 : vector<8x256xf32>, i32 -> vector<8x256xf32>
    %cst_95 = arith.constant 0.000000e+00 : f32
    %239 = vector.shape_cast %237 : vector<1x256xi1> to vector<1x256xi1>
    %240 = vector.broadcast %239 : vector<1x256xi1> to vector<8x256xi1>
    %241 = vector.broadcast %cst_95 : f32 to vector<8x256xf32>
    %242 = arith.select %240, %238, %241 : vector<8x256xi1>, vector<8x256xf32>
    %c224 = arith.constant 224 : index
    %c0_96 = arith.constant 0 : index
    %243 = vector.load %arg4[%c224, %c0_96] : memref<688x16xbf16, #tpu.memory_space<vmem>>, vector<8x8xbf16>
    %244 = arith.truncf %242 : vector<8x256xf32> to vector<8x256xbf16>
    %cst_97 = arith.constant dense<0.000000e+00> : vector<8x256xf32>
    %245 = tpu.matmul %243, %244, %cst_97 {dimension_numbers = #tpu.dot_dimension_numbers<[1], [0], [0], [1], [0, 0, 1, 1], [], []>} : vector<8x8xbf16>, vector<8x256xbf16>, vector<8x256xf32> -> vector<8x256xf32>
    %c240 = arith.constant 240 : index
    %c0_98 = arith.constant 0 : index
    %246 = vector.load %arg4[%c240, %c0_98] : memref<688x16xbf16, #tpu.memory_space<vmem>>, vector<8x8xbf16>
    %247 = arith.truncf %235 : vector<8x256xf32> to vector<8x256xbf16>
    %cst_99 = arith.constant dense<0.000000e+00> : vector<8x256xf32>
    %248 = tpu.matmul %246, %247, %cst_99 {dimension_numbers = #tpu.dot_dimension_numbers<[1], [0], [0], [1], [0, 0, 1, 1], [], []>} : vector<8x8xbf16>, vector<8x256xbf16>, vector<8x256xf32> -> vector<8x256xf32>
    %249 = arith.addf %245, %248 : vector<8x256xf32>
    %c104 = arith.constant 104 : index
    %c0_100 = arith.constant 0 : index
    %250 = vector.load %arg5[%c104, %c0_100] : memref<304x1xf32, #tpu.memory_space<vmem>>, vector<8x1xf32>
    %251 = vector.broadcast %250 : vector<8x1xf32> to vector<8x256xf32>
    %252 = arith.addf %249, %251 : vector<8x256xf32>
    %c9 = arith.constant 9 : index
    %253 = memref.load %arg3[%c9] : memref<27xf32, #tpu.memory_space<smem>>
    %cst_101 = arith.constant 0.000000e+00 : f32
    %254 = vector.broadcast %cst_101 : f32 to vector<8x256xf32>
    %255 = arith.cmpf oge, %252, %254 : vector<8x256xf32>
    %256 = vector.broadcast %253 : f32 to vector<8x256xf32>
    %257 = arith.mulf %256, %252 : vector<8x256xf32>
    %258 = arith.select %255, %252, %257 : vector<8x256xi1>, vector<8x256xf32>
    %c1_i32_102 = arith.constant 1 : i32
    %259 = vector.broadcast %c1_i32_102 : i32 to vector<1x256xi32>
    %260 = arith.cmpi sge, %0, %259 : vector<1x256xi32>
    %c1_i32_103 = arith.constant 1 : i32
    %261 = tpu.dynamic_rotate %258 by %c1_i32_103 dim 1 : vector<8x256xf32>, i32 -> vector<8x256xf32>
    %cst_104 = arith.constant 0.000000e+00 : f32
    %262 = vector.shape_cast %260 : vector<1x256xi1> to vector<1x256xi1>
    %263 = vector.broadcast %262 : vector<1x256xi1> to vector<8x256xi1>
    %264 = vector.broadcast %cst_104 : f32 to vector<8x256xf32>
    %265 = arith.select %263, %261, %264 : vector<8x256xi1>, vector<8x256xf32>
    %c256 = arith.constant 256 : index
    %c0_105 = arith.constant 0 : index
    %266 = vector.load %arg4[%c256, %c0_105] : memref<688x16xbf16, #tpu.memory_space<vmem>>, vector<8x8xbf16>
    %267 = arith.truncf %265 : vector<8x256xf32> to vector<8x256xbf16>
    %cst_106 = arith.constant dense<0.000000e+00> : vector<8x256xf32>
    %268 = tpu.matmul %266, %267, %cst_106 {dimension_numbers = #tpu.dot_dimension_numbers<[1], [0], [0], [1], [0, 0, 1, 1], [], []>} : vector<8x8xbf16>, vector<8x256xbf16>, vector<8x256xf32> -> vector<8x256xf32>
    %c272 = arith.constant 272 : index
    %c0_107 = arith.constant 0 : index
    %269 = vector.load %arg4[%c272, %c0_107] : memref<688x16xbf16, #tpu.memory_space<vmem>>, vector<8x8xbf16>
    %270 = arith.truncf %258 : vector<8x256xf32> to vector<8x256xbf16>
    %cst_108 = arith.constant dense<0.000000e+00> : vector<8x256xf32>
    %271 = tpu.matmul %269, %270, %cst_108 {dimension_numbers = #tpu.dot_dimension_numbers<[1], [0], [0], [1], [0, 0, 1, 1], [], []>} : vector<8x8xbf16>, vector<8x256xbf16>, vector<8x256xf32> -> vector<8x256xf32>
    %272 = arith.addf %268, %271 : vector<8x256xf32>
    %c112_109 = arith.constant 112 : index
    %c0_110 = arith.constant 0 : index
    %273 = vector.load %arg5[%c112_109, %c0_110] : memref<304x1xf32, #tpu.memory_space<vmem>>, vector<8x1xf32>
    %274 = vector.broadcast %273 : vector<8x1xf32> to vector<8x256xf32>
    %275 = arith.addf %272, %274 : vector<8x256xf32>
    %c10 = arith.constant 10 : index
    %276 = memref.load %arg3[%c10] : memref<27xf32, #tpu.memory_space<smem>>
    %cst_111 = arith.constant 0.000000e+00 : f32
    %277 = vector.broadcast %cst_111 : f32 to vector<8x256xf32>
    %278 = arith.cmpf oge, %275, %277 : vector<8x256xf32>
    %279 = vector.broadcast %276 : f32 to vector<8x256xf32>
    %280 = arith.mulf %279, %275 : vector<8x256xf32>
    %281 = arith.select %278, %275, %280 : vector<8x256xi1>, vector<8x256xf32>
    %282 = arith.addf %281, %235 : vector<8x256xf32>
    %c11 = arith.constant 11 : index
    %283 = memref.load %arg3[%c11] : memref<27xf32, #tpu.memory_space<smem>>
    %cst_112 = arith.constant 0.000000e+00 : f32
    %284 = vector.broadcast %cst_112 : f32 to vector<8x256xf32>
    %285 = arith.cmpf oge, %282, %284 : vector<8x256xf32>
    %286 = vector.broadcast %283 : f32 to vector<8x256xf32>
    %287 = arith.mulf %286, %282 : vector<8x256xf32>
    %288 = arith.select %285, %282, %287 : vector<8x256xi1>, vector<8x256xf32>
    %c2_i32_113 = arith.constant 2 : i32
    %289 = vector.broadcast %c2_i32_113 : i32 to vector<1x256xi32>
    %290 = arith.cmpi sge, %0, %289 : vector<1x256xi32>
    %c2_i32_114 = arith.constant 2 : i32
    %291 = tpu.dynamic_rotate %288 by %c2_i32_114 dim 1 : vector<8x256xf32>, i32 -> vector<8x256xf32>
    %cst_115 = arith.constant 0.000000e+00 : f32
    %292 = vector.shape_cast %290 : vector<1x256xi1> to vector<1x256xi1>
    %293 = vector.broadcast %292 : vector<1x256xi1> to vector<8x256xi1>
    %294 = vector.broadcast %cst_115 : f32 to vector<8x256xf32>
    %295 = arith.select %293, %291, %294 : vector<8x256xi1>, vector<8x256xf32>
    %c288 = arith.constant 288 : index
    %c0_116 = arith.constant 0 : index
    %296 = vector.load %arg4[%c288, %c0_116] : memref<688x16xbf16, #tpu.memory_space<vmem>>, vector<16x8xbf16>
    %297 = arith.truncf %295 : vector<8x256xf32> to vector<8x256xbf16>
    %cst_117 = arith.constant dense<0.000000e+00> : vector<16x256xf32>
    %298 = tpu.matmul %296, %297, %cst_117 {dimension_numbers = #tpu.dot_dimension_numbers<[1], [0], [0], [1], [0, 0, 1, 1], [], []>} : vector<16x8xbf16>, vector<8x256xbf16>, vector<16x256xf32> -> vector<16x256xf32>
    %c304 = arith.constant 304 : index
    %c0_118 = arith.constant 0 : index
    %299 = vector.load %arg4[%c304, %c0_118] : memref<688x16xbf16, #tpu.memory_space<vmem>>, vector<16x8xbf16>
    %300 = arith.truncf %288 : vector<8x256xf32> to vector<8x256xbf16>
    %cst_119 = arith.constant dense<0.000000e+00> : vector<16x256xf32>
    %301 = tpu.matmul %299, %300, %cst_119 {dimension_numbers = #tpu.dot_dimension_numbers<[1], [0], [0], [1], [0, 0, 1, 1], [], []>} : vector<16x8xbf16>, vector<8x256xbf16>, vector<16x256xf32> -> vector<16x256xf32>
    %302 = arith.addf %298, %301 : vector<16x256xf32>
    %c120 = arith.constant 120 : index
    %c0_120 = arith.constant 0 : index
    %303 = vector.load %arg5[%c120, %c0_120] : memref<304x1xf32, #tpu.memory_space<vmem>>, vector<16x1xf32>
    %304 = vector.broadcast %303 : vector<16x1xf32> to vector<16x256xf32>
    %305 = arith.addf %302, %304 : vector<16x256xf32>
    %c12 = arith.constant 12 : index
    %306 = memref.load %arg3[%c12] : memref<27xf32, #tpu.memory_space<smem>>
    %cst_121 = arith.constant 0.000000e+00 : f32
    %307 = vector.broadcast %cst_121 : f32 to vector<16x256xf32>
    %308 = arith.cmpf oge, %305, %307 : vector<16x256xf32>
    %309 = vector.broadcast %306 : f32 to vector<16x256xf32>
    %310 = arith.mulf %309, %305 : vector<16x256xf32>
    %311 = arith.select %308, %305, %310 : vector<16x256xi1>, vector<16x256xf32>
    %c2_i32_122 = arith.constant 2 : i32
    %312 = vector.broadcast %c2_i32_122 : i32 to vector<1x256xi32>
    %313 = arith.cmpi sge, %0, %312 : vector<1x256xi32>
    %c2_i32_123 = arith.constant 2 : i32
    %314 = tpu.dynamic_rotate %311 by %c2_i32_123 dim 1 : vector<16x256xf32>, i32 -> vector<16x256xf32>
    %cst_124 = arith.constant 0.000000e+00 : f32
    %315 = vector.shape_cast %313 : vector<1x256xi1> to vector<1x256xi1>
    %316 = vector.broadcast %315 : vector<1x256xi1> to vector<16x256xi1>
    %317 = vector.broadcast %cst_124 : f32 to vector<16x256xf32>
    %318 = arith.select %316, %314, %317 : vector<16x256xi1>, vector<16x256xf32>
    %c320 = arith.constant 320 : index
    %c0_125 = arith.constant 0 : index
    %319 = vector.load %arg4[%c320, %c0_125] : memref<688x16xbf16, #tpu.memory_space<vmem>>, vector<16x16xbf16>
    %320 = arith.truncf %318 : vector<16x256xf32> to vector<16x256xbf16>
    %cst_126 = arith.constant dense<0.000000e+00> : vector<16x256xf32>
    %321 = tpu.matmul %319, %320, %cst_126 {dimension_numbers = #tpu.dot_dimension_numbers<[1], [0], [0], [1], [0, 0, 1, 1], [], []>} : vector<16x16xbf16>, vector<16x256xbf16>, vector<16x256xf32> -> vector<16x256xf32>
    %c336 = arith.constant 336 : index
    %c0_127 = arith.constant 0 : index
    %322 = vector.load %arg4[%c336, %c0_127] : memref<688x16xbf16, #tpu.memory_space<vmem>>, vector<16x16xbf16>
    %323 = arith.truncf %311 : vector<16x256xf32> to vector<16x256xbf16>
    %cst_128 = arith.constant dense<0.000000e+00> : vector<16x256xf32>
    %324 = tpu.matmul %322, %323, %cst_128 {dimension_numbers = #tpu.dot_dimension_numbers<[1], [0], [0], [1], [0, 0, 1, 1], [], []>} : vector<16x16xbf16>, vector<16x256xbf16>, vector<16x256xf32> -> vector<16x256xf32>
    %325 = arith.addf %321, %324 : vector<16x256xf32>
    %c136 = arith.constant 136 : index
    %c0_129 = arith.constant 0 : index
    %326 = vector.load %arg5[%c136, %c0_129] : memref<304x1xf32, #tpu.memory_space<vmem>>, vector<16x1xf32>
    %327 = vector.broadcast %326 : vector<16x1xf32> to vector<16x256xf32>
    %328 = arith.addf %325, %327 : vector<16x256xf32>
    %c13 = arith.constant 13 : index
    %329 = memref.load %arg3[%c13] : memref<27xf32, #tpu.memory_space<smem>>
    %cst_130 = arith.constant 0.000000e+00 : f32
    %330 = vector.broadcast %cst_130 : f32 to vector<16x256xf32>
    %331 = arith.cmpf oge, %328, %330 : vector<16x256xf32>
    %332 = vector.broadcast %329 : f32 to vector<16x256xf32>
    %333 = arith.mulf %332, %328 : vector<16x256xf32>
    %334 = arith.select %331, %328, %333 : vector<16x256xi1>, vector<16x256xf32>
    %c352 = arith.constant 352 : index
    %c0_131 = arith.constant 0 : index
    %335 = vector.load %arg4[%c352, %c0_131] : memref<688x16xbf16, #tpu.memory_space<vmem>>, vector<16x8xbf16>
    %336 = arith.truncf %288 : vector<8x256xf32> to vector<8x256xbf16>
    %cst_132 = arith.constant dense<0.000000e+00> : vector<16x256xf32>
    %337 = tpu.matmul %335, %336, %cst_132 {dimension_numbers = #tpu.dot_dimension_numbers<[1], [0], [0], [1], [0, 0, 1, 1], [], []>} : vector<16x8xbf16>, vector<8x256xbf16>, vector<16x256xf32> -> vector<16x256xf32>
    %c152 = arith.constant 152 : index
    %c0_133 = arith.constant 0 : index
    %338 = vector.load %arg5[%c152, %c0_133] : memref<304x1xf32, #tpu.memory_space<vmem>>, vector<16x1xf32>
    %339 = vector.broadcast %338 : vector<16x1xf32> to vector<16x256xf32>
    %340 = arith.addf %337, %339 : vector<16x256xf32>
    %341 = arith.addf %334, %340 : vector<16x256xf32>
    %c14 = arith.constant 14 : index
    %342 = memref.load %arg3[%c14] : memref<27xf32, #tpu.memory_space<smem>>
    %cst_134 = arith.constant 0.000000e+00 : f32
    %343 = vector.broadcast %cst_134 : f32 to vector<16x256xf32>
    %344 = arith.cmpf oge, %341, %343 : vector<16x256xf32>
    %345 = vector.broadcast %342 : f32 to vector<16x256xf32>
    %346 = arith.mulf %345, %341 : vector<16x256xf32>
    %347 = arith.select %344, %341, %346 : vector<16x256xi1>, vector<16x256xf32>
    %c4_i32_135 = arith.constant 4 : i32
    %348 = vector.broadcast %c4_i32_135 : i32 to vector<1x256xi32>
    %349 = arith.cmpi sge, %0, %348 : vector<1x256xi32>
    %c4_i32_136 = arith.constant 4 : i32
    %350 = tpu.dynamic_rotate %347 by %c4_i32_136 dim 1 : vector<16x256xf32>, i32 -> vector<16x256xf32>
    %cst_137 = arith.constant 0.000000e+00 : f32
    %351 = vector.shape_cast %349 : vector<1x256xi1> to vector<1x256xi1>
    %352 = vector.broadcast %351 : vector<1x256xi1> to vector<16x256xi1>
    %353 = vector.broadcast %cst_137 : f32 to vector<16x256xf32>
    %354 = arith.select %352, %350, %353 : vector<16x256xi1>, vector<16x256xf32>
    %c368 = arith.constant 368 : index
    %c0_138 = arith.constant 0 : index
    %355 = vector.load %arg4[%c368, %c0_138] : memref<688x16xbf16, #tpu.memory_space<vmem>>, vector<8x16xbf16>
    %356 = arith.truncf %354 : vector<16x256xf32> to vector<16x256xbf16>
    %cst_139 = arith.constant dense<0.000000e+00> : vector<8x256xf32>
    %357 = tpu.matmul %355, %356, %cst_139 {dimension_numbers = #tpu.dot_dimension_numbers<[1], [0], [0], [1], [0, 0, 1, 1], [], []>} : vector<8x16xbf16>, vector<16x256xbf16>, vector<8x256xf32> -> vector<8x256xf32>
    %c384 = arith.constant 384 : index
    %c0_140 = arith.constant 0 : index
    %358 = vector.load %arg4[%c384, %c0_140] : memref<688x16xbf16, #tpu.memory_space<vmem>>, vector<8x16xbf16>
    %359 = arith.truncf %347 : vector<16x256xf32> to vector<16x256xbf16>
    %cst_141 = arith.constant dense<0.000000e+00> : vector<8x256xf32>
    %360 = tpu.matmul %358, %359, %cst_141 {dimension_numbers = #tpu.dot_dimension_numbers<[1], [0], [0], [1], [0, 0, 1, 1], [], []>} : vector<8x16xbf16>, vector<16x256xbf16>, vector<8x256xf32> -> vector<8x256xf32>
    %361 = arith.addf %357, %360 : vector<8x256xf32>
    %c168 = arith.constant 168 : index
    %c0_142 = arith.constant 0 : index
    %362 = vector.load %arg5[%c168, %c0_142] : memref<304x1xf32, #tpu.memory_space<vmem>>, vector<8x1xf32>
    %363 = vector.broadcast %362 : vector<8x1xf32> to vector<8x256xf32>
    %364 = arith.addf %361, %363 : vector<8x256xf32>
    %c15 = arith.constant 15 : index
    %365 = memref.load %arg3[%c15] : memref<27xf32, #tpu.memory_space<smem>>
    %cst_143 = arith.constant 0.000000e+00 : f32
    %366 = vector.broadcast %cst_143 : f32 to vector<8x256xf32>
    %367 = arith.cmpf oge, %364, %366 : vector<8x256xf32>
    %368 = vector.broadcast %365 : f32 to vector<8x256xf32>
    %369 = arith.mulf %368, %364 : vector<8x256xf32>
    %370 = arith.select %367, %364, %369 : vector<8x256xi1>, vector<8x256xf32>
    %c4_i32_144 = arith.constant 4 : i32
    %371 = vector.broadcast %c4_i32_144 : i32 to vector<1x256xi32>
    %372 = arith.cmpi sge, %0, %371 : vector<1x256xi32>
    %c4_i32_145 = arith.constant 4 : i32
    %373 = tpu.dynamic_rotate %370 by %c4_i32_145 dim 1 : vector<8x256xf32>, i32 -> vector<8x256xf32>
    %cst_146 = arith.constant 0.000000e+00 : f32
    %374 = vector.shape_cast %372 : vector<1x256xi1> to vector<1x256xi1>
    %375 = vector.broadcast %374 : vector<1x256xi1> to vector<8x256xi1>
    %376 = vector.broadcast %cst_146 : f32 to vector<8x256xf32>
    %377 = arith.select %375, %373, %376 : vector<8x256xi1>, vector<8x256xf32>
    %c400 = arith.constant 400 : index
    %c0_147 = arith.constant 0 : index
    %378 = vector.load %arg4[%c400, %c0_147] : memref<688x16xbf16, #tpu.memory_space<vmem>>, vector<8x8xbf16>
    %379 = arith.truncf %377 : vector<8x256xf32> to vector<8x256xbf16>
    %cst_148 = arith.constant dense<0.000000e+00> : vector<8x256xf32>
    %380 = tpu.matmul %378, %379, %cst_148 {dimension_numbers = #tpu.dot_dimension_numbers<[1], [0], [0], [1], [0, 0, 1, 1], [], []>} : vector<8x8xbf16>, vector<8x256xbf16>, vector<8x256xf32> -> vector<8x256xf32>
    %c416 = arith.constant 416 : index
    %c0_149 = arith.constant 0 : index
    %381 = vector.load %arg4[%c416, %c0_149] : memref<688x16xbf16, #tpu.memory_space<vmem>>, vector<8x8xbf16>
    %382 = arith.truncf %370 : vector<8x256xf32> to vector<8x256xbf16>
    %cst_150 = arith.constant dense<0.000000e+00> : vector<8x256xf32>
    %383 = tpu.matmul %381, %382, %cst_150 {dimension_numbers = #tpu.dot_dimension_numbers<[1], [0], [0], [1], [0, 0, 1, 1], [], []>} : vector<8x8xbf16>, vector<8x256xbf16>, vector<8x256xf32> -> vector<8x256xf32>
    %384 = arith.addf %380, %383 : vector<8x256xf32>
    %c176_151 = arith.constant 176 : index
    %c0_152 = arith.constant 0 : index
    %385 = vector.load %arg5[%c176_151, %c0_152] : memref<304x1xf32, #tpu.memory_space<vmem>>, vector<8x1xf32>
    %386 = vector.broadcast %385 : vector<8x1xf32> to vector<8x256xf32>
    %387 = arith.addf %384, %386 : vector<8x256xf32>
    %c16_153 = arith.constant 16 : index
    %388 = memref.load %arg3[%c16_153] : memref<27xf32, #tpu.memory_space<smem>>
    %cst_154 = arith.constant 0.000000e+00 : f32
    %389 = vector.broadcast %cst_154 : f32 to vector<8x256xf32>
    %390 = arith.cmpf oge, %387, %389 : vector<8x256xf32>
    %391 = vector.broadcast %388 : f32 to vector<8x256xf32>
    %392 = arith.mulf %391, %387 : vector<8x256xf32>
    %393 = arith.select %390, %387, %392 : vector<8x256xi1>, vector<8x256xf32>
    %c432 = arith.constant 432 : index
    %c0_155 = arith.constant 0 : index
    %394 = vector.load %arg4[%c432, %c0_155] : memref<688x16xbf16, #tpu.memory_space<vmem>>, vector<8x16xbf16>
    %395 = arith.truncf %347 : vector<16x256xf32> to vector<16x256xbf16>
    %cst_156 = arith.constant dense<0.000000e+00> : vector<8x256xf32>
    %396 = tpu.matmul %394, %395, %cst_156 {dimension_numbers = #tpu.dot_dimension_numbers<[1], [0], [0], [1], [0, 0, 1, 1], [], []>} : vector<8x16xbf16>, vector<16x256xbf16>, vector<8x256xf32> -> vector<8x256xf32>
    %c184 = arith.constant 184 : index
    %c0_157 = arith.constant 0 : index
    %397 = vector.load %arg5[%c184, %c0_157] : memref<304x1xf32, #tpu.memory_space<vmem>>, vector<8x1xf32>
    %398 = vector.broadcast %397 : vector<8x1xf32> to vector<8x256xf32>
    %399 = arith.addf %396, %398 : vector<8x256xf32>
    %400 = arith.addf %393, %399 : vector<8x256xf32>
    %c17 = arith.constant 17 : index
    %401 = memref.load %arg3[%c17] : memref<27xf32, #tpu.memory_space<smem>>
    %cst_158 = arith.constant 0.000000e+00 : f32
    %402 = vector.broadcast %cst_158 : f32 to vector<8x256xf32>
    %403 = arith.cmpf oge, %400, %402 : vector<8x256xf32>
    %404 = vector.broadcast %401 : f32 to vector<8x256xf32>
    %405 = arith.mulf %404, %400 : vector<8x256xf32>
    %406 = arith.select %403, %400, %405 : vector<8x256xi1>, vector<8x256xf32>
    %cst_159 = arith.constant 0.000000e+00 : f32
    %407 = vector.broadcast %cst_159 : f32 to vector<8x256xf32>
    %c0_i32_160 = arith.constant 0 : i32
    %408 = vector.broadcast %c0_i32_160 : i32 to vector<1x256xi32>
    %409 = arith.cmpi eq, %1, %408 : vector<1x256xi32>
    %cst_161 = arith.constant 0.000000e+00 : f32
    %410 = vector.shape_cast %409 : vector<1x256xi1> to vector<1x256xi1>
    %411 = vector.broadcast %410 : vector<1x256xi1> to vector<8x256xi1>
    %412 = vector.broadcast %cst_161 : f32 to vector<8x256xf32>
    %413 = arith.select %411, %406, %412 : vector<8x256xi1>, vector<8x256xf32>
    %cst_162 = arith.constant dense<0.000000e+00> : vector<8xf32>
    %414 = vector.multi_reduction <add>, %413, %cst_162 [1] : vector<8x256xf32> to vector<8xf32>
    %415 = vector.shape_cast %414 : vector<8xf32> to vector<8x1xf32>
    %cst_163 = arith.constant 7.812500e-03 : f32
    %416 = vector.broadcast %cst_163 : f32 to vector<8x1xf32>
    %417 = arith.mulf %415, %416 : vector<8x1xf32>
    %418 = vector.broadcast %417 : vector<8x1xf32> to vector<8x256xf32>
    %419 = arith.subf %406, %418 : vector<8x256xf32>
    %cst_164 = arith.constant 0.000000e+00 : f32
    %420 = vector.shape_cast %409 : vector<1x256xi1> to vector<1x256xi1>
    %421 = vector.broadcast %420 : vector<1x256xi1> to vector<8x256xi1>
    %422 = vector.broadcast %cst_164 : f32 to vector<8x256xf32>
    %423 = arith.select %421, %419, %422 : vector<8x256xi1>, vector<8x256xf32>
    %424 = arith.mulf %423, %423 : vector<8x256xf32>
    %cst_165 = arith.constant dense<0.000000e+00> : vector<8xf32>
    %425 = vector.multi_reduction <add>, %424, %cst_165 [1] : vector<8x256xf32> to vector<8xf32>
    %426 = vector.shape_cast %425 : vector<8xf32> to vector<8x1xf32>
    %cst_166 = arith.constant 7.812500e-03 : f32
    %427 = vector.broadcast %cst_166 : f32 to vector<8x1xf32>
    %428 = arith.mulf %426, %427 : vector<8x1xf32>
    %cst_167 = arith.constant 9.99999974E-6 : f32
    %429 = vector.broadcast %cst_167 : f32 to vector<8x1xf32>
    %430 = arith.addf %428, %429 : vector<8x1xf32>
    %431 = math.rsqrt %430 : vector<8x1xf32>
    %432 = vector.broadcast %431 : vector<8x1xf32> to vector<8x256xf32>
    %433 = arith.mulf %423, %432 : vector<8x256xf32>
    %434 = arith.addf %407, %433 : vector<8x256xf32>
    %c1_i32_168 = arith.constant 1 : i32
    %435 = vector.broadcast %c1_i32_168 : i32 to vector<1x256xi32>
    %436 = arith.cmpi eq, %1, %435 : vector<1x256xi32>
    %cst_169 = arith.constant 0.000000e+00 : f32
    %437 = vector.shape_cast %436 : vector<1x256xi1> to vector<1x256xi1>
    %438 = vector.broadcast %437 : vector<1x256xi1> to vector<8x256xi1>
    %439 = vector.broadcast %cst_169 : f32 to vector<8x256xf32>
    %440 = arith.select %438, %406, %439 : vector<8x256xi1>, vector<8x256xf32>
    %cst_170 = arith.constant dense<0.000000e+00> : vector<8xf32>
    %441 = vector.multi_reduction <add>, %440, %cst_170 [1] : vector<8x256xf32> to vector<8xf32>
    %442 = vector.shape_cast %441 : vector<8xf32> to vector<8x1xf32>
    %cst_171 = arith.constant 7.812500e-03 : f32
    %443 = vector.broadcast %cst_171 : f32 to vector<8x1xf32>
    %444 = arith.mulf %442, %443 : vector<8x1xf32>
    %445 = vector.broadcast %444 : vector<8x1xf32> to vector<8x256xf32>
    %446 = arith.subf %406, %445 : vector<8x256xf32>
    %cst_172 = arith.constant 0.000000e+00 : f32
    %447 = vector.shape_cast %436 : vector<1x256xi1> to vector<1x256xi1>
    %448 = vector.broadcast %447 : vector<1x256xi1> to vector<8x256xi1>
    %449 = vector.broadcast %cst_172 : f32 to vector<8x256xf32>
    %450 = arith.select %448, %446, %449 : vector<8x256xi1>, vector<8x256xf32>
    %451 = arith.mulf %450, %450 : vector<8x256xf32>
    %cst_173 = arith.constant dense<0.000000e+00> : vector<8xf32>
    %452 = vector.multi_reduction <add>, %451, %cst_173 [1] : vector<8x256xf32> to vector<8xf32>
    %453 = vector.shape_cast %452 : vector<8xf32> to vector<8x1xf32>
    %cst_174 = arith.constant 7.812500e-03 : f32
    %454 = vector.broadcast %cst_174 : f32 to vector<8x1xf32>
    %455 = arith.mulf %453, %454 : vector<8x1xf32>
    %cst_175 = arith.constant 9.99999974E-6 : f32
    %456 = vector.broadcast %cst_175 : f32 to vector<8x1xf32>
    %457 = arith.addf %455, %456 : vector<8x1xf32>
    %458 = math.rsqrt %457 : vector<8x1xf32>
    %459 = vector.broadcast %458 : vector<8x1xf32> to vector<8x256xf32>
    %460 = arith.mulf %450, %459 : vector<8x256xf32>
    %461 = arith.addf %434, %460 : vector<8x256xf32>
    %c192_176 = arith.constant 192 : index
    %c0_177 = arith.constant 0 : index
    %462 = vector.load %arg5[%c192_176, %c0_177] : memref<304x1xf32, #tpu.memory_space<vmem>>, vector<8x1xf32>
    %463 = vector.broadcast %462 : vector<8x1xf32> to vector<8x256xf32>
    %464 = arith.mulf %461, %463 : vector<8x256xf32>
    %c200 = arith.constant 200 : index
    %c0_178 = arith.constant 0 : index
    %465 = vector.load %arg5[%c200, %c0_178] : memref<304x1xf32, #tpu.memory_space<vmem>>, vector<8x1xf32>
    %466 = vector.broadcast %465 : vector<8x1xf32> to vector<8x256xf32>
    %467 = arith.addf %464, %466 : vector<8x256xf32>
    %c1_i32_179 = arith.constant 1 : i32
    %468 = vector.broadcast %c1_i32_179 : i32 to vector<1x256xi32>
    %469 = arith.cmpi sge, %0, %468 : vector<1x256xi32>
    %c1_i32_180 = arith.constant 1 : i32
    %470 = tpu.dynamic_rotate %467 by %c1_i32_180 dim 1 : vector<8x256xf32>, i32 -> vector<8x256xf32>
    %cst_181 = arith.constant 0.000000e+00 : f32
    %471 = vector.shape_cast %469 : vector<1x256xi1> to vector<1x256xi1>
    %472 = vector.broadcast %471 : vector<1x256xi1> to vector<8x256xi1>
    %473 = vector.broadcast %cst_181 : f32 to vector<8x256xf32>
    %474 = arith.select %472, %470, %473 : vector<8x256xi1>, vector<8x256xf32>
    %c448 = arith.constant 448 : index
    %c0_182 = arith.constant 0 : index
    %475 = vector.load %arg4[%c448, %c0_182] : memref<688x16xbf16, #tpu.memory_space<vmem>>, vector<8x8xbf16>
    %476 = arith.truncf %474 : vector<8x256xf32> to vector<8x256xbf16>
    %cst_183 = arith.constant dense<0.000000e+00> : vector<8x256xf32>
    %477 = tpu.matmul %475, %476, %cst_183 {dimension_numbers = #tpu.dot_dimension_numbers<[1], [0], [0], [1], [0, 0, 1, 1], [], []>} : vector<8x8xbf16>, vector<8x256xbf16>, vector<8x256xf32> -> vector<8x256xf32>
    %c464 = arith.constant 464 : index
    %c0_184 = arith.constant 0 : index
    %478 = vector.load %arg4[%c464, %c0_184] : memref<688x16xbf16, #tpu.memory_space<vmem>>, vector<8x8xbf16>
    %479 = arith.truncf %467 : vector<8x256xf32> to vector<8x256xbf16>
    %cst_185 = arith.constant dense<0.000000e+00> : vector<8x256xf32>
    %480 = tpu.matmul %478, %479, %cst_185 {dimension_numbers = #tpu.dot_dimension_numbers<[1], [0], [0], [1], [0, 0, 1, 1], [], []>} : vector<8x8xbf16>, vector<8x256xbf16>, vector<8x256xf32> -> vector<8x256xf32>
    %481 = arith.addf %477, %480 : vector<8x256xf32>
    %c208_186 = arith.constant 208 : index
    %c0_187 = arith.constant 0 : index
    %482 = vector.load %arg5[%c208_186, %c0_187] : memref<304x1xf32, #tpu.memory_space<vmem>>, vector<8x1xf32>
    %483 = vector.broadcast %482 : vector<8x1xf32> to vector<8x256xf32>
    %484 = arith.addf %481, %483 : vector<8x256xf32>
    %c18 = arith.constant 18 : index
    %485 = memref.load %arg3[%c18] : memref<27xf32, #tpu.memory_space<smem>>
    %cst_188 = arith.constant 0.000000e+00 : f32
    %486 = vector.broadcast %cst_188 : f32 to vector<8x256xf32>
    %487 = arith.cmpf oge, %484, %486 : vector<8x256xf32>
    %488 = vector.broadcast %485 : f32 to vector<8x256xf32>
    %489 = arith.mulf %488, %484 : vector<8x256xf32>
    %490 = arith.select %487, %484, %489 : vector<8x256xi1>, vector<8x256xf32>
    %c1_i32_189 = arith.constant 1 : i32
    %491 = vector.broadcast %c1_i32_189 : i32 to vector<1x256xi32>
    %492 = arith.cmpi sge, %0, %491 : vector<1x256xi32>
    %c1_i32_190 = arith.constant 1 : i32
    %493 = tpu.dynamic_rotate %490 by %c1_i32_190 dim 1 : vector<8x256xf32>, i32 -> vector<8x256xf32>
    %cst_191 = arith.constant 0.000000e+00 : f32
    %494 = vector.shape_cast %492 : vector<1x256xi1> to vector<1x256xi1>
    %495 = vector.broadcast %494 : vector<1x256xi1> to vector<8x256xi1>
    %496 = vector.broadcast %cst_191 : f32 to vector<8x256xf32>
    %497 = arith.select %495, %493, %496 : vector<8x256xi1>, vector<8x256xf32>
    %c480 = arith.constant 480 : index
    %c0_192 = arith.constant 0 : index
    %498 = vector.load %arg4[%c480, %c0_192] : memref<688x16xbf16, #tpu.memory_space<vmem>>, vector<8x8xbf16>
    %499 = arith.truncf %497 : vector<8x256xf32> to vector<8x256xbf16>
    %cst_193 = arith.constant dense<0.000000e+00> : vector<8x256xf32>
    %500 = tpu.matmul %498, %499, %cst_193 {dimension_numbers = #tpu.dot_dimension_numbers<[1], [0], [0], [1], [0, 0, 1, 1], [], []>} : vector<8x8xbf16>, vector<8x256xbf16>, vector<8x256xf32> -> vector<8x256xf32>
    %c496 = arith.constant 496 : index
    %c0_194 = arith.constant 0 : index
    %501 = vector.load %arg4[%c496, %c0_194] : memref<688x16xbf16, #tpu.memory_space<vmem>>, vector<8x8xbf16>
    %502 = arith.truncf %490 : vector<8x256xf32> to vector<8x256xbf16>
    %cst_195 = arith.constant dense<0.000000e+00> : vector<8x256xf32>
    %503 = tpu.matmul %501, %502, %cst_195 {dimension_numbers = #tpu.dot_dimension_numbers<[1], [0], [0], [1], [0, 0, 1, 1], [], []>} : vector<8x8xbf16>, vector<8x256xbf16>, vector<8x256xf32> -> vector<8x256xf32>
    %504 = arith.addf %500, %503 : vector<8x256xf32>
    %c216 = arith.constant 216 : index
    %c0_196 = arith.constant 0 : index
    %505 = vector.load %arg5[%c216, %c0_196] : memref<304x1xf32, #tpu.memory_space<vmem>>, vector<8x1xf32>
    %506 = vector.broadcast %505 : vector<8x1xf32> to vector<8x256xf32>
    %507 = arith.addf %504, %506 : vector<8x256xf32>
    %c19 = arith.constant 19 : index
    %508 = memref.load %arg3[%c19] : memref<27xf32, #tpu.memory_space<smem>>
    %cst_197 = arith.constant 0.000000e+00 : f32
    %509 = vector.broadcast %cst_197 : f32 to vector<8x256xf32>
    %510 = arith.cmpf oge, %507, %509 : vector<8x256xf32>
    %511 = vector.broadcast %508 : f32 to vector<8x256xf32>
    %512 = arith.mulf %511, %507 : vector<8x256xf32>
    %513 = arith.select %510, %507, %512 : vector<8x256xi1>, vector<8x256xf32>
    %514 = arith.addf %513, %467 : vector<8x256xf32>
    %c20 = arith.constant 20 : index
    %515 = memref.load %arg3[%c20] : memref<27xf32, #tpu.memory_space<smem>>
    %cst_198 = arith.constant 0.000000e+00 : f32
    %516 = vector.broadcast %cst_198 : f32 to vector<8x256xf32>
    %517 = arith.cmpf oge, %514, %516 : vector<8x256xf32>
    %518 = vector.broadcast %515 : f32 to vector<8x256xf32>
    %519 = arith.mulf %518, %514 : vector<8x256xf32>
    %520 = arith.select %517, %514, %519 : vector<8x256xi1>, vector<8x256xf32>
    %c2_i32_199 = arith.constant 2 : i32
    %521 = vector.broadcast %c2_i32_199 : i32 to vector<1x256xi32>
    %522 = arith.cmpi sge, %0, %521 : vector<1x256xi32>
    %c2_i32_200 = arith.constant 2 : i32
    %523 = tpu.dynamic_rotate %520 by %c2_i32_200 dim 1 : vector<8x256xf32>, i32 -> vector<8x256xf32>
    %cst_201 = arith.constant 0.000000e+00 : f32
    %524 = vector.shape_cast %522 : vector<1x256xi1> to vector<1x256xi1>
    %525 = vector.broadcast %524 : vector<1x256xi1> to vector<8x256xi1>
    %526 = vector.broadcast %cst_201 : f32 to vector<8x256xf32>
    %527 = arith.select %525, %523, %526 : vector<8x256xi1>, vector<8x256xf32>
    %c512 = arith.constant 512 : index
    %c0_202 = arith.constant 0 : index
    %528 = vector.load %arg4[%c512, %c0_202] : memref<688x16xbf16, #tpu.memory_space<vmem>>, vector<16x8xbf16>
    %529 = arith.truncf %527 : vector<8x256xf32> to vector<8x256xbf16>
    %cst_203 = arith.constant dense<0.000000e+00> : vector<16x256xf32>
    %530 = tpu.matmul %528, %529, %cst_203 {dimension_numbers = #tpu.dot_dimension_numbers<[1], [0], [0], [1], [0, 0, 1, 1], [], []>} : vector<16x8xbf16>, vector<8x256xbf16>, vector<16x256xf32> -> vector<16x256xf32>
    %c528 = arith.constant 528 : index
    %c0_204 = arith.constant 0 : index
    %531 = vector.load %arg4[%c528, %c0_204] : memref<688x16xbf16, #tpu.memory_space<vmem>>, vector<16x8xbf16>
    %532 = arith.truncf %520 : vector<8x256xf32> to vector<8x256xbf16>
    %cst_205 = arith.constant dense<0.000000e+00> : vector<16x256xf32>
    %533 = tpu.matmul %531, %532, %cst_205 {dimension_numbers = #tpu.dot_dimension_numbers<[1], [0], [0], [1], [0, 0, 1, 1], [], []>} : vector<16x8xbf16>, vector<8x256xbf16>, vector<16x256xf32> -> vector<16x256xf32>
    %534 = arith.addf %530, %533 : vector<16x256xf32>
    %c224_206 = arith.constant 224 : index
    %c0_207 = arith.constant 0 : index
    %535 = vector.load %arg5[%c224_206, %c0_207] : memref<304x1xf32, #tpu.memory_space<vmem>>, vector<16x1xf32>
    %536 = vector.broadcast %535 : vector<16x1xf32> to vector<16x256xf32>
    %537 = arith.addf %534, %536 : vector<16x256xf32>
    %c21 = arith.constant 21 : index
    %538 = memref.load %arg3[%c21] : memref<27xf32, #tpu.memory_space<smem>>
    %cst_208 = arith.constant 0.000000e+00 : f32
    %539 = vector.broadcast %cst_208 : f32 to vector<16x256xf32>
    %540 = arith.cmpf oge, %537, %539 : vector<16x256xf32>
    %541 = vector.broadcast %538 : f32 to vector<16x256xf32>
    %542 = arith.mulf %541, %537 : vector<16x256xf32>
    %543 = arith.select %540, %537, %542 : vector<16x256xi1>, vector<16x256xf32>
    %c2_i32_209 = arith.constant 2 : i32
    %544 = vector.broadcast %c2_i32_209 : i32 to vector<1x256xi32>
    %545 = arith.cmpi sge, %0, %544 : vector<1x256xi32>
    %c2_i32_210 = arith.constant 2 : i32
    %546 = tpu.dynamic_rotate %543 by %c2_i32_210 dim 1 : vector<16x256xf32>, i32 -> vector<16x256xf32>
    %cst_211 = arith.constant 0.000000e+00 : f32
    %547 = vector.shape_cast %545 : vector<1x256xi1> to vector<1x256xi1>
    %548 = vector.broadcast %547 : vector<1x256xi1> to vector<16x256xi1>
    %549 = vector.broadcast %cst_211 : f32 to vector<16x256xf32>
    %550 = arith.select %548, %546, %549 : vector<16x256xi1>, vector<16x256xf32>
    %c544 = arith.constant 544 : index
    %c0_212 = arith.constant 0 : index
    %551 = vector.load %arg4[%c544, %c0_212] : memref<688x16xbf16, #tpu.memory_space<vmem>>, vector<16x16xbf16>
    %552 = arith.truncf %550 : vector<16x256xf32> to vector<16x256xbf16>
    %cst_213 = arith.constant dense<0.000000e+00> : vector<16x256xf32>
    %553 = tpu.matmul %551, %552, %cst_213 {dimension_numbers = #tpu.dot_dimension_numbers<[1], [0], [0], [1], [0, 0, 1, 1], [], []>} : vector<16x16xbf16>, vector<16x256xbf16>, vector<16x256xf32> -> vector<16x256xf32>
    %c560 = arith.constant 560 : index
    %c0_214 = arith.constant 0 : index
    %554 = vector.load %arg4[%c560, %c0_214] : memref<688x16xbf16, #tpu.memory_space<vmem>>, vector<16x16xbf16>
    %555 = arith.truncf %543 : vector<16x256xf32> to vector<16x256xbf16>
    %cst_215 = arith.constant dense<0.000000e+00> : vector<16x256xf32>
    %556 = tpu.matmul %554, %555, %cst_215 {dimension_numbers = #tpu.dot_dimension_numbers<[1], [0], [0], [1], [0, 0, 1, 1], [], []>} : vector<16x16xbf16>, vector<16x256xbf16>, vector<16x256xf32> -> vector<16x256xf32>
    %557 = arith.addf %553, %556 : vector<16x256xf32>
    %c240_216 = arith.constant 240 : index
    %c0_217 = arith.constant 0 : index
    %558 = vector.load %arg5[%c240_216, %c0_217] : memref<304x1xf32, #tpu.memory_space<vmem>>, vector<16x1xf32>
    %559 = vector.broadcast %558 : vector<16x1xf32> to vector<16x256xf32>
    %560 = arith.addf %557, %559 : vector<16x256xf32>
    %c22 = arith.constant 22 : index
    %561 = memref.load %arg3[%c22] : memref<27xf32, #tpu.memory_space<smem>>
    %cst_218 = arith.constant 0.000000e+00 : f32
    %562 = vector.broadcast %cst_218 : f32 to vector<16x256xf32>
    %563 = arith.cmpf oge, %560, %562 : vector<16x256xf32>
    %564 = vector.broadcast %561 : f32 to vector<16x256xf32>
    %565 = arith.mulf %564, %560 : vector<16x256xf32>
    %566 = arith.select %563, %560, %565 : vector<16x256xi1>, vector<16x256xf32>
    %c576 = arith.constant 576 : index
    %c0_219 = arith.constant 0 : index
    %567 = vector.load %arg4[%c576, %c0_219] : memref<688x16xbf16, #tpu.memory_space<vmem>>, vector<16x8xbf16>
    %568 = arith.truncf %520 : vector<8x256xf32> to vector<8x256xbf16>
    %cst_220 = arith.constant dense<0.000000e+00> : vector<16x256xf32>
    %569 = tpu.matmul %567, %568, %cst_220 {dimension_numbers = #tpu.dot_dimension_numbers<[1], [0], [0], [1], [0, 0, 1, 1], [], []>} : vector<16x8xbf16>, vector<8x256xbf16>, vector<16x256xf32> -> vector<16x256xf32>
    %c256_221 = arith.constant 256 : index
    %c0_222 = arith.constant 0 : index
    %570 = vector.load %arg5[%c256_221, %c0_222] : memref<304x1xf32, #tpu.memory_space<vmem>>, vector<16x1xf32>
    %571 = vector.broadcast %570 : vector<16x1xf32> to vector<16x256xf32>
    %572 = arith.addf %569, %571 : vector<16x256xf32>
    %573 = arith.addf %566, %572 : vector<16x256xf32>
    %c23 = arith.constant 23 : index
    %574 = memref.load %arg3[%c23] : memref<27xf32, #tpu.memory_space<smem>>
    %cst_223 = arith.constant 0.000000e+00 : f32
    %575 = vector.broadcast %cst_223 : f32 to vector<16x256xf32>
    %576 = arith.cmpf oge, %573, %575 : vector<16x256xf32>
    %577 = vector.broadcast %574 : f32 to vector<16x256xf32>
    %578 = arith.mulf %577, %573 : vector<16x256xf32>
    %579 = arith.select %576, %573, %578 : vector<16x256xi1>, vector<16x256xf32>
    %c4_i32_224 = arith.constant 4 : i32
    %580 = vector.broadcast %c4_i32_224 : i32 to vector<1x256xi32>
    %581 = arith.cmpi sge, %0, %580 : vector<1x256xi32>
    %c4_i32_225 = arith.constant 4 : i32
    %582 = tpu.dynamic_rotate %579 by %c4_i32_225 dim 1 : vector<16x256xf32>, i32 -> vector<16x256xf32>
    %cst_226 = arith.constant 0.000000e+00 : f32
    %583 = vector.shape_cast %581 : vector<1x256xi1> to vector<1x256xi1>
    %584 = vector.broadcast %583 : vector<1x256xi1> to vector<16x256xi1>
    %585 = vector.broadcast %cst_226 : f32 to vector<16x256xf32>
    %586 = arith.select %584, %582, %585 : vector<16x256xi1>, vector<16x256xf32>
    %c592 = arith.constant 592 : index
    %c0_227 = arith.constant 0 : index
    %587 = vector.load %arg4[%c592, %c0_227] : memref<688x16xbf16, #tpu.memory_space<vmem>>, vector<8x16xbf16>
    %588 = arith.truncf %586 : vector<16x256xf32> to vector<16x256xbf16>
    %cst_228 = arith.constant dense<0.000000e+00> : vector<8x256xf32>
    %589 = tpu.matmul %587, %588, %cst_228 {dimension_numbers = #tpu.dot_dimension_numbers<[1], [0], [0], [1], [0, 0, 1, 1], [], []>} : vector<8x16xbf16>, vector<16x256xbf16>, vector<8x256xf32> -> vector<8x256xf32>
    %c608 = arith.constant 608 : index
    %c0_229 = arith.constant 0 : index
    %590 = vector.load %arg4[%c608, %c0_229] : memref<688x16xbf16, #tpu.memory_space<vmem>>, vector<8x16xbf16>
    %591 = arith.truncf %579 : vector<16x256xf32> to vector<16x256xbf16>
    %cst_230 = arith.constant dense<0.000000e+00> : vector<8x256xf32>
    %592 = tpu.matmul %590, %591, %cst_230 {dimension_numbers = #tpu.dot_dimension_numbers<[1], [0], [0], [1], [0, 0, 1, 1], [], []>} : vector<8x16xbf16>, vector<16x256xbf16>, vector<8x256xf32> -> vector<8x256xf32>
    %593 = arith.addf %589, %592 : vector<8x256xf32>
    %c272_231 = arith.constant 272 : index
    %c0_232 = arith.constant 0 : index
    %594 = vector.load %arg5[%c272_231, %c0_232] : memref<304x1xf32, #tpu.memory_space<vmem>>, vector<8x1xf32>
    %595 = vector.broadcast %594 : vector<8x1xf32> to vector<8x256xf32>
    %596 = arith.addf %593, %595 : vector<8x256xf32>
    %c24 = arith.constant 24 : index
    %597 = memref.load %arg3[%c24] : memref<27xf32, #tpu.memory_space<smem>>
    %cst_233 = arith.constant 0.000000e+00 : f32
    %598 = vector.broadcast %cst_233 : f32 to vector<8x256xf32>
    %599 = arith.cmpf oge, %596, %598 : vector<8x256xf32>
    %600 = vector.broadcast %597 : f32 to vector<8x256xf32>
    %601 = arith.mulf %600, %596 : vector<8x256xf32>
    %602 = arith.select %599, %596, %601 : vector<8x256xi1>, vector<8x256xf32>
    %c4_i32_234 = arith.constant 4 : i32
    %603 = vector.broadcast %c4_i32_234 : i32 to vector<1x256xi32>
    %604 = arith.cmpi sge, %0, %603 : vector<1x256xi32>
    %c4_i32_235 = arith.constant 4 : i32
    %605 = tpu.dynamic_rotate %602 by %c4_i32_235 dim 1 : vector<8x256xf32>, i32 -> vector<8x256xf32>
    %cst_236 = arith.constant 0.000000e+00 : f32
    %606 = vector.shape_cast %604 : vector<1x256xi1> to vector<1x256xi1>
    %607 = vector.broadcast %606 : vector<1x256xi1> to vector<8x256xi1>
    %608 = vector.broadcast %cst_236 : f32 to vector<8x256xf32>
    %609 = arith.select %607, %605, %608 : vector<8x256xi1>, vector<8x256xf32>
    %c624 = arith.constant 624 : index
    %c0_237 = arith.constant 0 : index
    %610 = vector.load %arg4[%c624, %c0_237] : memref<688x16xbf16, #tpu.memory_space<vmem>>, vector<8x8xbf16>
    %611 = arith.truncf %609 : vector<8x256xf32> to vector<8x256xbf16>
    %cst_238 = arith.constant dense<0.000000e+00> : vector<8x256xf32>
    %612 = tpu.matmul %610, %611, %cst_238 {dimension_numbers = #tpu.dot_dimension_numbers<[1], [0], [0], [1], [0, 0, 1, 1], [], []>} : vector<8x8xbf16>, vector<8x256xbf16>, vector<8x256xf32> -> vector<8x256xf32>
    %c640 = arith.constant 640 : index
    %c0_239 = arith.constant 0 : index
    %613 = vector.load %arg4[%c640, %c0_239] : memref<688x16xbf16, #tpu.memory_space<vmem>>, vector<8x8xbf16>
    %614 = arith.truncf %602 : vector<8x256xf32> to vector<8x256xbf16>
    %cst_240 = arith.constant dense<0.000000e+00> : vector<8x256xf32>
    %615 = tpu.matmul %613, %614, %cst_240 {dimension_numbers = #tpu.dot_dimension_numbers<[1], [0], [0], [1], [0, 0, 1, 1], [], []>} : vector<8x8xbf16>, vector<8x256xbf16>, vector<8x256xf32> -> vector<8x256xf32>
    %616 = arith.addf %612, %615 : vector<8x256xf32>
    %c280 = arith.constant 280 : index
    %c0_241 = arith.constant 0 : index
    %617 = vector.load %arg5[%c280, %c0_241] : memref<304x1xf32, #tpu.memory_space<vmem>>, vector<8x1xf32>
    %618 = vector.broadcast %617 : vector<8x1xf32> to vector<8x256xf32>
    %619 = arith.addf %616, %618 : vector<8x256xf32>
    %c25 = arith.constant 25 : index
    %620 = memref.load %arg3[%c25] : memref<27xf32, #tpu.memory_space<smem>>
    %cst_242 = arith.constant 0.000000e+00 : f32
    %621 = vector.broadcast %cst_242 : f32 to vector<8x256xf32>
    %622 = arith.cmpf oge, %619, %621 : vector<8x256xf32>
    %623 = vector.broadcast %620 : f32 to vector<8x256xf32>
    %624 = arith.mulf %623, %619 : vector<8x256xf32>
    %625 = arith.select %622, %619, %624 : vector<8x256xi1>, vector<8x256xf32>
    %c656 = arith.constant 656 : index
    %c0_243 = arith.constant 0 : index
    %626 = vector.load %arg4[%c656, %c0_243] : memref<688x16xbf16, #tpu.memory_space<vmem>>, vector<8x16xbf16>
    %627 = arith.truncf %579 : vector<16x256xf32> to vector<16x256xbf16>
    %cst_244 = arith.constant dense<0.000000e+00> : vector<8x256xf32>
    %628 = tpu.matmul %626, %627, %cst_244 {dimension_numbers = #tpu.dot_dimension_numbers<[1], [0], [0], [1], [0, 0, 1, 1], [], []>} : vector<8x16xbf16>, vector<16x256xbf16>, vector<8x256xf32> -> vector<8x256xf32>
    %c288_245 = arith.constant 288 : index
    %c0_246 = arith.constant 0 : index
    %629 = vector.load %arg5[%c288_245, %c0_246] : memref<304x1xf32, #tpu.memory_space<vmem>>, vector<8x1xf32>
    %630 = vector.broadcast %629 : vector<8x1xf32> to vector<8x256xf32>
    %631 = arith.addf %628, %630 : vector<8x256xf32>
    %632 = arith.addf %625, %631 : vector<8x256xf32>
    %c26 = arith.constant 26 : index
    %633 = memref.load %arg3[%c26] : memref<27xf32, #tpu.memory_space<smem>>
    %cst_247 = arith.constant 0.000000e+00 : f32
    %634 = vector.broadcast %cst_247 : f32 to vector<8x256xf32>
    %635 = arith.cmpf oge, %632, %634 : vector<8x256xf32>
    %636 = vector.broadcast %633 : f32 to vector<8x256xf32>
    %637 = arith.mulf %636, %632 : vector<8x256xf32>
    %638 = arith.select %635, %632, %637 : vector<8x256xi1>, vector<8x256xf32>
    %c672 = arith.constant 672 : index
    %c0_248 = arith.constant 0 : index
    %639 = vector.load %arg4[%c672, %c0_248] : memref<688x16xbf16, #tpu.memory_space<vmem>>, vector<8x8xbf16>
    %640 = arith.truncf %638 : vector<8x256xf32> to vector<8x256xbf16>
    %cst_249 = arith.constant dense<0.000000e+00> : vector<8x256xf32>
    %641 = tpu.matmul %639, %640, %cst_249 {dimension_numbers = #tpu.dot_dimension_numbers<[1], [0], [0], [1], [0, 0, 1, 1], [], []>} : vector<8x8xbf16>, vector<8x256xbf16>, vector<8x256xf32> -> vector<8x256xf32>
    %c296 = arith.constant 296 : index
    %c0_250 = arith.constant 0 : index
    %642 = vector.load %arg5[%c296, %c0_250] : memref<304x1xf32, #tpu.memory_space<vmem>>, vector<8x1xf32>
    %643 = vector.broadcast %642 : vector<8x1xf32> to vector<8x256xf32>
    %644 = arith.addf %641, %643 : vector<8x256xf32>
    %645 = arith.negf %644 : vector<8x256xf32>
    %646 = math.exp %645 : vector<8x256xf32>
    %cst_251 = arith.constant 1.000000e+00 : f32
    %647 = vector.broadcast %cst_251 : f32 to vector<8x256xf32>
    %648 = arith.addf %647, %646 : vector<8x256xf32>
    %649 = arith.divf %647, %648 : vector<8x256xf32>
    %c0_252 = arith.constant 0 : index
    %c0_253 = arith.constant 0 : index
    %c0_254 = arith.constant 0 : index
    %650 = vector.load %arg6[%c0_252, %c0_253, %c0_254] : memref<1x8x256xf32, #tpu.memory_space<vmem>>, vector<1x8x256xf32>
    %651 = vector.shape_cast %650 : vector<1x8x256xf32> to vector<8x256xf32>
    %652 = vector.shape_cast %649 : vector<8x256xf32> to vector<1x8x256xf32>
    tpu.vector_store %arg6[%c0_252, %c0_253, %c0_254], %652 {strides = array<i32>} : memref<1x8x256xf32, #tpu.memory_space<vmem>>, vector<1x8x256xf32>,
    return
  }
  func.func @transform_0(%arg0: i32) -> (i32, i32, i32) {
    %c0_i32 = arith.constant 0 : i32
    %c0_i32_0 = arith.constant 0 : i32
    %c0_i32_1 = arith.constant 0 : i32
    return %arg0, %c0_i32, %c0_i32_0 : i32, i32, i32
  }
  func.func @transform_1(%arg0: i32) -> (i32, i32) {
    %c0_i32 = arith.constant 0 : i32
    %c0_i32_0 = arith.constant 0 : i32
    %c0_i32_1 = arith.constant 0 : i32
    return %c0_i32, %c0_i32_0 : i32, i32
  }
  func.func @transform_2(%arg0: i32) -> i32 {
    %c0_i32 = arith.constant 0 : i32
    %c0_i32_0 = arith.constant 0 : i32
    return %c0_i32 : i32
  }
  func.func @transform_3(%arg0: i32) -> (i32, i32) {
    %c0_i32 = arith.constant 0 : i32
    %c0_i32_0 = arith.constant 0 : i32
    %c0_i32_1 = arith.constant 0 : i32
    return %c0_i32, %c0_i32_0 : i32, i32
  }
  func.func @transform_4(%arg0: i32) -> (i32, i32) {
    %c0_i32 = arith.constant 0 : i32
    %c0_i32_0 = arith.constant 0 : i32
    %c0_i32_1 = arith.constant 0 : i32
    return %c0_i32, %c0_i32_0 : i32, i32
  }
  func.func @transform_5(%arg0: i32) -> (i32, i32, i32) {
    %c0_i32 = arith.constant 0 : i32
    %c0_i32_0 = arith.constant 0 : i32
    %c0_i32_1 = arith.constant 0 : i32
    return %arg0, %c0_i32, %c0_i32_0 : i32, i32, i32
  }
}

</mosaic_0001>

<llo_original>
// kernel: _lambda_.1
$region0: #{_lambda_.1}
  #allocation0 [shape = 'u32[]', space=smem, size = 0x4, offset = 0x4, fixed_abs, tag = 'smem constant byte address 0x4 - core index']
  #allocation1 [shape = 'u32[144,128]{1,0:T(1,128)}', space=vmem, size = 0x12000, scoped, tag = 'internal scratch']
  %s0 = inlined_call_operand.vmem [shape: f32[2,8,256], index: 0, kind: input, shape index: {}]
  %s1 = inlined_call_operand.vmem [shape: s32[2,256], index: 1, kind: input, shape index: {}]
  %s2 = inlined_call_operand.vmem [shape: f32[27], index: 2, kind: input, shape index: {}]
  %s3 = inlined_call_operand.hbm [shape: bf16[688,16], index: 3, kind: input, shape index: {}]
  %s4 = inlined_call_operand.hbm [shape: f32[304,1], index: 4, kind: input, shape index: {}]
  %s5 = inlined_call_operand.hbm [shape: f32[2,8,256], index: 5, kind: output, shape index: {}]
  %s6 = sld [smem:[#allocation0]]
  $region65: #{_lambda_.1} parent=0
    _
  %s8 = ssub.s32 1, %s6
  %s9 = scalar_select 0, %s8, %s6
  $region1: #{_lambda_.1} parent=0
    #allocation2 [shape = 'u8[512]{0}', space=smem, size = 0x200, scoped, tag = 'input window, operand 2, single buffered']
    #allocation3 [shape = 's32[2]{0}', space=sflag, size = 0x8, scoped, tag = 'scoped memory for _lambda_.1']
    #allocation4 [shape = 's32[2]{0}', space=sflag, size = 0x8, scoped, tag = 'scoped memory for _lambda_.1']
    #allocation5 [shape = 's32[2]{0}', space=sflag, size = 0x8, scoped, tag = 'scoped memory for _lambda_.1']
    #allocation6 [shape = 'u8[176128]{0}', space=vmem, size = 0x2b000, scoped, tag = 'input window, operand 3, single buffered']
    #allocation7 [shape = 'u8[155648]{0}', space=vmem, size = 0x26000, scoped, tag = 'input window, operand 4, single buffered']
    #allocation8 [shape = 's32[1]{0}', space=sflag, size = 0x4, scoped, tag = 'scoped memory for _lambda_.1']
    #allocation9 [shape = 'u8[16384]{0}', space=vmem, size = 0x4000, scoped, tag = 'output window, operand 0']
    %10 = vsyncpa [#allocation5], 0
    %11 = vsyncpa [#allocation3], 0
    %12 = vsyncpa [#allocation8], 0
    %13 = vsyncpa [#allocation4], 0
    %s14 = scalar_lea.sflag [#allocation4], 1
    %15 = vsyncpa %s14, 0
    loop: start=0, step=1, limit=4
    $region2: #{_lambda_.1} parent=1 // loop_pre_header
      _
    $region3: #{_lambda_.1} parent=1 // loop_header
      %s17 = sphi 0, %s21
      %p18 = scmp.ge.s32.totalorder %s17, 4
      %s27 = sphi 0, %s29
      %s30 = sphi 0, %s27
      %s31 = sphi 0, %s30
      %s47 = sphi 0, %s31
      %s51 = sphi 0, %s51
      %s53 = sphi 0, %s51
      %s54 = sphi 0, %s53
      %s68 = sphi 0, %s54
      %s72 = sphi 0, %s72
      %s74 = sphi 0, %s72
      %s75 = sphi 0, %s74
      %s89 = sphi 0, %s75
      %s93 = sphi 0, %s93
      %s95 = sphi 0, %s93
      %s96 = sphi 0, %s95
      %s110 = sphi 0, %s96
      %s114 = sphi 0, %s114
      %s116 = sphi 0, %s114
      %s117 = sphi 0, %s116
      %s131 = sphi 0, %s117
      %s137 = sphi 0, %s139
      %s140 = sphi 0, %s137
      %s141 = sphi 0, %s140
      %s157 = sphi 0, %s141
    $region4: #{_lambda_.1} parent=1 // loop_header_branch
      %20 = sbr.rel (%p18) target = $region8
    $region5: #{_lambda_.1} parent=1 // loop_body
      %s22 = ssub.s32 %s17, 1
      %s23 = ssub.s32 %s17, 2
      %s24 = sadd.s32 %s17, 1
      %s25 = ssub.s32 %s17, %s24
      %p26 = scmp.eq.s32.totalorder %s25, 0
      %s28 = sadd.s32 %s27, 1
      %s29 = scalar_select %p26, %s27, %s28
      %p32 = pneg %p26
      %p33 = scmp.eq.s32.totalorder %s17, 1
      %p34 = por %p32, %p33
      %p35 = scmp.ne.s32.totalorder %s27, %s30
      %p36 = scmp.eq.s32.totalorder %s17, 0
      %p37 = por %p35, %p36
      %p38 = scmp.ne.s32.totalorder %s27, %s30
      %p39 = scmp.eq.s32.totalorder %s22, 1
      %p40 = por %p38, %p39
      %p41 = scmp.ne.s32.totalorder %s30, %s31
      %p42 = scmp.eq.s32.totalorder %s22, 0
      %p43 = por %p41, %p42
      %p44 = scmp.ne.s32.totalorder %s30, %s31
      %p45 = scmp.eq.s32.totalorder %s23, 1
      %p46 = por %p44, %p45
      %p48 = scmp.ne.s32.totalorder %s31, %s47
      %p49 = scmp.eq.s32.totalorder %s23, 0
      %p50 = por %p48, %p49
      %s52 = sadd.s32 %s51, 1
      %p55 = scmp.eq.s32.totalorder %s17, 1
      %p56 = scmp.ne.s32.totalorder %s51, %s53
      %p57 = scmp.eq.s32.totalorder %s17, 0
      %p58 = por %p56, %p57
      %p59 = scmp.ne.s32.totalorder %s51, %s53
      %p60 = scmp.eq.s32.totalorder %s22, 1
      %p61 = por %p59, %p60
      %p62 = scmp.ne.s32.totalorder %s53, %s54
      %p63 = scmp.eq.s32.totalorder %s22, 0
      %p64 = por %p62, %p63
      %p65 = scmp.ne.s32.totalorder %s53, %s54
      %p66 = scmp.eq.s32.totalorder %s23, 1
      %p67 = por %p65, %p66
      %p69 = scmp.ne.s32.totalorder %s54, %s68
      %p70 = scmp.eq.s32.totalorder %s23, 0
      %p71 = por %p69, %p70
      %s73 = sadd.s32 %s72, 1
      %p76 = scmp.eq.s32.totalorder %s17, 1
      %p77 = scmp.ne.s32.totalorder %s72, %s74
      %p78 = scmp.eq.s32.totalorder %s17, 0
      %p79 = por %p77, %p78
      %p80 = scmp.ne.s32.totalorder %s72, %s74
      %p81 = scmp.eq.s32.totalorder %s22, 1
      %p82 = por %p80, %p81
      %p83 = scmp.ne.s32.totalorder %s74, %s75
      %p84 = scmp.eq.s32.totalorder %s22, 0
      %p85 = por %p83, %p84
      %p86 = scmp.ne.s32.totalorder %s74, %s75
      %p87 = scmp.eq.s32.totalorder %s23, 1
      %p88 = por %p86, %p87
      %p90 = scmp.ne.s32.totalorder %s75, %s89
      %p91 = scmp.eq.s32.totalorder %s23, 0
      %p92 = por %p90, %p91
      %s94 = sadd.s32 %s93, 1
      %p97 = scmp.eq.s32.totalorder %s17, 1
      %p98 = scmp.ne.s32.totalorder %s93, %s95
      %p99 = scmp.eq.s32.totalorder %s17, 0
      %p100 = por %p98, %p99
      %p101 = scmp.ne.s32.totalorder %s93, %s95
      %p102 = scmp.eq.s32.totalorder %s22, 1
      %p103 = por %p101, %p102
      %p104 = scmp.ne.s32.totalorder %s95, %s96
      %p105 = scmp.eq.s32.totalorder %s22, 0
      %p106 = por %p104, %p105
      %p107 = scmp.ne.s32.totalorder %s95, %s96
      %p108 = scmp.eq.s32.totalorder %s23, 1
      %p109 = por %p107, %p108
      %p111 = scmp.ne.s32.totalorder %s96, %s110
      %p112 = scmp.eq.s32.totalorder %s23, 0
      %p113 = por %p111, %p112
      %s115 = sadd.s32 %s114, 1
      %p118 = scmp.eq.s32.totalorder %s17, 1
      %p119 = scmp.ne.s32.totalorder %s114, %s116
      %p120 = scmp.eq.s32.totalorder %s17, 0
      %p121 = por %p119, %p120
      %p122 = scmp.ne.s32.totalorder %s114, %s116
      %p123 = scmp.eq.s32.totalorder %s22, 1
      %p124 = por %p122, %p123
      %p125 = scmp.ne.s32.totalorder %s116, %s117
      %p126 = scmp.eq.s32.totalorder %s22, 0
      %p127 = por %p125, %p126
      %p128 = scmp.ne.s32.totalorder %s116, %s117
      %p129 = scmp.eq.s32.totalorder %s23, 1
      %p130 = por %p128, %p129
      %p132 = scmp.ne.s32.totalorder %s117, %s131
      %p133 = scmp.eq.s32.totalorder %s23, 0
      %p134 = por %p132, %p133
      %s135 = ssub.s32 %s17, %s24
      %p136 = scmp.eq.s32.totalorder %s135, 0
      %s138 = sadd.s32 %s137, 1
      %s139 = scalar_select %p136, %s137, %s138
      %p142 = pneg %p136
      %p143 = scmp.eq.s32.totalorder %s17, 1
      %p144 = por %p142, %p143
      %p145 = scmp.ne.s32.totalorder %s137, %s140
      %p146 = scmp.eq.s32.totalorder %s17, 0
      %p147 = por %p145, %p146
      %p148 = scmp.ne.s32.totalorder %s137, %s140
      %p149 = scmp.eq.s32.totalorder %s22, 1
      %p150 = por %p148, %p149
      %p151 = scmp.ne.s32.totalorder %s140, %s141
      %p152 = scmp.eq.s32.totalorder %s22, 0
      %p153 = por %p151, %p152
      %p154 = scmp.ne.s32.totalorder %s140, %s141
      %p155 = scmp.eq.s32.totalorder %s23, 1
      %p156 = por %p154, %p155
      %p158 = scmp.ne.s32.totalorder %s141, %s157
      %p159 = scmp.eq.s32.totalorder %s23, 0
      %p160 = por %p158, %p159
      %p161 = scmp.le.s32.totalorder 1, %s17
      %p162 = scmp.lt.s32.totalorder %s17, 3
      %p163 = pnand %p161, %p162
      %p164 = pneg %p163
      // Predicated region
      $region9: #{_lambda_.1} parent=5 // pred_check
        _
      $region10: #{_lambda_.1} parent=5 // pred_check_branch
        %166 = sbr.rel (%p163) target = $region12
      $region11: #{_lambda_.1} parent=5 // pred_region
        %s167 = ssub.s32 %s17, 1
        // Predicated region
        $region13: #{_lambda_.1} parent=11 // pred_check
          %p168 = pneg %p64
        $region14: #{_lambda_.1} parent=11 // pred_check_branch
          %170 = sbr.rel (%p168) target = $region16
        $region15: #{_lambda_.1} parent=11 // pred_region
          _
        $region16: #{_lambda_.1} parent=11 // pred_fallthru
          _
        // Predicated region
        $region17: #{_lambda_.1} parent=11 // pred_check
          %p171 = pneg %p85
        $region18: #{_lambda_.1} parent=11 // pred_check_branch
          %173 = sbr.rel (%p171) target = $region20
        $region19: #{_lambda_.1} parent=11 // pred_region
          %s175 = ssub.s32 16, 16
          %176 = vsyncadd [#allocation5], %s175
          %s178 = sshll.u32 %s2, 4
          %s179 = int_to_ptr.vmem [resolvable:$true] %s178
          %181 = dma.vmem_to_smem %s179, 16, [#allocation2], [#allocation5]
        $region20: #{_lambda_.1} parent=11 // pred_fallthru
          _
        // Predicated region
        $region21: #{_lambda_.1} parent=11 // pred_check
          %p182 = pneg %p106
        $region22: #{_lambda_.1} parent=11 // pred_check_branch
          %184 = sbr.rel (%p182) target = $region24
        $region23: #{_lambda_.1} parent=11 // pred_region
          %s186 = ssub.s32 5504, 5504
          %187 = vsyncadd [#allocation3], %s186
          %s188 = sshll.u32 [#allocation6], 4
          %s189 = int_to_ptr.vmem [resolvable:$true] %s188
          %194 = dma.hbm_to_vmem [thread:$0]  %s3, 5504, %s189, [#allocation3], 64, 64, 4
        $region24: #{_lambda_.1} parent=11 // pred_fallthru
          _
        // Predicated region
        $region25: #{_lambda_.1} parent=11 // pred_check
          %p195 = pneg %p127
        $region26: #{_lambda_.1} parent=11 // pred_check_branch
          %197 = sbr.rel (%p195) target = $region28
        $region27: #{_lambda_.1} parent=11 // pred_region
          %s199 = ssub.s32 4864, 4864
          %200 = vsyncadd [#allocation8], %s199
          %s201 = sshll.u32 [#allocation7], 4
          %s202 = int_to_ptr.vmem [resolvable:$true] %s201
          %207 = dma.hbm_to_vmem [thread:$0]  %s4, 4864, %s202, [#allocation8], 128, 128, 8
        $region28: #{_lambda_.1} parent=11 // pred_fallthru
          _
      $region12: #{_lambda_.1} parent=5 // pred_fallthru
        _
      %p208 = scmp.lt.s32.totalorder %s17, 2
      // Predicated region
      $region29: #{_lambda_.1} parent=5 // pred_check
        %p209 = pneg %p208
      $region30: #{_lambda_.1} parent=5 // pred_check_branch
        %211 = sbr.rel (%p209) target = $region32
      $region31: #{_lambda_.1} parent=5 // pred_region
        // Predicated region
        $region33: #{_lambda_.1} parent=31 // pred_check
          %p212 = pneg %p37
        $region34: #{_lambda_.1} parent=31 // pred_check_branch
          %214 = sbr.rel (%p212) target = $region36
        $region35: #{_lambda_.1} parent=31 // pred_region
          %p215 = scmp.lt.s32.totalorder %s17, 1
          %s216 = scalar_select %p215, %s17, 1
          %s217 = smul.addr %s216, 2
          %s218 = smul.addr %s217, 8
          %s219 = scalar_lea.vmem %s0, %s218
        $region36: #{_lambda_.1} parent=31 // pred_fallthru
          _
      $region32: #{_lambda_.1} parent=5 // pred_fallthru
        _
      %p220 = scmp.le.s32.totalorder 1, %s17
      %p221 = scmp.lt.s32.totalorder %s17, 3
      %p222 = pnand %p220, %p221
      %p223 = pneg %p222
      // Predicated region
      $region37: #{_lambda_.1} parent=5 // pred_check
        _
      $region38: #{_lambda_.1} parent=5 // pred_check_branch
        %225 = sbr.rel (%p222) target = $region40
      $region39: #{_lambda_.1} parent=5 // pred_region
        %s226 = ssub.s32 %s17, 1
        // Predicated region
        $region41: #{_lambda_.1} parent=39 // pred_check
          %p227 = pneg %p85
        $region42: #{_lambda_.1} parent=39 // pred_check_branch
          %229 = sbr.rel (%p227) target = $region44
        $region43: #{_lambda_.1} parent=39 // pred_region
          %230 = dma.done [#allocation5], 16
        $region44: #{_lambda_.1} parent=39 // pred_fallthru
          _
        // Predicated region
        $region45: #{_lambda_.1} parent=39 // pred_check
          %p231 = pneg %p106
        $region46: #{_lambda_.1} parent=39 // pred_check_branch
          %233 = sbr.rel (%p231) target = $region48
        $region47: #{_lambda_.1} parent=39 // pred_region
          %234 = dma.done [#allocation3], 5504
        $region48: #{_lambda_.1} parent=39 // pred_fallthru
          _
        // Predicated region
        $region49: #{_lambda_.1} parent=39 // pred_check
          %p235 = pneg %p127
        $region50: #{_lambda_.1} parent=39 // pred_check_branch
          %237 = sbr.rel (%p235) target = $region52
        $region51: #{_lambda_.1} parent=39 // pred_region
          %238 = dma.done [#allocation8], 4864
        $region52: #{_lambda_.1} parent=39 // pred_fallthru
          _
        %239 = sfence
        %p240 = scmp.lt.s32.totalorder %s22, 1
        %s241 = scalar_select %p240, %s22, 1
        %s242 = smul.addr %s241, 2
        %s243 = smul.addr %s242, 8
        %s244 = scalar_lea.vmem %s0, %s243
        %p245 = pneg %p43
        %p246 = pneg %p40
        %p247 = pneg %p64
        %p248 = pneg %p61
        %p249 = pneg %p85
        %p250 = pneg %p82
        %p251 = pneg %p106
        %p252 = pneg %p103
        %p253 = pneg %p127
        %p254 = pneg %p124
        %p255 = pneg %p153
        %p256 = pneg %p150
        %s257 = sand.u32 %s140, 1
        %s258 = scalar_lea.sflag [#allocation4], %s257
        %s259 = sand.u32 %s140, 1
        %s260 = smul.addr %s259, 16
        %s261 = scalar_lea.vmem [#allocation9], %s260
        %p262 = scmp.lt.s32.totalorder %s22, 1
        %s263 = scalar_select %p262, %s22, 1
        %s264 = smul.addr %s263, 2
        %s265 = smul.addr %s264, 8
        %s266 = scalar_lea.vmem %s0, %s265
        %v268 = vld [vmem:[%s1] ss:$2 sm:$0x3]
        %s269 = scalar_lea.vmem %s1, 1
        %v270 = vld [vmem:[%s269] ss:$2 sm:$0x3]
        %v271 = vld [vmem:[%s266] sm:$0xff]
        %v272 = vld [vmem:[%s266 + $0x8] sm:$0xff]
        %vm273 = vcmp.ge.s32.totalorder %v268, 1
        %274 = vrot.lane.b32.xlu0 %v271, 1
        %v275 = vpop.permute.xlu0 %274
        %276 = vrot.lane.b32.xlu0 %v272, 1
        %v277 = vpop.permute.xlu0 %276
        %v278 = vlaneseq
        %v279 = vand.u32 %v278, 127
        %vm280 = vcmp.lt.s32.totalorder %v279, 1
        %v281 = vsel %vm280, %v275, %v277
        %v282 = vsel %vm280, %v277, %v275
        %v283 = vsel %vm273, 1, 0
        %v284 = vlaneseq
        %v285 = vshrl.u32 %v284, 7
        %v286 = vsub.s32 0, %v285
        %v287 = vrot.slane %v283, %v286
        %v288 = vlaneseq
        %v289 = vshrl.u32 %v288, 7
        %v290 = vsub.s32 1, %v289
        %v291 = vrot.slane %v283, %v290
        %vm292 = vcmp.eq.s32.totalorder %v287, 1
        %vm293 = vcmp.eq.s32.totalorder %v291, 1
        %v294 = vsel %vm292, %v282, 0.0
        %v295 = vsel %vm293, %v281, 0.0
        %v296 = vld [vmem:[#allocation6] sm:$0xf]
        %v297 = vpack.c.bf16 %v294, %v294
        %v298 = vpack.c.bf16 %v295, %v295
        %v299 = vld [vmem:[#allocation6 + $0x8] sm:$0xf]
        %v300 = vpack.c.bf16 %v271, %v271
        %v301 = vpack.c.bf16 %v272, %v272
        %vm302 = vcmask 64512
        %v304 = vsel %vm302, %v299, 0
        %vm306 = vcmask 1043456
        %v308 = vsel %vm306, %v300, 0
        %v311 = vsel %vm306, %v301, 0
        %313 = vmatprep.subr.bf16.mxu0 %v311
        %314 = vmatpush1.bf16.msra.mxu0 %v308
        %315 = vmatprep.subr.bf16.mxu0 0
        %316 = vmatpush1.bf16.msra.mxu0 0
        %317 = vmatprep.subr.bf16.mxu0 0
        %318 = vmatpush1.bf16.msra.mxu0 0
        %319 = vmatprep.subr.bf16.mxu0 0
        %320 = vmatpush1.bf16.msra.mxu0 0
        %321 = vmatprep.subr.bf16.mxu0 0
        %322 = vmatpush1.bf16.msra.mxu0 0
        %323 = vmatprep.subr.bf16.mxu0 0
        %324 = vmatpush1.bf16.msra.mxu0 0
        %325 = vmatprep.subr.bf16.mxu0 0
        %326 = vmatpush1.bf16.msra.mxu0 0
        %327 = vmatprep.subr.bf16.mxu0 0
        %328 = vmatpush1.bf16.msra.mxu0 0
        %329 = vmatprep.subr.bf16.mxu0 0
        %330 = vmatpush1.bf16.msra.mxu0 0
        %331 = vmatprep.subr.bf16.mxu0 0
        %332 = vmatpush1.bf16.msra.mxu0 0
        %333 = vmatprep.subr.bf16.mxu0 0
        %334 = vmatpush1.bf16.msra.mxu0 0
        %335 = vmatprep.subr.bf16.mxu0 0
        %336 = vmatpush1.bf16.msra.mxu0 0
        %337 = vmatprep.subr.bf16.mxu0 0
        %338 = vmatpush1.bf16.msra.mxu0 0
        %339 = vmatprep.subr.bf16.mxu0 0
        %340 = vmatpush1.bf16.msra.mxu0 0
        %341 = vmatprep.subr.bf16.mxu0 0
        %342 = vmatpush1.bf16.msra.mxu0 0
        %343 = vmatprep.subr.bf16.mxu0 0
        %344 = vmatpush1.bf16.msra.mxu0 0
        %345 = vmatprep.mubr.bf16.mxu0 0
        %346 = vmatmul.mubr.bf16.gmra.mrb[0].mxu0 %v304
        %v347 = vpop.f32.mrb[0].mxu0
        %v348 = vadd.f32 0.0, %v347
        %v349 = vpop.f32.mrb[0].mxu0
        %v350 = vadd.f32 0.0, %v349
        %v351 = vpop.f32.mrb[0].mxu0
        %v352 = vpop.f32.mrb[0].mxu0
        %353 = vdwg.mxu0
        %v355 = vsel %vm302, %v296, 0
        %v358 = vsel %vm306, %v297, 0
        %v361 = vsel %vm306, %v298, 0
        %363 = vmatprep.subr.bf16.mxu0 %v361
        %364 = vmatpush1.bf16.msra.mxu0 %v358
        %365 = vmatprep.subr.bf16.mxu0 0
        %366 = vmatpush1.bf16.msra.mxu0 0
        %367 = vmatprep.subr.bf16.mxu0 0
        %368 = vmatpush1.bf16.msra.mxu0 0
        %369 = vmatprep.subr.bf16.mxu0 0
        %370 = vmatpush1.bf16.msra.mxu0 0
        %371 = vmatprep.subr.bf16.mxu0 0
        %372 = vmatpush1.bf16.msra.mxu0 0
        %373 = vmatprep.subr.bf16.mxu0 0
        %374 = vmatpush1.bf16.msra.mxu0 0
        %375 = vmatprep.subr.bf16.mxu0 0
        %376 = vmatpush1.bf16.msra.mxu0 0
        %377 = vmatprep.subr.bf16.mxu0 0
        %378 = vmatpush1.bf16.msra.mxu0 0
        %379 = vmatprep.subr.bf16.mxu0 0
        %380 = vmatpush1.bf16.msra.mxu0 0
        %381 = vmatprep.subr.bf16.mxu0 0
        %382 = vmatpush1.bf16.msra.mxu0 0
        %383 = vmatprep.subr.bf16.mxu0 0
        %384 = vmatpush1.bf16.msra.mxu0 0
        %385 = vmatprep.subr.bf16.mxu0 0
        %386 = vmatpush1.bf16.msra.mxu0 0
        %387 = vmatprep.subr.bf16.mxu0 0
        %388 = vmatpush1.bf16.msra.mxu0 0
        %389 = vmatprep.subr.bf16.mxu0 0
        %390 = vmatpush1.bf16.msra.mxu0 0
        %391 = vmatprep.subr.bf16.mxu0 0
        %392 = vmatpush1.bf16.msra.mxu0 0
        %393 = vmatprep.subr.bf16.mxu0 0
        %394 = vmatpush1.bf16.msra.mxu0 0
        %395 = vmatprep.mubr.bf16.mxu0 0
        %396 = vmatmul.mubr.bf16.gmra.mrb[0].mxu0 %v355
        %v397 = vpop.f32.mrb[0].mxu0
        %v398 = vadd.f32 %v348, %v397
        %v399 = vpop.f32.mrb[0].mxu0
        %v400 = vadd.f32 %v350, %v399
        %v401 = vpop.f32.mrb[0].mxu0
        %v402 = vpop.f32.mrb[0].mxu0
        %403 = vdwg.mxu0
        %v404 = vld [vmem:[#allocation7] sm:$0xff]
        %406 = vset.pattern.permute.xlu0 0
        %407 = vperm.xlu0 %406, %v404
        %v408 = vpop.permute.xlu0 %407
        %v410 = vadd.f32 %v398, %v408
        %v411 = vadd.f32 %v400, %v408
        %s412 = sld [smem:[#allocation2]]
        %vm413 = vcmp.ge.f32.partialorder %v410, 0.0
        %vm414 = vcmp.ge.f32.partialorder %v411, 0.0
        %v415 = vstv %s412
        %v416 = vmul.f32 %v415, %v410
        %v417 = vmul.f32 %v415, %v411
        %v418 = vsel %vm413, %v410, %v416
        %v419 = vsel %vm414, %v411, %v417
        %420 = vrot.lane.b32.xlu0 %v418, 1
        %v421 = vpop.permute.xlu0 %420
        %422 = vrot.lane.b32.xlu0 %v419, 1
        %v423 = vpop.permute.xlu0 %422
        %v424 = vsel %vm280, %v421, %v423
        %v425 = vsel %vm280, %v423, %v421
        %v426 = vsel %vm292, %v425, 0.0
        %v427 = vsel %vm293, %v424, 0.0
        %v428 = vld [vmem:[#allocation6 + $0x10] sm:$0xf]
        %v429 = vpack.c.bf16 %v426, %v426
        %v430 = vpack.c.bf16 %v427, %v427
        %v431 = vld [vmem:[#allocation6 + $0x18] sm:$0xf]
        %v432 = vpack.c.bf16 %v418, %v418
        %v433 = vpack.c.bf16 %v419, %v419
        %v435 = vsel %vm302, %v431, 0
        %v438 = vsel %vm306, %v432, 0
        %v441 = vsel %vm306, %v433, 0
        %443 = vmatprep.subr.bf16.mxu0 %v441
        %444 = vmatpush1.bf16.msra.mxu0 %v438
        %445 = vmatprep.subr.bf16.mxu0 0
        %446 = vmatpush1.bf16.msra.mxu0 0
        %447 = vmatprep.subr.bf16.mxu0 0
        %448 = vmatpush1.bf16.msra.mxu0 0
        %449 = vmatprep.subr.bf16.mxu0 0
        %450 = vmatpush1.bf16.msra.mxu0 0
        %451 = vmatprep.subr.bf16.mxu0 0
        %452 = vmatpush1.bf16.msra.mxu0 0
        %453 = vmatprep.subr.bf16.mxu0 0
        %454 = vmatpush1.bf16.msra.mxu0 0
        %455 = vmatprep.subr.bf16.mxu0 0
        %456 = vmatpush1.bf16.msra.mxu0 0
        %457 = vmatprep.subr.bf16.mxu0 0
        %458 = vmatpush1.bf16.msra.mxu0 0
        %459 = vmatprep.subr.bf16.mxu0 0
        %460 = vmatpush1.bf16.msra.mxu0 0
        %461 = vmatprep.subr.bf16.mxu0 0
        %462 = vmatpush1.bf16.msra.mxu0 0
        %463 = vmatprep.subr.bf16.mxu0 0
        %464 = vmatpush1.bf16.msra.mxu0 0
        %465 = vmatprep.subr.bf16.mxu0 0
        %466 = vmatpush1.bf16.msra.mxu0 0
        %467 = vmatprep.subr.bf16.mxu0 0
        %468 = vmatpush1.bf16.msra.mxu0 0
        %469 = vmatprep.subr.bf16.mxu0 0
        %470 = vmatpush1.bf16.msra.mxu0 0
        %471 = vmatprep.subr.bf16.mxu0 0
        %472 = vmatpush1.bf16.msra.mxu0 0
        %473 = vmatprep.subr.bf16.mxu0 0
        %474 = vmatpush1.bf16.msra.mxu0 0
        %475 = vmatprep.mubr.bf16.mxu0 0
        %476 = vmatmul.mubr.bf16.gmra.mrb[0].mxu0 %v435
        %v477 = vpop.f32.mrb[0].mxu0
        %v478 = vadd.f32 0.0, %v477
        %v479 = vpop.f32.mrb[0].mxu0
        %v480 = vadd.f32 0.0, %v479
        %v481 = vpop.f32.mrb[0].mxu0
        %v482 = vpop.f32.mrb[0].mxu0
        %483 = vdwg.mxu0
        %v485 = vsel %vm302, %v428, 0
        %v488 = vsel %vm306, %v429, 0
        %v491 = vsel %vm306, %v430, 0
        %493 = vmatprep.subr.bf16.mxu0 %v491
        %494 = vmatpush1.bf16.msra.mxu0 %v488
        %495 = vmatprep.subr.bf16.mxu0 0
        %496 = vmatpush1.bf16.msra.mxu0 0
        %497 = vmatprep.subr.bf16.mxu0 0
        %498 = vmatpush1.bf16.msra.mxu0 0
        %499 = vmatprep.subr.bf16.mxu0 0
        %500 = vmatpush1.bf16.msra.mxu0 0
        %501 = vmatprep.subr.bf16.mxu0 0
        %502 = vmatpush1.bf16.msra.mxu0 0
        %503 = vmatprep.subr.bf16.mxu0 0
        %504 = vmatpush1.bf16.msra.mxu0 0
        %505 = vmatprep.subr.bf16.mxu0 0
        %506 = vmatpush1.bf16.msra.mxu0 0
        %507 = vmatprep.subr.bf16.mxu0 0
        %508 = vmatpush1.bf16.msra.mxu0 0
        %509 = vmatprep.subr.bf16.mxu0 0
        %510 = vmatpush1.bf16.msra.mxu0 0
        %511 = vmatprep.subr.bf16.mxu0 0
        %512 = vmatpush1.bf16.msra.mxu0 0
        %513 = vmatprep.subr.bf16.mxu0 0
        %514 = vmatpush1.bf16.msra.mxu0 0
        %515 = vmatprep.subr.bf16.mxu0 0
        %516 = vmatpush1.bf16.msra.mxu0 0
        %517 = vmatprep.subr.bf16.mxu0 0
        %518 = vmatpush1.bf16.msra.mxu0 0
        %519 = vmatprep.subr.bf16.mxu0 0
        %520 = vmatpush1.bf16.msra.mxu0 0
        %521 = vmatprep.subr.bf16.mxu0 0
        %522 = vmatpush1.bf16.msra.mxu0 0
        %523 = vmatprep.subr.bf16.mxu0 0
        %524 = vmatpush1.bf16.msra.mxu0 0
        %525 = vmatprep.mubr.bf16.mxu0 0
        %526 = vmatmul.mubr.bf16.gmra.mrb[0].mxu0 %v485
        %v527 = vpop.f32.mrb[0].mxu0
        %v528 = vadd.f32 %v478, %v527
        %v529 = vpop.f32.mrb[0].mxu0
        %v530 = vadd.f32 %v480, %v529
        %v531 = vpop.f32.mrb[0].mxu0
        %v532 = vpop.f32.mrb[0].mxu0
        %533 = vdwg.mxu0
        %v534 = vld [vmem:[#allocation7 + $0x8] sm:$0xff]
        %536 = vset.pattern.permute.xlu0 0
        %537 = vperm.xlu0 %536, %v534
        %v538 = vpop.permute.xlu0 %537
        %v540 = vadd.f32 %v528, %v538
        %v541 = vadd.f32 %v530, %v538
        %s542 = sld [smem:[#allocation2 + $0x1]]
        %vm543 = vcmp.ge.f32.partialorder %v540, 0.0
        %vm544 = vcmp.ge.f32.partialorder %v541, 0.0
        %v545 = vstv %s542
        %v546 = vmul.f32 %v545, %v540
        %v547 = vmul.f32 %v545, %v541
        %v548 = vsel %vm543, %v540, %v546
        %v549 = vsel %vm544, %v541, %v547
        %v550 = vadd.f32 %v548, %v271
        %v551 = vadd.f32 %v549, %v272
        %s552 = sld [smem:[#allocation2 + $0x2]]
        %vm553 = vcmp.ge.f32.partialorder %v550, 0.0
        %vm554 = vcmp.ge.f32.partialorder %v551, 0.0
        %v555 = vstv %s552
        %v556 = vmul.f32 %v555, %v550
        %v557 = vmul.f32 %v555, %v551
        %v558 = vsel %vm553, %v550, %v556
        %v559 = vsel %vm554, %v551, %v557
        %vm560 = vcmp.ge.s32.totalorder %v268, 2
        %561 = vrot.lane.b32.xlu0 %v558, 2
        %v562 = vpop.permute.xlu0 %561
        %563 = vrot.lane.b32.xlu0 %v559, 2
        %v564 = vpop.permute.xlu0 %563
        %vm565 = vcmp.lt.s32.totalorder %v279, 2
        %v566 = vsel %vm565, %v562, %v564
        %v567 = vsel %vm565, %v564, %v562
        %v568 = vsel %vm560, 1, 0
        %v569 = vlaneseq
        %v570 = vshrl.u32 %v569, 7
        %v571 = vsub.s32 0, %v570
        %v572 = vrot.slane %v568, %v571
        %v573 = vlaneseq
        %v574 = vshrl.u32 %v573, 7
        %v575 = vsub.s32 1, %v574
        %v576 = vrot.slane %v568, %v575
        %vm577 = vcmp.eq.s32.totalorder %v572, 1
        %vm578 = vcmp.eq.s32.totalorder %v576, 1
        %v579 = vsel %vm577, %v567, 0.0
        %v580 = vsel %vm578, %v566, 0.0
        %v581 = vld [vmem:[#allocation6 + $0x20] sm:$0xf]
        %v582 = vld [vmem:[#allocation6 + $0x24] sm:$0xf]
        %v583 = vpack.c.bf16 %v579, %v579
        %v584 = vpack.c.bf16 %v580, %v580
        %v585 = vld [vmem:[#allocation6 + $0x28] sm:$0xf]
        %v586 = vld [vmem:[#allocation6 + $0x2c] sm:$0xf]
        %v587 = vpack.c.bf16 %v558, %v558
        %v588 = vpack.c.bf16 %v559, %v559
        %v591 = vunpack.c.l.b16 %v585
        %v592 = vunpack.c.l.b16 %v586
        %v593 = vpack.c.b16 %v592, %v591
        %v595 = vsel %vm302, %v593, 0
        %v598 = vsel %vm306, %v587, 0
        %v601 = vsel %vm306, %v588, 0
        %603 = vmatprep.subr.bf16.mxu0 %v601
        %604 = vmatpush1.bf16.msra.mxu0 %v598
        %605 = vmatprep.subr.bf16.mxu0 0
        %606 = vmatpush1.bf16.msra.mxu0 0
        %607 = vmatprep.subr.bf16.mxu0 0
        %608 = vmatpush1.bf16.msra.mxu0 0
        %609 = vmatprep.subr.bf16.mxu0 0
        %610 = vmatpush1.bf16.msra.mxu0 0
        %611 = vmatprep.subr.bf16.mxu0 0
        %612 = vmatpush1.bf16.msra.mxu0 0
        %613 = vmatprep.subr.bf16.mxu0 0
        %614 = vmatpush1.bf16.msra.mxu0 0
        %615 = vmatprep.subr.bf16.mxu0 0
        %616 = vmatpush1.bf16.msra.mxu0 0
        %617 = vmatprep.subr.bf16.mxu0 0
        %618 = vmatpush1.bf16.msra.mxu0 0
        %619 = vmatprep.subr.bf16.mxu0 0
        %620 = vmatpush1.bf16.msra.mxu0 0
        %621 = vmatprep.subr.bf16.mxu0 0
        %622 = vmatpush1.bf16.msra.mxu0 0
        %623 = vmatprep.subr.bf16.mxu0 0
        %624 = vmatpush1.bf16.msra.mxu0 0
        %625 = vmatprep.subr.bf16.mxu0 0
        %626 = vmatpush1.bf16.msra.mxu0 0
        %627 = vmatprep.subr.bf16.mxu0 0
        %628 = vmatpush1.bf16.msra.mxu0 0
        %629 = vmatprep.subr.bf16.mxu0 0
        %630 = vmatpush1.bf16.msra.mxu0 0
        %631 = vmatprep.subr.bf16.mxu0 0
        %632 = vmatpush1.bf16.msra.mxu0 0
        %633 = vmatprep.subr.bf16.mxu0 0
        %634 = vmatpush1.bf16.msra.mxu0 0
        %635 = vmatprep.mubr.bf16.mxu0 0
        %636 = vmatmul.mubr.bf16.gmra.mrb[0].mxu0 %v595
        %v637 = vpop.f32.mrb[0].mxu0
        %v638 = vadd.f32 0.0, %v637
        %v639 = vpop.f32.mrb[0].mxu0
        %v640 = vadd.f32 0.0, %v639
        %v641 = vpop.f32.mrb[0].mxu0
        %v642 = vadd.f32 0.0, %v641
        %v643 = vpop.f32.mrb[0].mxu0
        %v644 = vadd.f32 0.0, %v643
        %645 = vdwg.mxu0
        %v648 = vunpack.c.l.b16 %v581
        %v649 = vunpack.c.l.b16 %v582
        %v650 = vpack.c.b16 %v649, %v648
        %v652 = vsel %vm302, %v650, 0
        %v655 = vsel %vm306, %v583, 0
        %v658 = vsel %vm306, %v584, 0
        %660 = vmatprep.subr.bf16.mxu0 %v658
        %661 = vmatpush1.bf16.msra.mxu0 %v655
        %662 = vmatprep.subr.bf16.mxu0 0
        %663 = vmatpush1.bf16.msra.mxu0 0
        %664 = vmatprep.subr.bf16.mxu0 0
        %665 = vmatpush1.bf16.msra.mxu0 0
        %666 = vmatprep.subr.bf16.mxu0 0
        %667 = vmatpush1.bf16.msra.mxu0 0
        %668 = vmatprep.subr.bf16.mxu0 0
        %669 = vmatpush1.bf16.msra.mxu0 0
        %670 = vmatprep.subr.bf16.mxu0 0
        %671 = vmatpush1.bf16.msra.mxu0 0
        %672 = vmatprep.subr.bf16.mxu0 0
        %673 = vmatpush1.bf16.msra.mxu0 0
        %674 = vmatprep.subr.bf16.mxu0 0
        %675 = vmatpush1.bf16.msra.mxu0 0
        %676 = vmatprep.subr.bf16.mxu0 0
        %677 = vmatpush1.bf16.msra.mxu0 0
        %678 = vmatprep.subr.bf16.mxu0 0
        %679 = vmatpush1.bf16.msra.mxu0 0
        %680 = vmatprep.subr.bf16.mxu0 0
        %681 = vmatpush1.bf16.msra.mxu0 0
        %682 = vmatprep.subr.bf16.mxu0 0
        %683 = vmatpush1.bf16.msra.mxu0 0
        %684 = vmatprep.subr.bf16.mxu0 0
        %685 = vmatpush1.bf16.msra.mxu0 0
        %686 = vmatprep.subr.bf16.mxu0 0
        %687 = vmatpush1.bf16.msra.mxu0 0
        %688 = vmatprep.subr.bf16.mxu0 0
        %689 = vmatpush1.bf16.msra.mxu0 0
        %690 = vmatprep.subr.bf16.mxu0 0
        %691 = vmatpush1.bf16.msra.mxu0 0
        %692 = vmatprep.mubr.bf16.mxu0 0
        %693 = vmatmul.mubr.bf16.gmra.mrb[0].mxu0 %v652
        %v694 = vpop.f32.mrb[0].mxu0
        %v695 = vadd.f32 %v638, %v694
        %v696 = vpop.f32.mrb[0].mxu0
        %v697 = vadd.f32 %v640, %v696
        %v698 = vpop.f32.mrb[0].mxu0
        %v699 = vadd.f32 %v642, %v698
        %v700 = vpop.f32.mrb[0].mxu0
        %v701 = vadd.f32 %v644, %v700
        %702 = vdwg.mxu0
        %v703 = vld [vmem:[#allocation7 + $0x10] sm:$0xff]
        %v704 = vld [vmem:[#allocation7 + $0x18] sm:$0xff]
        %706 = vset.pattern.permute.xlu0 0
        %707 = vperm.xlu0 %706, %v703
        %v708 = vpop.permute.xlu0 %707
        %711 = vset.pattern.permute.xlu0 0
        %712 = vperm.xlu0 %711, %v704
        %v713 = vpop.permute.xlu0 %712
        %v715 = vadd.f32 %v695, %v708
        %v716 = vadd.f32 %v697, %v708
        %v717 = vadd.f32 %v699, %v713
        %v718 = vadd.f32 %v701, %v713
        %s719 = sld [smem:[#allocation2 + $0x3]]
        %vm720 = vcmp.ge.f32.partialorder %v715, 0.0
        %vm721 = vcmp.ge.f32.partialorder %v716, 0.0
        %vm722 = vcmp.ge.f32.partialorder %v717, 0.0
        %vm723 = vcmp.ge.f32.partialorder %v718, 0.0
        %v724 = vstv %s719
        %v725 = vmul.f32 %v724, %v715
        %v726 = vmul.f32 %v724, %v716
        %v727 = vmul.f32 %v724, %v717
        %v728 = vmul.f32 %v724, %v718
        %v729 = vsel %vm720, %v715, %v725
        %v730 = vsel %vm721, %v716, %v726
        %v731 = vsel %vm722, %v717, %v727
        %v732 = vsel %vm723, %v718, %v728
        %733 = vrot.lane.b32.xlu0 %v729, 2
        %v734 = vpop.permute.xlu0 %733
        %735 = vrot.lane.b32.xlu0 %v731, 2
        %v736 = vpop.permute.xlu0 %735
        %737 = vrot.lane.b32.xlu0 %v730, 2
        %v738 = vpop.permute.xlu0 %737
        %739 = vrot.lane.b32.xlu0 %v732, 2
        %v740 = vpop.permute.xlu0 %739
        %v741 = vsel %vm565, %v734, %v738
        %v742 = vsel %vm565, %v736, %v740
        %v743 = vsel %vm565, %v738, %v734
        %v744 = vsel %vm565, %v740, %v736
        %v745 = vsel %vm577, %v743, 0.0
        %v746 = vsel %vm578, %v741, 0.0
        %v747 = vsel %vm577, %v744, 0.0
        %v748 = vsel %vm578, %v742, 0.0
        %v749 = vld [vmem:[#allocation6 + $0x30] sm:$0xf]
        %v750 = vld [vmem:[#allocation6 + $0x34] sm:$0xf]
        %v751 = vpack.c.bf16 %v747, %v745
        %v752 = vpack.c.bf16 %v748, %v746
        %v753 = vld [vmem:[#allocation6 + $0x38] sm:$0xf]
        %v754 = vld [vmem:[#allocation6 + $0x3c] sm:$0xf]
        %v755 = vpack.c.bf16 %v731, %v729
        %v756 = vpack.c.bf16 %v732, %v730
        %v759 = vunpack.c.l.b16 %v753
        %v760 = vunpack.c.l.b16 %v754
        %v761 = vpack.c.b16 %v760, %v759
        %vm762 = vcmask 130048
        %v764 = vsel %vm762, %v761, 0
        %766 = vmatprep.subr.bf16.mxu0 %v756
        %767 = vmatpush1.bf16.msra.mxu0 %v755
        %768 = vmatprep.subr.bf16.mxu0 0
        %769 = vmatpush1.bf16.msra.mxu0 0
        %770 = vmatprep.subr.bf16.mxu0 0
        %771 = vmatpush1.bf16.msra.mxu0 0
        %772 = vmatprep.subr.bf16.mxu0 0
        %773 = vmatpush1.bf16.msra.mxu0 0
        %774 = vmatprep.subr.bf16.mxu0 0
        %775 = vmatpush1.bf16.msra.mxu0 0
        %776 = vmatprep.subr.bf16.mxu0 0
        %777 = vmatpush1.bf16.msra.mxu0 0
        %778 = vmatprep.subr.bf16.mxu0 0
        %779 = vmatpush1.bf16.msra.mxu0 0
        %780 = vmatprep.subr.bf16.mxu0 0
        %781 = vmatpush1.bf16.msra.mxu0 0
        %782 = vmatprep.subr.bf16.mxu0 0
        %783 = vmatpush1.bf16.msra.mxu0 0
        %784 = vmatprep.subr.bf16.mxu0 0
        %785 = vmatpush1.bf16.msra.mxu0 0
        %786 = vmatprep.subr.bf16.mxu0 0
        %787 = vmatpush1.bf16.msra.mxu0 0
        %788 = vmatprep.subr.bf16.mxu0 0
        %789 = vmatpush1.bf16.msra.mxu0 0
        %790 = vmatprep.subr.bf16.mxu0 0
        %791 = vmatpush1.bf16.msra.mxu0 0
        %792 = vmatprep.subr.bf16.mxu0 0
        %793 = vmatpush1.bf16.msra.mxu0 0
        %794 = vmatprep.subr.bf16.mxu0 0
        %795 = vmatpush1.bf16.msra.mxu0 0
        %796 = vmatprep.subr.bf16.mxu0 0
        %797 = vmatpush1.bf16.msra.mxu0 0
        %798 = vmatprep.mubr.bf16.mxu0 0
        %799 = vmatmul.mubr.bf16.gmra.mrb[0].mxu0 %v764
        %v800 = vpop.f32.mrb[0].mxu0
        %v801 = vadd.f32 0.0, %v800
        %v802 = vpop.f32.mrb[0].mxu0
        %v803 = vadd.f32 0.0, %v802
        %v804 = vpop.f32.mrb[0].mxu0
        %v805 = vadd.f32 0.0, %v804
        %v806 = vpop.f32.mrb[0].mxu0
        %v807 = vadd.f32 0.0, %v806
        %808 = vdwg.mxu0
        %v811 = vunpack.c.l.b16 %v749
        %v812 = vunpack.c.l.b16 %v750
        %v813 = vpack.c.b16 %v812, %v811
        %v815 = vsel %vm762, %v813, 0
        %817 = vmatprep.subr.bf16.mxu0 %v752
        %818 = vmatpush1.bf16.msra.mxu0 %v751
        %819 = vmatprep.subr.bf16.mxu0 0
        %820 = vmatpush1.bf16.msra.mxu0 0
        %821 = vmatprep.subr.bf16.mxu0 0
        %822 = vmatpush1.bf16.msra.mxu0 0
        %823 = vmatprep.subr.bf16.mxu0 0
        %824 = vmatpush1.bf16.msra.mxu0 0
        %825 = vmatprep.subr.bf16.mxu0 0
        %826 = vmatpush1.bf16.msra.mxu0 0
        %827 = vmatprep.subr.bf16.mxu0 0
        %828 = vmatpush1.bf16.msra.mxu0 0
        %829 = vmatprep.subr.bf16.mxu0 0
        %830 = vmatpush1.bf16.msra.mxu0 0
        %831 = vmatprep.subr.bf16.mxu0 0
        %832 = vmatpush1.bf16.msra.mxu0 0
        %833 = vmatprep.subr.bf16.mxu0 0
        %834 = vmatpush1.bf16.msra.mxu0 0
        %835 = vmatprep.subr.bf16.mxu0 0
        %836 = vmatpush1.bf16.msra.mxu0 0
        %837 = vmatprep.subr.bf16.mxu0 0
        %838 = vmatpush1.bf16.msra.mxu0 0
        %839 = vmatprep.subr.bf16.mxu0 0
        %840 = vmatpush1.bf16.msra.mxu0 0
        %841 = vmatprep.subr.bf16.mxu0 0
        %842 = vmatpush1.bf16.msra.mxu0 0
        %843 = vmatprep.subr.bf16.mxu0 0
        %844 = vmatpush1.bf16.msra.mxu0 0
        %845 = vmatprep.subr.bf16.mxu0 0
        %846 = vmatpush1.bf16.msra.mxu0 0
        %847 = vmatprep.subr.bf16.mxu0 0
        %848 = vmatpush1.bf16.msra.mxu0 0
        %849 = vmatprep.mubr.bf16.mxu0 0
        %850 = vmatmul.mubr.bf16.gmra.mrb[0].mxu0 %v815
        %v851 = vpop.f32.mrb[0].mxu0
        %v852 = vadd.f32 %v801, %v851
        %v853 = vpop.f32.mrb[0].mxu0
        %v854 = vadd.f32 %v803, %v853
        %v855 = vpop.f32.mrb[0].mxu0
        %v856 = vadd.f32 %v805, %v855
        %v857 = vpop.f32.mrb[0].mxu0
        %v858 = vadd.f32 %v807, %v857
        %859 = vdwg.mxu0
        %v860 = vld [vmem:[#allocation7 + $0x20] sm:$0xff]
        %v861 = vld [vmem:[#allocation7 + $0x28] sm:$0xff]
        %863 = vset.pattern.permute.xlu0 0
        %864 = vperm.xlu0 %863, %v860
        %v865 = vpop.permute.xlu0 %864
        %868 = vset.pattern.permute.xlu0 0
        %869 = vperm.xlu0 %868, %v861
        %v870 = vpop.permute.xlu0 %869
        %v872 = vadd.f32 %v852, %v865
        %v873 = vadd.f32 %v854, %v865
        %v874 = vadd.f32 %v856, %v870
        %v875 = vadd.f32 %v858, %v870
        %s876 = sld [smem:[#allocation2 + $0x4]]
        %vm877 = vcmp.ge.f32.partialorder %v872, 0.0
        %vm878 = vcmp.ge.f32.partialorder %v873, 0.0
        %vm879 = vcmp.ge.f32.partialorder %v874, 0.0
        %vm880 = vcmp.ge.f32.partialorder %v875, 0.0
        %v881 = vstv %s876
        %v882 = vmul.f32 %v881, %v872
        %v883 = vmul.f32 %v881, %v873
        %v884 = vmul.f32 %v881, %v874
        %v885 = vmul.f32 %v881, %v875
        %v886 = vsel %vm877, %v872, %v882
        %v887 = vsel %vm878, %v873, %v883
        %v888 = vsel %vm879, %v874, %v884
        %v889 = vsel %vm880, %v875, %v885
        %v890 = vld [vmem:[#allocation6 + $0x40] sm:$0xf]
        %v891 = vld [vmem:[#allocation6 + $0x44] sm:$0xf]
        %v892 = vld [vmem:[#allocation7 + $0x30] sm:$0xff]
        %v893 = vld [vmem:[#allocation7 + $0x38] sm:$0xff]
        %895 = vset.pattern.permute.xlu0 0
        %896 = vperm.xlu0 %895, %v892
        %v897 = vpop.permute.xlu0 %896
        %900 = vset.pattern.permute.xlu0 0
        %901 = vperm.xlu0 %900, %v893
        %v902 = vpop.permute.xlu0 %901
        %v906 = vunpack.c.l.b16 %v890
        %v907 = vunpack.c.l.b16 %v891
        %v908 = vpack.c.b16 %v907, %v906
        %v910 = vsel %vm302, %v908, 0
        %912 = vmatprep.subr.bf16.mxu0 %v601
        %913 = vmatpush1.bf16.msra.mxu0 %v598
        %914 = vmatprep.subr.bf16.mxu0 0
        %915 = vmatpush1.bf16.msra.mxu0 0
        %916 = vmatprep.subr.bf16.mxu0 0
        %917 = vmatpush1.bf16.msra.mxu0 0
        %918 = vmatprep.subr.bf16.mxu0 0
        %919 = vmatpush1.bf16.msra.mxu0 0
        %920 = vmatprep.subr.bf16.mxu0 0
        %921 = vmatpush1.bf16.msra.mxu0 0
        %922 = vmatprep.subr.bf16.mxu0 0
        %923 = vmatpush1.bf16.msra.mxu0 0
        %924 = vmatprep.subr.bf16.mxu0 0
        %925 = vmatpush1.bf16.msra.mxu0 0
        %926 = vmatprep.subr.bf16.mxu0 0
        %927 = vmatpush1.bf16.msra.mxu0 0
        %928 = vmatprep.subr.bf16.mxu0 0
        %929 = vmatpush1.bf16.msra.mxu0 0
        %930 = vmatprep.subr.bf16.mxu0 0
        %931 = vmatpush1.bf16.msra.mxu0 0
        %932 = vmatprep.subr.bf16.mxu0 0
        %933 = vmatpush1.bf16.msra.mxu0 0
        %934 = vmatprep.subr.bf16.mxu0 0
        %935 = vmatpush1.bf16.msra.mxu0 0
        %936 = vmatprep.subr.bf16.mxu0 0
        %937 = vmatpush1.bf16.msra.mxu0 0
        %938 = vmatprep.subr.bf16.mxu0 0
        %939 = vmatpush1.bf16.msra.mxu0 0
        %940 = vmatprep.subr.bf16.mxu0 0
        %941 = vmatpush1.bf16.msra.mxu0 0
        %942 = vmatprep.subr.bf16.mxu0 0
        %943 = vmatpush1.bf16.msra.mxu0 0
        %944 = vmatprep.mubr.bf16.mxu0 0
        %945 = vmatmul.mubr.bf16.gmra.mrb[0].mxu0 %v910
        %v946 = vpop.f32.mrb[0].mxu0
        %v947 = vadd.f32 %v897, %v946
        %v948 = vpop.f32.mrb[0].mxu0
        %v949 = vadd.f32 %v897, %v948
        %v950 = vpop.f32.mrb[0].mxu0
        %v951 = vadd.f32 %v902, %v950
        %v952 = vpop.f32.mrb[0].mxu0
        %v953 = vadd.f32 %v902, %v952
        %954 = vdwg.mxu0
        %v955 = vadd.f32 %v886, %v947
        %v956 = vadd.f32 %v887, %v949
        %v957 = vadd.f32 %v888, %v951
        %v958 = vadd.f32 %v889, %v953
        %s959 = sld [smem:[#allocation2 + $0x5]]
        %vm960 = vcmp.ge.f32.partialorder %v955, 0.0
        %vm961 = vcmp.ge.f32.partialorder %v956, 0.0
        %vm962 = vcmp.ge.f32.partialorder %v957, 0.0
        %vm963 = vcmp.ge.f32.partialorder %v958, 0.0
        %v964 = vstv %s959
        %v965 = vmul.f32 %v964, %v955
        %v966 = vmul.f32 %v964, %v956
        %v967 = vmul.f32 %v964, %v957
        %v968 = vmul.f32 %v964, %v958
        %v969 = vsel %vm960, %v955, %v965
        %v970 = vsel %vm961, %v956, %v966
        %v971 = vsel %vm962, %v957, %v967
        %v972 = vsel %vm963, %v958, %v968
        %vm973 = vcmp.ge.s32.totalorder %v268, 4
        %974 = vrot.lane.b32.xlu0 %v969, 4
        %v975 = vpop.permute.xlu0 %974
        %976 = vrot.lane.b32.xlu0 %v971, 4
        %v977 = vpop.permute.xlu0 %976
        %978 = vrot.lane.b32.xlu0 %v970, 4
        %v979 = vpop.permute.xlu0 %978
        %980 = vrot.lane.b32.xlu0 %v972, 4
        %v981 = vpop.permute.xlu0 %980
        %vm982 = vcmp.lt.s32.totalorder %v279, 4
        %v983 = vsel %vm982, %v975, %v979
        %v984 = vsel %vm982, %v977, %v981
        %v985 = vsel %vm982, %v979, %v975
        %v986 = vsel %vm982, %v981, %v977
        %v987 = vsel %vm973, 1, 0
        %v988 = vlaneseq
        %v989 = vshrl.u32 %v988, 7
        %v990 = vsub.s32 0, %v989
        %v991 = vrot.slane %v987, %v990
        %v992 = vlaneseq
        %v993 = vshrl.u32 %v992, 7
        %v994 = vsub.s32 1, %v993
        %v995 = vrot.slane %v987, %v994
        %vm996 = vcmp.eq.s32.totalorder %v991, 1
        %vm997 = vcmp.eq.s32.totalorder %v995, 1
        %v998 = vsel %vm996, %v985, 0.0
        %v999 = vsel %vm997, %v983, 0.0
        %v1000 = vsel %vm996, %v986, 0.0
        %v1001 = vsel %vm997, %v984, 0.0
        %v1002 = vld [vmem:[#allocation6 + $0x48] sm:$0xf]
        %v1003 = vpack.c.bf16 %v1000, %v998
        %v1004 = vpack.c.bf16 %v1001, %v999
        %v1005 = vld [vmem:[#allocation6 + $0x50] sm:$0xf]
        %v1006 = vpack.c.bf16 %v971, %v969
        %v1007 = vpack.c.bf16 %v972, %v970
        %v1009 = vsel %vm762, %v1005, 0
        %1011 = vmatprep.subr.bf16.mxu0 %v1007
        %1012 = vmatpush1.bf16.msra.mxu0 %v1006
        %1013 = vmatprep.subr.bf16.mxu0 0
        %1014 = vmatpush1.bf16.msra.mxu0 0
        %1015 = vmatprep.subr.bf16.mxu0 0
        %1016 = vmatpush1.bf16.msra.mxu0 0
        %1017 = vmatprep.subr.bf16.mxu0 0
        %1018 = vmatpush1.bf16.msra.mxu0 0
        %1019 = vmatprep.subr.bf16.mxu0 0
        %1020 = vmatpush1.bf16.msra.mxu0 0
        %1021 = vmatprep.subr.bf16.mxu0 0
        %1022 = vmatpush1.bf16.msra.mxu0 0
        %1023 = vmatprep.subr.bf16.mxu0 0
        %1024 = vmatpush1.bf16.msra.mxu0 0
        %1025 = vmatprep.subr.bf16.mxu0 0
        %1026 = vmatpush1.bf16.msra.mxu0 0
        %1027 = vmatprep.subr.bf16.mxu0 0
        %1028 = vmatpush1.bf16.msra.mxu0 0
        %1029 = vmatprep.subr.bf16.mxu0 0
        %1030 = vmatpush1.bf16.msra.mxu0 0
        %1031 = vmatprep.subr.bf16.mxu0 0
        %1032 = vmatpush1.bf16.msra.mxu0 0
        %1033 = vmatprep.subr.bf16.mxu0 0
        %1034 = vmatpush1.bf16.msra.mxu0 0
        %1035 = vmatprep.subr.bf16.mxu0 0
        %1036 = vmatpush1.bf16.msra.mxu0 0
        %1037 = vmatprep.subr.bf16.mxu0 0
        %1038 = vmatpush1.bf16.msra.mxu0 0
        %1039 = vmatprep.subr.bf16.mxu0 0
        %1040 = vmatpush1.bf16.msra.mxu0 0
        %1041 = vmatprep.subr.bf16.mxu0 0
        %1042 = vmatpush1.bf16.msra.mxu0 0
        %1043 = vmatprep.mubr.bf16.mxu0 0
        %1044 = vmatmul.mubr.bf16.gmra.mrb[0].mxu0 %v1009
        %v1045 = vpop.f32.mrb[0].mxu0
        %v1046 = vadd.f32 0.0, %v1045
        %v1047 = vpop.f32.mrb[0].mxu0
        %v1048 = vadd.f32 0.0, %v1047
        %v1049 = vpop.f32.mrb[0].mxu0
        %v1050 = vpop.f32.mrb[0].mxu0
        %1051 = vdwg.mxu0
        %v1053 = vsel %vm762, %v1002, 0
        %1055 = vmatprep.subr.bf16.mxu0 %v1004
        %1056 = vmatpush1.bf16.msra.mxu0 %v1003
        %1057 = vmatprep.subr.bf16.mxu0 0
        %1058 = vmatpush1.bf16.msra.mxu0 0
        %1059 = vmatprep.subr.bf16.mxu0 0
        %1060 = vmatpush1.bf16.msra.mxu0 0
        %1061 = vmatprep.subr.bf16.mxu0 0
        %1062 = vmatpush1.bf16.msra.mxu0 0
        %1063 = vmatprep.subr.bf16.mxu0 0
        %1064 = vmatpush1.bf16.msra.mxu0 0
        %1065 = vmatprep.subr.bf16.mxu0 0
        %1066 = vmatpush1.bf16.msra.mxu0 0
        %1067 = vmatprep.subr.bf16.mxu0 0
        %1068 = vmatpush1.bf16.msra.mxu0 0
        %1069 = vmatprep.subr.bf16.mxu0 0
        %1070 = vmatpush1.bf16.msra.mxu0 0
        %1071 = vmatprep.subr.bf16.mxu0 0
        %1072 = vmatpush1.bf16.msra.mxu0 0
        %1073 = vmatprep.subr.bf16.mxu0 0
        %1074 = vmatpush1.bf16.msra.mxu0 0
        %1075 = vmatprep.subr.bf16.mxu0 0
        %1076 = vmatpush1.bf16.msra.mxu0 0
        %1077 = vmatprep.subr.bf16.mxu0 0
        %1078 = vmatpush1.bf16.msra.mxu0 0
        %1079 = vmatprep.subr.bf16.mxu0 0
        %1080 = vmatpush1.bf16.msra.mxu0 0
        %1081 = vmatprep.subr.bf16.mxu0 0
        %1082 = vmatpush1.bf16.msra.mxu0 0
        %1083 = vmatprep.subr.bf16.mxu0 0
        %1084 = vmatpush1.bf16.msra.mxu0 0
        %1085 = vmatprep.subr.bf16.mxu0 0
        %1086 = vmatpush1.bf16.msra.mxu0 0
        %1087 = vmatprep.mubr.bf16.mxu0 0
        %1088 = vmatmul.mubr.bf16.gmra.mrb[0].mxu0 %v1053
        %v1089 = vpop.f32.mrb[0].mxu0
        %v1090 = vadd.f32 %v1046, %v1089
        %v1091 = vpop.f32.mrb[0].mxu0
        %v1092 = vadd.f32 %v1048, %v1091
        %v1093 = vpop.f32.mrb[0].mxu0
        %v1094 = vpop.f32.mrb[0].mxu0
        %1095 = vdwg.mxu0
        %v1096 = vld [vmem:[#allocation7 + $0x40] sm:$0xff]
        %1098 = vset.pattern.permute.xlu0 0
        %1099 = vperm.xlu0 %1098, %v1096
        %v1100 = vpop.permute.xlu0 %1099
        %v1102 = vadd.f32 %v1090, %v1100
        %v1103 = vadd.f32 %v1092, %v1100
        %s1104 = sld [smem:[#allocation2 + $0x6]]
        %vm1105 = vcmp.ge.f32.partialorder %v1102, 0.0
        %vm1106 = vcmp.ge.f32.partialorder %v1103, 0.0
        %v1107 = vstv %s1104
        %v1108 = vmul.f32 %v1107, %v1102
        %v1109 = vmul.f32 %v1107, %v1103
        %v1110 = vsel %vm1105, %v1102, %v1108
        %v1111 = vsel %vm1106, %v1103, %v1109
        %1112 = vrot.lane.b32.xlu0 %v1110, 4
        %v1113 = vpop.permute.xlu0 %1112
        %1114 = vrot.lane.b32.xlu0 %v1111, 4
        %v1115 = vpop.permute.xlu0 %1114
        %v1116 = vsel %vm982, %v1113, %v1115
        %v1117 = vsel %vm982, %v1115, %v1113
        %v1118 = vsel %vm996, %v1117, 0.0
        %v1119 = vsel %vm997, %v1116, 0.0
        %v1120 = vld [vmem:[#allocation6 + $0x58] sm:$0xf]
        %v1121 = vpack.c.bf16 %v1118, %v1118
        %v1122 = vpack.c.bf16 %v1119, %v1119
        %v1123 = vld [vmem:[#allocation6 + $0x60] sm:$0xf]
        %v1124 = vpack.c.bf16 %v1110, %v1110
        %v1125 = vpack.c.bf16 %v1111, %v1111
        %v1127 = vsel %vm302, %v1123, 0
        %v1130 = vsel %vm306, %v1124, 0
        %v1133 = vsel %vm306, %v1125, 0
        %1135 = vmatprep.subr.bf16.mxu0 %v1133
        %1136 = vmatpush1.bf16.msra.mxu0 %v1130
        %1137 = vmatprep.subr.bf16.mxu0 0
        %1138 = vmatpush1.bf16.msra.mxu0 0
        %1139 = vmatprep.subr.bf16.mxu0 0
        %1140 = vmatpush1.bf16.msra.mxu0 0
        %1141 = vmatprep.subr.bf16.mxu0 0
        %1142 = vmatpush1.bf16.msra.mxu0 0
        %1143 = vmatprep.subr.bf16.mxu0 0
        %1144 = vmatpush1.bf16.msra.mxu0 0
        %1145 = vmatprep.subr.bf16.mxu0 0
        %1146 = vmatpush1.bf16.msra.mxu0 0
        %1147 = vmatprep.subr.bf16.mxu0 0
        %1148 = vmatpush1.bf16.msra.mxu0 0
        %1149 = vmatprep.subr.bf16.mxu0 0
        %1150 = vmatpush1.bf16.msra.mxu0 0
        %1151 = vmatprep.subr.bf16.mxu0 0
        %1152 = vmatpush1.bf16.msra.mxu0 0
        %1153 = vmatprep.subr.bf16.mxu0 0
        %1154 = vmatpush1.bf16.msra.mxu0 0
        %1155 = vmatprep.subr.bf16.mxu0 0
        %1156 = vmatpush1.bf16.msra.mxu0 0
        %1157 = vmatprep.subr.bf16.mxu0 0
        %1158 = vmatpush1.bf16.msra.mxu0 0
        %1159 = vmatprep.subr.bf16.mxu0 0
        %1160 = vmatpush1.bf16.msra.mxu0 0
        %1161 = vmatprep.subr.bf16.mxu0 0
        %1162 = vmatpush1.bf16.msra.mxu0 0
        %1163 = vmatprep.subr.bf16.mxu0 0
        %1164 = vmatpush1.bf16.msra.mxu0 0
        %1165 = vmatprep.subr.bf16.mxu0 0
        %1166 = vmatpush1.bf16.msra.mxu0 0
        %1167 = vmatprep.mubr.bf16.mxu0 0
        %1168 = vmatmul.mubr.bf16.gmra.mrb[0].mxu0 %v1127
        %v1169 = vpop.f32.mrb[0].mxu0
        %v1170 = vadd.f32 0.0, %v1169
        %v1171 = vpop.f32.mrb[0].mxu0
        %v1172 = vadd.f32 0.0, %v1171
        %v1173 = vpop.f32.mrb[0].mxu0
        %v1174 = vpop.f32.mrb[0].mxu0
        %1175 = vdwg.mxu0
        %v1177 = vsel %vm302, %v1120, 0
        %v1180 = vsel %vm306, %v1121, 0
        %v1183 = vsel %vm306, %v1122, 0
        %1185 = vmatprep.subr.bf16.mxu0 %v1183
        %1186 = vmatpush1.bf16.msra.mxu0 %v1180
        %1187 = vmatprep.subr.bf16.mxu0 0
        %1188 = vmatpush1.bf16.msra.mxu0 0
        %1189 = vmatprep.subr.bf16.mxu0 0
        %1190 = vmatpush1.bf16.msra.mxu0 0
        %1191 = vmatprep.subr.bf16.mxu0 0
        %1192 = vmatpush1.bf16.msra.mxu0 0
        %1193 = vmatprep.subr.bf16.mxu0 0
        %1194 = vmatpush1.bf16.msra.mxu0 0
        %1195 = vmatprep.subr.bf16.mxu0 0
        %1196 = vmatpush1.bf16.msra.mxu0 0
        %1197 = vmatprep.subr.bf16.mxu0 0
        %1198 = vmatpush1.bf16.msra.mxu0 0
        %1199 = vmatprep.subr.bf16.mxu0 0
        %1200 = vmatpush1.bf16.msra.mxu0 0
        %1201 = vmatprep.subr.bf16.mxu0 0
        %1202 = vmatpush1.bf16.msra.mxu0 0
        %1203 = vmatprep.subr.bf16.mxu0 0
        %1204 = vmatpush1.bf16.msra.mxu0 0
        %1205 = vmatprep.subr.bf16.mxu0 0
        %1206 = vmatpush1.bf16.msra.mxu0 0
        %1207 = vmatprep.subr.bf16.mxu0 0
        %1208 = vmatpush1.bf16.msra.mxu0 0
        %1209 = vmatprep.subr.bf16.mxu0 0
        %1210 = vmatpush1.bf16.msra.mxu0 0
        %1211 = vmatprep.subr.bf16.mxu0 0
        %1212 = vmatpush1.bf16.msra.mxu0 0
        %1213 = vmatprep.subr.bf16.mxu0 0
        %1214 = vmatpush1.bf16.msra.mxu0 0
        %1215 = vmatprep.subr.bf16.mxu0 0
        %1216 = vmatpush1.bf16.msra.mxu0 0
        %1217 = vmatprep.mubr.bf16.mxu0 0
        %1218 = vmatmul.mubr.bf16.gmra.mrb[0].mxu0 %v1177
        %v1219 = vpop.f32.mrb[0].mxu0
        %v1220 = vadd.f32 %v1170, %v1219
        %v1221 = vpop.f32.mrb[0].mxu0
        %v1222 = vadd.f32 %v1172, %v1221
        %v1223 = vpop.f32.mrb[0].mxu0
        %v1224 = vpop.f32.mrb[0].mxu0
        %1225 = vdwg.mxu0
        %v1226 = vld [vmem:[#allocation7 + $0x48] sm:$0xff]
        %1228 = vset.pattern.permute.xlu0 0
        %1229 = vperm.xlu0 %1228, %v1226
        %v1230 = vpop.permute.xlu0 %1229
        %v1232 = vadd.f32 %v1220, %v1230
        %v1233 = vadd.f32 %v1222, %v1230
        %s1234 = sld [smem:[#allocation2 + $0x7]]
        %vm1235 = vcmp.ge.f32.partialorder %v1232, 0.0
        %vm1236 = vcmp.ge.f32.partialorder %v1233, 0.0
        %v1237 = vstv %s1234
        %v1238 = vmul.f32 %v1237, %v1232
        %v1239 = vmul.f32 %v1237, %v1233
        %v1240 = vsel %vm1235, %v1232, %v1238
        %v1241 = vsel %vm1236, %v1233, %v1239
        %v1242 = vld [vmem:[#allocation6 + $0x68] sm:$0xf]
        %v1243 = vld [vmem:[#allocation7 + $0x50] sm:$0xff]
        %1245 = vset.pattern.permute.xlu0 0
        %1246 = vperm.xlu0 %1245, %v1243
        %v1247 = vpop.permute.xlu0 %1246
        %v1250 = vsel %vm762, %v1242, 0
        %1252 = vmatprep.subr.bf16.mxu0 %v1007
        %1253 = vmatpush1.bf16.msra.mxu0 %v1006
        %1254 = vmatprep.subr.bf16.mxu0 0
        %1255 = vmatpush1.bf16.msra.mxu0 0
        %1256 = vmatprep.subr.bf16.mxu0 0
        %1257 = vmatpush1.bf16.msra.mxu0 0
        %1258 = vmatprep.subr.bf16.mxu0 0
        %1259 = vmatpush1.bf16.msra.mxu0 0
        %1260 = vmatprep.subr.bf16.mxu0 0
        %1261 = vmatpush1.bf16.msra.mxu0 0
        %1262 = vmatprep.subr.bf16.mxu0 0
        %1263 = vmatpush1.bf16.msra.mxu0 0
        %1264 = vmatprep.subr.bf16.mxu0 0
        %1265 = vmatpush1.bf16.msra.mxu0 0
        %1266 = vmatprep.subr.bf16.mxu0 0
        %1267 = vmatpush1.bf16.msra.mxu0 0
        %1268 = vmatprep.subr.bf16.mxu0 0
        %1269 = vmatpush1.bf16.msra.mxu0 0
        %1270 = vmatprep.subr.bf16.mxu0 0
        %1271 = vmatpush1.bf16.msra.mxu0 0
        %1272 = vmatprep.subr.bf16.mxu0 0
        %1273 = vmatpush1.bf16.msra.mxu0 0
        %1274 = vmatprep.subr.bf16.mxu0 0
        %1275 = vmatpush1.bf16.msra.mxu0 0
        %1276 = vmatprep.subr.bf16.mxu0 0
        %1277 = vmatpush1.bf16.msra.mxu0 0
        %1278 = vmatprep.subr.bf16.mxu0 0
        %1279 = vmatpush1.bf16.msra.mxu0 0
        %1280 = vmatprep.subr.bf16.mxu0 0
        %1281 = vmatpush1.bf16.msra.mxu0 0
        %1282 = vmatprep.subr.bf16.mxu0 0
        %1283 = vmatpush1.bf16.msra.mxu0 0
        %1284 = vmatprep.mubr.bf16.mxu0 0
        %1285 = vmatmul.mubr.bf16.gmra.mrb[0].mxu0 %v1250
        %v1286 = vpop.f32.mrb[0].mxu0
        %v1287 = vadd.f32 %v1247, %v1286
        %v1288 = vpop.f32.mrb[0].mxu0
        %v1289 = vadd.f32 %v1247, %v1288
        %v1290 = vpop.f32.mrb[0].mxu0
        %v1291 = vpop.f32.mrb[0].mxu0
        %1292 = vdwg.mxu0
        %v1293 = vadd.f32 %v1240, %v1287
        %v1294 = vadd.f32 %v1241, %v1289
        %s1295 = sld [smem:[#allocation2 + $0x8]]
        %vm1296 = vcmp.ge.f32.partialorder %v1293, 0.0
        %vm1297 = vcmp.ge.f32.partialorder %v1294, 0.0
        %v1298 = vstv %s1295
        %v1299 = vmul.f32 %v1298, %v1293
        %v1300 = vmul.f32 %v1298, %v1294
        %v1301 = vsel %vm1296, %v1293, %v1299
        %v1302 = vsel %vm1297, %v1294, %v1300
        %vm1303 = vcmp.eq.s32.totalorder %v270, 0
        %v1304 = vsel %vm1303, 1, 0
        %v1305 = vlaneseq
        %v1306 = vshrl.u32 %v1305, 7
        %v1307 = vsub.s32 0, %v1306
        %v1308 = vrot.slane %v1304, %v1307
        %v1309 = vlaneseq
        %v1310 = vshrl.u32 %v1309, 7
        %v1311 = vsub.s32 1, %v1310
        %v1312 = vrot.slane %v1304, %v1311
        %vm1313 = vcmp.eq.s32.totalorder %v1308, 1
        %vm1314 = vcmp.eq.s32.totalorder %v1312, 1
        %v1315 = vsel %vm1313, %v1301, 0.0
        %v1316 = vsel %vm1314, %v1302, 0.0
        %v1317 = vadd.f32 %v1315, %v1316
        %1318 = vadd.xlane.f32.xlu0 %v1317
        %v1319 = vpop.xlane.xlu0 %1318
        %v1320 = vmul.f32 %v1319, 0.0078125
        %v1321 = vsub.f32 %v1301, %v1320
        %v1322 = vsub.f32 %v1302, %v1320
        %v1323 = vsel %vm1313, %v1321, 0.0
        %v1324 = vsel %vm1314, %v1322, 0.0
        %v1325 = vmul.f32 %v1323, %v1323
        %v1326 = vmul.f32 %v1324, %v1324
        %v1327 = vadd.f32 %v1325, %v1326
        %1328 = vadd.xlane.f32.xlu0 %v1327
        %v1329 = vpop.xlane.xlu0 %1328
        %v1330 = vmul.f32 %v1329, 0.0078125
        %v1331 = vadd.f32 %v1330, 1e-05
        %v1332 = vrsqrt.pop %v1331
        %v1333 = vmul.f32 %v1323, %v1332
        %v1334 = vmul.f32 %v1324, %v1332
        %v1335 = vadd.f32 %v1333, 0.0
        %v1336 = vadd.f32 %v1334, 0.0
        %vm1337 = vcmp.eq.s32.totalorder %v270, 1
        %v1338 = vsel %vm1337, 1, 0
        %v1339 = vlaneseq
        %v1340 = vshrl.u32 %v1339, 7
        %v1341 = vsub.s32 0, %v1340
        %v1342 = vrot.slane %v1338, %v1341
        %v1343 = vlaneseq
        %v1344 = vshrl.u32 %v1343, 7
        %v1345 = vsub.s32 1, %v1344
        %v1346 = vrot.slane %v1338, %v1345
        %vm1347 = vcmp.eq.s32.totalorder %v1342, 1
        %vm1348 = vcmp.eq.s32.totalorder %v1346, 1
        %v1349 = vsel %vm1347, %v1301, 0.0
        %v1350 = vsel %vm1348, %v1302, 0.0
        %v1351 = vadd.f32 %v1349, %v1350
        %1352 = vadd.xlane.f32.xlu0 %v1351
        %v1353 = vpop.xlane.xlu0 %1352
        %v1354 = vmul.f32 %v1353, 0.0078125
        %v1355 = vsub.f32 %v1301, %v1354
        %v1356 = vsub.f32 %v1302, %v1354
        %v1357 = vsel %vm1347, %v1355, 0.0
        %v1358 = vsel %vm1348, %v1356, 0.0
        %v1359 = vmul.f32 %v1357, %v1357
        %v1360 = vmul.f32 %v1358, %v1358
        %v1361 = vadd.f32 %v1359, %v1360
        %1362 = vadd.xlane.f32.xlu0 %v1361
        %v1363 = vpop.xlane.xlu0 %1362
        %v1364 = vmul.f32 %v1363, 0.0078125
        %v1365 = vadd.f32 %v1364, 1e-05
        %v1366 = vrsqrt.pop %v1365
        %v1367 = vmul.f32 %v1357, %v1366
        %v1368 = vmul.f32 %v1358, %v1366
        %v1369 = vadd.f32 %v1335, %v1367
        %v1370 = vadd.f32 %v1336, %v1368
        %v1371 = vld [vmem:[#allocation7 + $0x58] sm:$0xff]
        %1373 = vset.pattern.permute.xlu0 0
        %1374 = vperm.xlu0 %1373, %v1371
        %v1375 = vpop.permute.xlu0 %1374
        %v1377 = vmul.f32 %v1369, %v1375
        %v1378 = vmul.f32 %v1370, %v1375
        %v1379 = vld [vmem:[#allocation7 + $0x60] sm:$0xff]
        %1381 = vset.pattern.permute.xlu0 0
        %1382 = vperm.xlu0 %1381, %v1379
        %v1383 = vpop.permute.xlu0 %1382
        %v1385 = vadd.f32 %v1377, %v1383
        %v1386 = vadd.f32 %v1378, %v1383
        %1387 = vrot.lane.b32.xlu0 %v1385, 1
        %v1388 = vpop.permute.xlu0 %1387
        %1389 = vrot.lane.b32.xlu0 %v1386, 1
        %v1390 = vpop.permute.xlu0 %1389
        %v1391 = vsel %vm280, %v1388, %v1390
        %v1392 = vsel %vm280, %v1390, %v1388
        %v1393 = vsel %vm292, %v1392, 0.0
        %v1394 = vsel %vm293, %v1391, 0.0
        %v1395 = vld [vmem:[#allocation6 + $0x70] sm:$0xf]
        %v1396 = vpack.c.bf16 %v1393, %v1393
        %v1397 = vpack.c.bf16 %v1394, %v1394
        %v1398 = vld [vmem:[#allocation6 + $0x78] sm:$0xf]
        %v1399 = vpack.c.bf16 %v1385, %v1385
        %v1400 = vpack.c.bf16 %v1386, %v1386
        %v1402 = vsel %vm302, %v1398, 0
        %v1405 = vsel %vm306, %v1399, 0
        %v1408 = vsel %vm306, %v1400, 0
        %1410 = vmatprep.subr.bf16.mxu0 %v1408
        %1411 = vmatpush1.bf16.msra.mxu0 %v1405
        %1412 = vmatprep.subr.bf16.mxu0 0
        %1413 = vmatpush1.bf16.msra.mxu0 0
        %1414 = vmatprep.subr.bf16.mxu0 0
        %1415 = vmatpush1.bf16.msra.mxu0 0
        %1416 = vmatprep.subr.bf16.mxu0 0
        %1417 = vmatpush1.bf16.msra.mxu0 0
        %1418 = vmatprep.subr.bf16.mxu0 0
        %1419 = vmatpush1.bf16.msra.mxu0 0
        %1420 = vmatprep.subr.bf16.mxu0 0
        %1421 = vmatpush1.bf16.msra.mxu0 0
        %1422 = vmatprep.subr.bf16.mxu0 0
        %1423 = vmatpush1.bf16.msra.mxu0 0
        %1424 = vmatprep.subr.bf16.mxu0 0
        %1425 = vmatpush1.bf16.msra.mxu0 0
        %1426 = vmatprep.subr.bf16.mxu0 0
        %1427 = vmatpush1.bf16.msra.mxu0 0
        %1428 = vmatprep.subr.bf16.mxu0 0
        %1429 = vmatpush1.bf16.msra.mxu0 0
        %1430 = vmatprep.subr.bf16.mxu0 0
        %1431 = vmatpush1.bf16.msra.mxu0 0
        %1432 = vmatprep.subr.bf16.mxu0 0
        %1433 = vmatpush1.bf16.msra.mxu0 0
        %1434 = vmatprep.subr.bf16.mxu0 0
        %1435 = vmatpush1.bf16.msra.mxu0 0
        %1436 = vmatprep.subr.bf16.mxu0 0
        %1437 = vmatpush1.bf16.msra.mxu0 0
        %1438 = vmatprep.subr.bf16.mxu0 0
        %1439 = vmatpush1.bf16.msra.mxu0 0
        %1440 = vmatprep.subr.bf16.mxu0 0
        %1441 = vmatpush1.bf16.msra.mxu0 0
        %1442 = vmatprep.mubr.bf16.mxu0 0
        %1443 = vmatmul.mubr.bf16.gmra.mrb[0].mxu0 %v1402
        %v1444 = vpop.f32.mrb[0].mxu0
        %v1445 = vadd.f32 0.0, %v1444
        %v1446 = vpop.f32.mrb[0].mxu0
        %v1447 = vadd.f32 0.0, %v1446
        %v1448 = vpop.f32.mrb[0].mxu0
        %v1449 = vpop.f32.mrb[0].mxu0
        %1450 = vdwg.mxu0
        %v1452 = vsel %vm302, %v1395, 0
        %v1455 = vsel %vm306, %v1396, 0
        %v1458 = vsel %vm306, %v1397, 0
        %1460 = vmatprep.subr.bf16.mxu0 %v1458
        %1461 = vmatpush1.bf16.msra.mxu0 %v1455
        %1462 = vmatprep.subr.bf16.mxu0 0
        %1463 = vmatpush1.bf16.msra.mxu0 0
        %1464 = vmatprep.subr.bf16.mxu0 0
        %1465 = vmatpush1.bf16.msra.mxu0 0
        %1466 = vmatprep.subr.bf16.mxu0 0
        %1467 = vmatpush1.bf16.msra.mxu0 0
        %1468 = vmatprep.subr.bf16.mxu0 0
        %1469 = vmatpush1.bf16.msra.mxu0 0
        %1470 = vmatprep.subr.bf16.mxu0 0
        %1471 = vmatpush1.bf16.msra.mxu0 0
        %1472 = vmatprep.subr.bf16.mxu0 0
        %1473 = vmatpush1.bf16.msra.mxu0 0
        %1474 = vmatprep.subr.bf16.mxu0 0
        %1475 = vmatpush1.bf16.msra.mxu0 0
        %1476 = vmatprep.subr.bf16.mxu0 0
        %1477 = vmatpush1.bf16.msra.mxu0 0
        %1478 = vmatprep.subr.bf16.mxu0 0
        %1479 = vmatpush1.bf16.msra.mxu0 0
        %1480 = vmatprep.subr.bf16.mxu0 0
        %1481 = vmatpush1.bf16.msra.mxu0 0
        %1482 = vmatprep.subr.bf16.mxu0 0
        %1483 = vmatpush1.bf16.msra.mxu0 0
        %1484 = vmatprep.subr.bf16.mxu0 0
        %1485 = vmatpush1.bf16.msra.mxu0 0
        %1486 = vmatprep.subr.bf16.mxu0 0
        %1487 = vmatpush1.bf16.msra.mxu0 0
        %1488 = vmatprep.subr.bf16.mxu0 0
        %1489 = vmatpush1.bf16.msra.mxu0 0
        %1490 = vmatprep.subr.bf16.mxu0 0
        %1491 = vmatpush1.bf16.msra.mxu0 0
        %1492 = vmatprep.mubr.bf16.mxu0 0
        %1493 = vmatmul.mubr.bf16.gmra.mrb[0].mxu0 %v1452
        %v1494 = vpop.f32.mrb[0].mxu0
        %v1495 = vadd.f32 %v1445, %v1494
        %v1496 = vpop.f32.mrb[0].mxu0
        %v1497 = vadd.f32 %v1447, %v1496
        %v1498 = vpop.f32.mrb[0].mxu0
        %v1499 = vpop.f32.mrb[0].mxu0
        %1500 = vdwg.mxu0
        %v1501 = vld [vmem:[#allocation7 + $0x68] sm:$0xff]
        %1503 = vset.pattern.permute.xlu0 0
        %1504 = vperm.xlu0 %1503, %v1501
        %v1505 = vpop.permute.xlu0 %1504
        %v1507 = vadd.f32 %v1495, %v1505
        %v1508 = vadd.f32 %v1497, %v1505
        %s1509 = sld [smem:[#allocation2 + $0x9]]
        %vm1510 = vcmp.ge.f32.partialorder %v1507, 0.0
        %vm1511 = vcmp.ge.f32.partialorder %v1508, 0.0
        %v1512 = vstv %s1509
        %v1513 = vmul.f32 %v1512, %v1507
        %v1514 = vmul.f32 %v1512, %v1508
        %v1515 = vsel %vm1510, %v1507, %v1513
        %v1516 = vsel %vm1511, %v1508, %v1514
        %1517 = vrot.lane.b32.xlu0 %v1515, 1
        %v1518 = vpop.permute.xlu0 %1517
        %1519 = vrot.lane.b32.xlu0 %v1516, 1
        %v1520 = vpop.permute.xlu0 %1519
        %v1521 = vsel %vm280, %v1518, %v1520
        %v1522 = vsel %vm280, %v1520, %v1518
        %v1523 = vsel %vm292, %v1522, 0.0
        %v1524 = vsel %vm293, %v1521, 0.0
        %v1525 = vld [vmem:[#allocation6 + $0x80] sm:$0xf]
        %v1526 = vpack.c.bf16 %v1523, %v1523
        %v1527 = vpack.c.bf16 %v1524, %v1524
        %v1528 = vld [vmem:[#allocation6 + $0x88] sm:$0xf]
        %v1529 = vpack.c.bf16 %v1515, %v1515
        %v1530 = vpack.c.bf16 %v1516, %v1516
        %v1532 = vsel %vm302, %v1528, 0
        %v1535 = vsel %vm306, %v1529, 0
        %v1538 = vsel %vm306, %v1530, 0
        %1540 = vmatprep.subr.bf16.mxu0 %v1538
        %1541 = vmatpush1.bf16.msra.mxu0 %v1535
        %1542 = vmatprep.subr.bf16.mxu0 0
        %1543 = vmatpush1.bf16.msra.mxu0 0
        %1544 = vmatprep.subr.bf16.mxu0 0
        %1545 = vmatpush1.bf16.msra.mxu0 0
        %1546 = vmatprep.subr.bf16.mxu0 0
        %1547 = vmatpush1.bf16.msra.mxu0 0
        %1548 = vmatprep.subr.bf16.mxu0 0
        %1549 = vmatpush1.bf16.msra.mxu0 0
        %1550 = vmatprep.subr.bf16.mxu0 0
        %1551 = vmatpush1.bf16.msra.mxu0 0
        %1552 = vmatprep.subr.bf16.mxu0 0
        %1553 = vmatpush1.bf16.msra.mxu0 0
        %1554 = vmatprep.subr.bf16.mxu0 0
        %1555 = vmatpush1.bf16.msra.mxu0 0
        %1556 = vmatprep.subr.bf16.mxu0 0
        %1557 = vmatpush1.bf16.msra.mxu0 0
        %1558 = vmatprep.subr.bf16.mxu0 0
        %1559 = vmatpush1.bf16.msra.mxu0 0
        %1560 = vmatprep.subr.bf16.mxu0 0
        %1561 = vmatpush1.bf16.msra.mxu0 0
        %1562 = vmatprep.subr.bf16.mxu0 0
        %1563 = vmatpush1.bf16.msra.mxu0 0
        %1564 = vmatprep.subr.bf16.mxu0 0
        %1565 = vmatpush1.bf16.msra.mxu0 0
        %1566 = vmatprep.subr.bf16.mxu0 0
        %1567 = vmatpush1.bf16.msra.mxu0 0
        %1568 = vmatprep.subr.bf16.mxu0 0
        %1569 = vmatpush1.bf16.msra.mxu0 0
        %1570 = vmatprep.subr.bf16.mxu0 0
        %1571 = vmatpush1.bf16.msra.mxu0 0
        %1572 = vmatprep.mubr.bf16.mxu0 0
        %1573 = vmatmul.mubr.bf16.gmra.mrb[0].mxu0 %v1532
        %v1574 = vpop.f32.mrb[0].mxu0
        %v1575 = vadd.f32 0.0, %v1574
        %v1576 = vpop.f32.mrb[0].mxu0
        %v1577 = vadd.f32 0.0, %v1576
        %v1578 = vpop.f32.mrb[0].mxu0
        %v1579 = vpop.f32.mrb[0].mxu0
        %1580 = vdwg.mxu0
        %v1582 = vsel %vm302, %v1525, 0
        %v1585 = vsel %vm306, %v1526, 0
        %v1588 = vsel %vm306, %v1527, 0
        %1590 = vmatprep.subr.bf16.mxu0 %v1588
        %1591 = vmatpush1.bf16.msra.mxu0 %v1585
        %1592 = vmatprep.subr.bf16.mxu0 0
        %1593 = vmatpush1.bf16.msra.mxu0 0
        %1594 = vmatprep.subr.bf16.mxu0 0
        %1595 = vmatpush1.bf16.msra.mxu0 0
        %1596 = vmatprep.subr.bf16.mxu0 0
        %1597 = vmatpush1.bf16.msra.mxu0 0
        %1598 = vmatprep.subr.bf16.mxu0 0
        %1599 = vmatpush1.bf16.msra.mxu0 0
        %1600 = vmatprep.subr.bf16.mxu0 0
        %1601 = vmatpush1.bf16.msra.mxu0 0
        %1602 = vmatprep.subr.bf16.mxu0 0
        %1603 = vmatpush1.bf16.msra.mxu0 0
        %1604 = vmatprep.subr.bf16.mxu0 0
        %1605 = vmatpush1.bf16.msra.mxu0 0
        %1606 = vmatprep.subr.bf16.mxu0 0
        %1607 = vmatpush1.bf16.msra.mxu0 0
        %1608 = vmatprep.subr.bf16.mxu0 0
        %1609 = vmatpush1.bf16.msra.mxu0 0
        %1610 = vmatprep.subr.bf16.mxu0 0
        %1611 = vmatpush1.bf16.msra.mxu0 0
        %1612 = vmatprep.subr.bf16.mxu0 0
        %1613 = vmatpush1.bf16.msra.mxu0 0
        %1614 = vmatprep.subr.bf16.mxu0 0
        %1615 = vmatpush1.bf16.msra.mxu0 0
        %1616 = vmatprep.subr.bf16.mxu0 0
        %1617 = vmatpush1.bf16.msra.mxu0 0
        %1618 = vmatprep.subr.bf16.mxu0 0
        %1619 = vmatpush1.bf16.msra.mxu0 0
        %1620 = vmatprep.subr.bf16.mxu0 0
        %1621 = vmatpush1.bf16.msra.mxu0 0
        %1622 = vmatprep.mubr.bf16.mxu0 0
        %1623 = vmatmul.mubr.bf16.gmra.mrb[0].mxu0 %v1582
        %v1624 = vpop.f32.mrb[0].mxu0
        %v1625 = vadd.f32 %v1575, %v1624
        %v1626 = vpop.f32.mrb[0].mxu0
        %v1627 = vadd.f32 %v1577, %v1626
        %v1628 = vpop.f32.mrb[0].mxu0
        %v1629 = vpop.f32.mrb[0].mxu0
        %1630 = vdwg.mxu0
        %v1631 = vld [vmem:[#allocation7 + $0x70] sm:$0xff]
        %1633 = vset.pattern.permute.xlu0 0
        %1634 = vperm.xlu0 %1633, %v1631
        %v1635 = vpop.permute.xlu0 %1634
        %v1637 = vadd.f32 %v1625, %v1635
        %v1638 = vadd.f32 %v1627, %v1635
        %s1639 = sld [smem:[#allocation2 + $0xa]]
        %vm1640 = vcmp.ge.f32.partialorder %v1637, 0.0
        %vm1641 = vcmp.ge.f32.partialorder %v1638, 0.0
        %v1642 = vstv %s1639
        %v1643 = vmul.f32 %v1642, %v1637
        %v1644 = vmul.f32 %v1642, %v1638
        %v1645 = vsel %vm1640, %v1637, %v1643
        %v1646 = vsel %vm1641, %v1638, %v1644
        %v1647 = vadd.f32 %v1645, %v1385
        %v1648 = vadd.f32 %v1646, %v1386
        %s1649 = sld [smem:[#allocation2 + $0xb]]
        %vm1650 = vcmp.ge.f32.partialorder %v1647, 0.0
        %vm1651 = vcmp.ge.f32.partialorder %v1648, 0.0
        %v1652 = vstv %s1649
        %v1653 = vmul.f32 %v1652, %v1647
        %v1654 = vmul.f32 %v1652, %v1648
        %v1655 = vsel %vm1650, %v1647, %v1653
        %v1656 = vsel %vm1651, %v1648, %v1654
        %1657 = vrot.lane.b32.xlu0 %v1655, 2
        %v1658 = vpop.permute.xlu0 %1657
        %1659 = vrot.lane.b32.xlu0 %v1656, 2
        %v1660 = vpop.permute.xlu0 %1659
        %v1661 = vsel %vm565, %v1658, %v1660
        %v1662 = vsel %vm565, %v1660, %v1658
        %v1663 = vsel %vm577, %v1662, 0.0
        %v1664 = vsel %vm578, %v1661, 0.0
        %v1665 = vld [vmem:[#allocation6 + $0x90] sm:$0xf]
        %v1666 = vld [vmem:[#allocation6 + $0x94] sm:$0xf]
        %v1667 = vpack.c.bf16 %v1663, %v1663
        %v1668 = vpack.c.bf16 %v1664, %v1664
        %v1669 = vld [vmem:[#allocation6 + $0x98] sm:$0xf]
        %v1670 = vld [vmem:[#allocation6 + $0x9c] sm:$0xf]
        %v1671 = vpack.c.bf16 %v1655, %v1655
        %v1672 = vpack.c.bf16 %v1656, %v1656
        %v1675 = vunpack.c.l.b16 %v1669
        %v1676 = vunpack.c.l.b16 %v1670
        %v1677 = vpack.c.b16 %v1676, %v1675
        %v1679 = vsel %vm302, %v1677, 0
        %v1682 = vsel %vm306, %v1671, 0
        %v1685 = vsel %vm306, %v1672, 0
        %1687 = vmatprep.subr.bf16.mxu0 %v1685
        %1688 = vmatpush1.bf16.msra.mxu0 %v1682
        %1689 = vmatprep.subr.bf16.mxu0 0
        %1690 = vmatpush1.bf16.msra.mxu0 0
        %1691 = vmatprep.subr.bf16.mxu0 0
        %1692 = vmatpush1.bf16.msra.mxu0 0
        %1693 = vmatprep.subr.bf16.mxu0 0
        %1694 = vmatpush1.bf16.msra.mxu0 0
        %1695 = vmatprep.subr.bf16.mxu0 0
        %1696 = vmatpush1.bf16.msra.mxu0 0
        %1697 = vmatprep.subr.bf16.mxu0 0
        %1698 = vmatpush1.bf16.msra.mxu0 0
        %1699 = vmatprep.subr.bf16.mxu0 0
        %1700 = vmatpush1.bf16.msra.mxu0 0
        %1701 = vmatprep.subr.bf16.mxu0 0
        %1702 = vmatpush1.bf16.msra.mxu0 0
        %1703 = vmatprep.subr.bf16.mxu0 0
        %1704 = vmatpush1.bf16.msra.mxu0 0
        %1705 = vmatprep.subr.bf16.mxu0 0
        %1706 = vmatpush1.bf16.msra.mxu0 0
        %1707 = vmatprep.subr.bf16.mxu0 0
        %1708 = vmatpush1.bf16.msra.mxu0 0
        %1709 = vmatprep.subr.bf16.mxu0 0
        %1710 = vmatpush1.bf16.msra.mxu0 0
        %1711 = vmatprep.subr.bf16.mxu0 0
        %1712 = vmatpush1.bf16.msra.mxu0 0
        %1713 = vmatprep.subr.bf16.mxu0 0
        %1714 = vmatpush1.bf16.msra.mxu0 0
        %1715 = vmatprep.subr.bf16.mxu0 0
        %1716 = vmatpush1.bf16.msra.mxu0 0
        %1717 = vmatprep.subr.bf16.mxu0 0
        %1718 = vmatpush1.bf16.msra.mxu0 0
        %1719 = vmatprep.mubr.bf16.mxu0 0
        %1720 = vmatmul.mubr.bf16.gmra.mrb[0].mxu0 %v1679
        %v1721 = vpop.f32.mrb[0].mxu0
        %v1722 = vadd.f32 0.0, %v1721
        %v1723 = vpop.f32.mrb[0].mxu0
        %v1724 = vadd.f32 0.0, %v1723
        %v1725 = vpop.f32.mrb[0].mxu0
        %v1726 = vadd.f32 0.0, %v1725
        %v1727 = vpop.f32.mrb[0].mxu0
        %v1728 = vadd.f32 0.0, %v1727
        %1729 = vdwg.mxu0
        %v1732 = vunpack.c.l.b16 %v1665
        %v1733 = vunpack.c.l.b16 %v1666
        %v1734 = vpack.c.b16 %v1733, %v1732
        %v1736 = vsel %vm302, %v1734, 0
        %v1739 = vsel %vm306, %v1667, 0
        %v1742 = vsel %vm306, %v1668, 0
        %1744 = vmatprep.subr.bf16.mxu0 %v1742
        %1745 = vmatpush1.bf16.msra.mxu0 %v1739
        %1746 = vmatprep.subr.bf16.mxu0 0
        %1747 = vmatpush1.bf16.msra.mxu0 0
        %1748 = vmatprep.subr.bf16.mxu0 0
        %1749 = vmatpush1.bf16.msra.mxu0 0
        %1750 = vmatprep.subr.bf16.mxu0 0
        %1751 = vmatpush1.bf16.msra.mxu0 0
        %1752 = vmatprep.subr.bf16.mxu0 0
        %1753 = vmatpush1.bf16.msra.mxu0 0
        %1754 = vmatprep.subr.bf16.mxu0 0
        %1755 = vmatpush1.bf16.msra.mxu0 0
        %1756 = vmatprep.subr.bf16.mxu0 0
        %1757 = vmatpush1.bf16.msra.mxu0 0
        %1758 = vmatprep.subr.bf16.mxu0 0
        %1759 = vmatpush1.bf16.msra.mxu0 0
        %1760 = vmatprep.subr.bf16.mxu0 0
        %1761 = vmatpush1.bf16.msra.mxu0 0
        %1762 = vmatprep.subr.bf16.mxu0 0
        %1763 = vmatpush1.bf16.msra.mxu0 0
        %1764 = vmatprep.subr.bf16.mxu0 0
        %1765 = vmatpush1.bf16.msra.mxu0 0
        %1766 = vmatprep.subr.bf16.mxu0 0
        %1767 = vmatpush1.bf16.msra.mxu0 0
        %1768 = vmatprep.subr.bf16.mxu0 0
        %1769 = vmatpush1.bf16.msra.mxu0 0
        %1770 = vmatprep.subr.bf16.mxu0 0
        %1771 = vmatpush1.bf16.msra.mxu0 0
        %1772 = vmatprep.subr.bf16.mxu0 0
        %1773 = vmatpush1.bf16.msra.mxu0 0
        %1774 = vmatprep.subr.bf16.mxu0 0
        %1775 = vmatpush1.bf16.msra.mxu0 0
        %1776 = vmatprep.mubr.bf16.mxu0 0
        %1777 = vmatmul.mubr.bf16.gmra.mrb[0].mxu0 %v1736
        %v1778 = vpop.f32.mrb[0].mxu0
        %v1779 = vadd.f32 %v1722, %v1778
        %v1780 = vpop.f32.mrb[0].mxu0
        %v1781 = vadd.f32 %v1724, %v1780
        %v1782 = vpop.f32.mrb[0].mxu0
        %v1783 = vadd.f32 %v1726, %v1782
        %v1784 = vpop.f32.mrb[0].mxu0
        %v1785 = vadd.f32 %v1728, %v1784
        %1786 = vdwg.mxu0
        %v1787 = vld [vmem:[#allocation7 + $0x78] sm:$0xff]
        %v1788 = vld [vmem:[#allocation7 + $0x80] sm:$0xff]
        %1790 = vset.pattern.permute.xlu0 0
        %1791 = vperm.xlu0 %1790, %v1787
        %v1792 = vpop.permute.xlu0 %1791
        %1795 = vset.pattern.permute.xlu0 0
        %1796 = vperm.xlu0 %1795, %v1788
        %v1797 = vpop.permute.xlu0 %1796
        %v1799 = vadd.f32 %v1779, %v1792
        %v1800 = vadd.f32 %v1781, %v1792
        %v1801 = vadd.f32 %v1783, %v1797
        %v1802 = vadd.f32 %v1785, %v1797
        %s1803 = sld [smem:[#allocation2 + $0xc]]
        %vm1804 = vcmp.ge.f32.partialorder %v1799, 0.0
        %vm1805 = vcmp.ge.f32.partialorder %v1800, 0.0
        %vm1806 = vcmp.ge.f32.partialorder %v1801, 0.0
        %vm1807 = vcmp.ge.f32.partialorder %v1802, 0.0
        %v1808 = vstv %s1803
        %v1809 = vmul.f32 %v1808, %v1799
        %v1810 = vmul.f32 %v1808, %v1800
        %v1811 = vmul.f32 %v1808, %v1801
        %v1812 = vmul.f32 %v1808, %v1802
        %v1813 = vsel %vm1804, %v1799, %v1809
        %v1814 = vsel %vm1805, %v1800, %v1810
        %v1815 = vsel %vm1806, %v1801, %v1811
        %v1816 = vsel %vm1807, %v1802, %v1812
        %1817 = vrot.lane.b32.xlu0 %v1813, 2
        %v1818 = vpop.permute.xlu0 %1817
        %1819 = vrot.lane.b32.xlu0 %v1815, 2
        %v1820 = vpop.permute.xlu0 %1819
        %1821 = vrot.lane.b32.xlu0 %v1814, 2
        %v1822 = vpop.permute.xlu0 %1821
        %1823 = vrot.lane.b32.xlu0 %v1816, 2
        %v1824 = vpop.permute.xlu0 %1823
        %v1825 = vsel %vm565, %v1818, %v1822
        %v1826 = vsel %vm565, %v1820, %v1824
        %v1827 = vsel %vm565, %v1822, %v1818
        %v1828 = vsel %vm565, %v1824, %v1820
        %v1829 = vsel %vm577, %v1827, 0.0
        %v1830 = vsel %vm578, %v1825, 0.0
        %v1831 = vsel %vm577, %v1828, 0.0
        %v1832 = vsel %vm578, %v1826, 0.0
        %v1833 = vld [vmem:[#allocation6 + $0xa0] sm:$0xf]
        %v1834 = vld [vmem:[#allocation6 + $0xa4] sm:$0xf]
        %v1835 = vpack.c.bf16 %v1831, %v1829
        %v1836 = vpack.c.bf16 %v1832, %v1830
        %v1837 = vld [vmem:[#allocation6 + $0xa8] sm:$0xf]
        %v1838 = vld [vmem:[#allocation6 + $0xac] sm:$0xf]
        %v1839 = vpack.c.bf16 %v1815, %v1813
        %v1840 = vpack.c.bf16 %v1816, %v1814
        %v1843 = vunpack.c.l.b16 %v1837
        %v1844 = vunpack.c.l.b16 %v1838
        %v1845 = vpack.c.b16 %v1844, %v1843
        %v1847 = vsel %vm762, %v1845, 0
        %1849 = vmatprep.subr.bf16.mxu0 %v1840
        %1850 = vmatpush1.bf16.msra.mxu0 %v1839
        %1851 = vmatprep.subr.bf16.mxu0 0
        %1852 = vmatpush1.bf16.msra.mxu0 0
        %1853 = vmatprep.subr.bf16.mxu0 0
        %1854 = vmatpush1.bf16.msra.mxu0 0
        %1855 = vmatprep.subr.bf16.mxu0 0
        %1856 = vmatpush1.bf16.msra.mxu0 0
        %1857 = vmatprep.subr.bf16.mxu0 0
        %1858 = vmatpush1.bf16.msra.mxu0 0
        %1859 = vmatprep.subr.bf16.mxu0 0
        %1860 = vmatpush1.bf16.msra.mxu0 0
        %1861 = vmatprep.subr.bf16.mxu0 0
        %1862 = vmatpush1.bf16.msra.mxu0 0
        %1863 = vmatprep.subr.bf16.mxu0 0
        %1864 = vmatpush1.bf16.msra.mxu0 0
        %1865 = vmatprep.subr.bf16.mxu0 0
        %1866 = vmatpush1.bf16.msra.mxu0 0
        %1867 = vmatprep.subr.bf16.mxu0 0
        %1868 = vmatpush1.bf16.msra.mxu0 0
        %1869 = vmatprep.subr.bf16.mxu0 0
        %1870 = vmatpush1.bf16.msra.mxu0 0
        %1871 = vmatprep.subr.bf16.mxu0 0
        %1872 = vmatpush1.bf16.msra.mxu0 0
        %1873 = vmatprep.subr.bf16.mxu0 0
        %1874 = vmatpush1.bf16.msra.mxu0 0
        %1875 = vmatprep.subr.bf16.mxu0 0
        %1876 = vmatpush1.bf16.msra.mxu0 0
        %1877 = vmatprep.subr.bf16.mxu0 0
        %1878 = vmatpush1.bf16.msra.mxu0 0
        %1879 = vmatprep.subr.bf16.mxu0 0
        %1880 = vmatpush1.bf16.msra.mxu0 0
        %1881 = vmatprep.mubr.bf16.mxu0 0
        %1882 = vmatmul.mubr.bf16.gmra.mrb[0].mxu0 %v1847
        %v1883 = vpop.f32.mrb[0].mxu0
        %v1884 = vadd.f32 0.0, %v1883
        %v1885 = vpop.f32.mrb[0].mxu0
        %v1886 = vadd.f32 0.0, %v1885
        %v1887 = vpop.f32.mrb[0].mxu0
        %v1888 = vadd.f32 0.0, %v1887
        %v1889 = vpop.f32.mrb[0].mxu0
        %v1890 = vadd.f32 0.0, %v1889
        %1891 = vdwg.mxu0
        %v1894 = vunpack.c.l.b16 %v1833
        %v1895 = vunpack.c.l.b16 %v1834
        %v1896 = vpack.c.b16 %v1895, %v1894
        %v1898 = vsel %vm762, %v1896, 0
        %1900 = vmatprep.subr.bf16.mxu0 %v1836
        %1901 = vmatpush1.bf16.msra.mxu0 %v1835
        %1902 = vmatprep.subr.bf16.mxu0 0
        %1903 = vmatpush1.bf16.msra.mxu0 0
        %1904 = vmatprep.subr.bf16.mxu0 0
        %1905 = vmatpush1.bf16.msra.mxu0 0
        %1906 = vmatprep.subr.bf16.mxu0 0
        %1907 = vmatpush1.bf16.msra.mxu0 0
        %1908 = vmatprep.subr.bf16.mxu0 0
        %1909 = vmatpush1.bf16.msra.mxu0 0
        %1910 = vmatprep.subr.bf16.mxu0 0
        %1911 = vmatpush1.bf16.msra.mxu0 0
        %1912 = vmatprep.subr.bf16.mxu0 0
        %1913 = vmatpush1.bf16.msra.mxu0 0
        %1914 = vmatprep.subr.bf16.mxu0 0
        %1915 = vmatpush1.bf16.msra.mxu0 0
        %1916 = vmatprep.subr.bf16.mxu0 0
        %1917 = vmatpush1.bf16.msra.mxu0 0
        %1918 = vmatprep.subr.bf16.mxu0 0
        %1919 = vmatpush1.bf16.msra.mxu0 0
        %1920 = vmatprep.subr.bf16.mxu0 0
        %1921 = vmatpush1.bf16.msra.mxu0 0
        %1922 = vmatprep.subr.bf16.mxu0 0
        %1923 = vmatpush1.bf16.msra.mxu0 0
        %1924 = vmatprep.subr.bf16.mxu0 0
        %1925 = vmatpush1.bf16.msra.mxu0 0
        %1926 = vmatprep.subr.bf16.mxu0 0
        %1927 = vmatpush1.bf16.msra.mxu0 0
        %1928 = vmatprep.subr.bf16.mxu0 0
        %1929 = vmatpush1.bf16.msra.mxu0 0
        %1930 = vmatprep.subr.bf16.mxu0 0
        %1931 = vmatpush1.bf16.msra.mxu0 0
        %1932 = vmatprep.mubr.bf16.mxu0 0
        %1933 = vmatmul.mubr.bf16.gmra.mrb[0].mxu0 %v1898
        %v1934 = vpop.f32.mrb[0].mxu0
        %v1935 = vadd.f32 %v1884, %v1934
        %v1936 = vpop.f32.mrb[0].mxu0
        %v1937 = vadd.f32 %v1886, %v1936
        %v1938 = vpop.f32.mrb[0].mxu0
        %v1939 = vadd.f32 %v1888, %v1938
        %v1940 = vpop.f32.mrb[0].mxu0
        %v1941 = vadd.f32 %v1890, %v1940
        %1942 = vdwg.mxu0
        %v1943 = vld [vmem:[#allocation7 + $0x88] sm:$0xff]
        %v1944 = vld [vmem:[#allocation7 + $0x90] sm:$0xff]
        %1946 = vset.pattern.permute.xlu0 0
        %1947 = vperm.xlu0 %1946, %v1943
        %v1948 = vpop.permute.xlu0 %1947
        %1951 = vset.pattern.permute.xlu0 0
        %1952 = vperm.xlu0 %1951, %v1944
        %v1953 = vpop.permute.xlu0 %1952
        %v1955 = vadd.f32 %v1935, %v1948
        %v1956 = vadd.f32 %v1937, %v1948
        %v1957 = vadd.f32 %v1939, %v1953
        %v1958 = vadd.f32 %v1941, %v1953
        %s1959 = sld [smem:[#allocation2 + $0xd]]
        %vm1960 = vcmp.ge.f32.partialorder %v1955, 0.0
        %vm1961 = vcmp.ge.f32.partialorder %v1956, 0.0
        %vm1962 = vcmp.ge.f32.partialorder %v1957, 0.0
        %vm1963 = vcmp.ge.f32.partialorder %v1958, 0.0
        %v1964 = vstv %s1959
        %v1965 = vmul.f32 %v1964, %v1955
        %v1966 = vmul.f32 %v1964, %v1956
        %v1967 = vmul.f32 %v1964, %v1957
        %v1968 = vmul.f32 %v1964, %v1958
        %v1969 = vsel %vm1960, %v1955, %v1965
        %v1970 = vsel %vm1961, %v1956, %v1966
        %v1971 = vsel %vm1962, %v1957, %v1967
        %v1972 = vsel %vm1963, %v1958, %v1968
        %v1973 = vld [vmem:[#allocation6 + $0xb0] sm:$0xf]
        %v1974 = vld [vmem:[#allocation6 + $0xb4] sm:$0xf]
        %v1975 = vld [vmem:[#allocation7 + $0x98] sm:$0xff]
        %v1976 = vld [vmem:[#allocation7 + $0xa0] sm:$0xff]
        %1978 = vset.pattern.permute.xlu0 0
        %1979 = vperm.xlu0 %1978, %v1975
        %v1980 = vpop.permute.xlu0 %1979
        %1983 = vset.pattern.permute.xlu0 0
        %1984 = vperm.xlu0 %1983, %v1976
        %v1985 = vpop.permute.xlu0 %1984
        %v1989 = vunpack.c.l.b16 %v1973
        %v1990 = vunpack.c.l.b16 %v1974
        %v1991 = vpack.c.b16 %v1990, %v1989
        %v1993 = vsel %vm302, %v1991, 0
        %1995 = vmatprep.subr.bf16.mxu0 %v1685
        %1996 = vmatpush1.bf16.msra.mxu0 %v1682
        %1997 = vmatprep.subr.bf16.mxu0 0
        %1998 = vmatpush1.bf16.msra.mxu0 0
        %1999 = vmatprep.subr.bf16.mxu0 0
        %2000 = vmatpush1.bf16.msra.mxu0 0
        %2001 = vmatprep.subr.bf16.mxu0 0
        %2002 = vmatpush1.bf16.msra.mxu0 0
        %2003 = vmatprep.subr.bf16.mxu0 0
        %2004 = vmatpush1.bf16.msra.mxu0 0
        %2005 = vmatprep.subr.bf16.mxu0 0
        %2006 = vmatpush1.bf16.msra.mxu0 0
        %2007 = vmatprep.subr.bf16.mxu0 0
        %2008 = vmatpush1.bf16.msra.mxu0 0
        %2009 = vmatprep.subr.bf16.mxu0 0
        %2010 = vmatpush1.bf16.msra.mxu0 0
        %2011 = vmatprep.subr.bf16.mxu0 0
        %2012 = vmatpush1.bf16.msra.mxu0 0
        %2013 = vmatprep.subr.bf16.mxu0 0
        %2014 = vmatpush1.bf16.msra.mxu0 0
        %2015 = vmatprep.subr.bf16.mxu0 0
        %2016 = vmatpush1.bf16.msra.mxu0 0
        %2017 = vmatprep.subr.bf16.mxu0 0
        %2018 = vmatpush1.bf16.msra.mxu0 0
        %2019 = vmatprep.subr.bf16.mxu0 0
        %2020 = vmatpush1.bf16.msra.mxu0 0
        %2021 = vmatprep.subr.bf16.mxu0 0
        %2022 = vmatpush1.bf16.msra.mxu0 0
        %2023 = vmatprep.subr.bf16.mxu0 0
        %2024 = vmatpush1.bf16.msra.mxu0 0
        %2025 = vmatprep.subr.bf16.mxu0 0
        %2026 = vmatpush1.bf16.msra.mxu0 0
        %2027 = vmatprep.mubr.bf16.mxu0 0
        %2028 = vmatmul.mubr.bf16.gmra.mrb[0].mxu0 %v1993
        %v2029 = vpop.f32.mrb[0].mxu0
        %v2030 = vadd.f32 %v1980, %v2029
        %v2031 = vpop.f32.mrb[0].mxu0
        %v2032 = vadd.f32 %v1980, %v2031
        %v2033 = vpop.f32.mrb[0].mxu0
        %v2034 = vadd.f32 %v1985, %v2033
        %v2035 = vpop.f32.mrb[0].mxu0
        %v2036 = vadd.f32 %v1985, %v2035
        %2037 = vdwg.mxu0
        %v2038 = vadd.f32 %v1969, %v2030
        %v2039 = vadd.f32 %v1970, %v2032
        %v2040 = vadd.f32 %v1971, %v2034
        %v2041 = vadd.f32 %v1972, %v2036
        %s2042 = sld [smem:[#allocation2 + $0xe]]
        %vm2043 = vcmp.ge.f32.partialorder %v2038, 0.0
        %vm2044 = vcmp.ge.f32.partialorder %v2039, 0.0
        %vm2045 = vcmp.ge.f32.partialorder %v2040, 0.0
        %vm2046 = vcmp.ge.f32.partialorder %v2041, 0.0
        %v2047 = vstv %s2042
        %v2048 = vmul.f32 %v2047, %v2038
        %v2049 = vmul.f32 %v2047, %v2039
        %v2050 = vmul.f32 %v2047, %v2040
        %v2051 = vmul.f32 %v2047, %v2041
        %v2052 = vsel %vm2043, %v2038, %v2048
        %v2053 = vsel %vm2044, %v2039, %v2049
        %v2054 = vsel %vm2045, %v2040, %v2050
        %v2055 = vsel %vm2046, %v2041, %v2051
        %2056 = vrot.lane.b32.xlu0 %v2052, 4
        %v2057 = vpop.permute.xlu0 %2056
        %2058 = vrot.lane.b32.xlu0 %v2054, 4
        %v2059 = vpop.permute.xlu0 %2058
        %2060 = vrot.lane.b32.xlu0 %v2053, 4
        %v2061 = vpop.permute.xlu0 %2060
        %2062 = vrot.lane.b32.xlu0 %v2055, 4
        %v2063 = vpop.permute.xlu0 %2062
        %v2064 = vsel %vm982, %v2057, %v2061
        %v2065 = vsel %vm982, %v2059, %v2063
        %v2066 = vsel %vm982, %v2061, %v2057
        %v2067 = vsel %vm982, %v2063, %v2059
        %v2068 = vsel %vm996, %v2066, 0.0
        %v2069 = vsel %vm997, %v2064, 0.0
        %v2070 = vsel %vm996, %v2067, 0.0
        %v2071 = vsel %vm997, %v2065, 0.0
        %v2072 = vld [vmem:[#allocation6 + $0xb8] sm:$0xf]
        %v2073 = vpack.c.bf16 %v2070, %v2068
        %v2074 = vpack.c.bf16 %v2071, %v2069
        %v2075 = vld [vmem:[#allocation6 + $0xc0] sm:$0xf]
        %v2076 = vpack.c.bf16 %v2054, %v2052
        %v2077 = vpack.c.bf16 %v2055, %v2053
        %v2079 = vsel %vm762, %v2075, 0
        %2081 = vmatprep.subr.bf16.mxu0 %v2077
        %2082 = vmatpush1.bf16.msra.mxu0 %v2076
        %2083 = vmatprep.subr.bf16.mxu0 0
        %2084 = vmatpush1.bf16.msra.mxu0 0
        %2085 = vmatprep.subr.bf16.mxu0 0
        %2086 = vmatpush1.bf16.msra.mxu0 0
        %2087 = vmatprep.subr.bf16.mxu0 0
        %2088 = vmatpush1.bf16.msra.mxu0 0
        %2089 = vmatprep.subr.bf16.mxu0 0
        %2090 = vmatpush1.bf16.msra.mxu0 0
        %2091 = vmatprep.subr.bf16.mxu0 0
        %2092 = vmatpush1.bf16.msra.mxu0 0
        %2093 = vmatprep.subr.bf16.mxu0 0
        %2094 = vmatpush1.bf16.msra.mxu0 0
        %2095 = vmatprep.subr.bf16.mxu0 0
        %2096 = vmatpush1.bf16.msra.mxu0 0
        %2097 = vmatprep.subr.bf16.mxu0 0
        %2098 = vmatpush1.bf16.msra.mxu0 0
        %2099 = vmatprep.subr.bf16.mxu0 0
        %2100 = vmatpush1.bf16.msra.mxu0 0
        %2101 = vmatprep.subr.bf16.mxu0 0
        %2102 = vmatpush1.bf16.msra.mxu0 0
        %2103 = vmatprep.subr.bf16.mxu0 0
        %2104 = vmatpush1.bf16.msra.mxu0 0
        %2105 = vmatprep.subr.bf16.mxu0 0
        %2106 = vmatpush1.bf16.msra.mxu0 0
        %2107 = vmatprep.subr.bf16.mxu0 0
        %2108 = vmatpush1.bf16.msra.mxu0 0
        %2109 = vmatprep.subr.bf16.mxu0 0
        %2110 = vmatpush1.bf16.msra.mxu0 0
        %2111 = vmatprep.subr.bf16.mxu0 0
        %2112 = vmatpush1.bf16.msra.mxu0 0
        %2113 = vmatprep.mubr.bf16.mxu0 0
        %2114 = vmatmul.mubr.bf16.gmra.mrb[0].mxu0 %v2079
        %v2115 = vpop.f32.mrb[0].mxu0
        %v2116 = vadd.f32 0.0, %v2115
        %v2117 = vpop.f32.mrb[0].mxu0
        %v2118 = vadd.f32 0.0, %v2117
        %v2119 = vpop.f32.mrb[0].mxu0
        %v2120 = vpop.f32.mrb[0].mxu0
        %2121 = vdwg.mxu0
        %v2123 = vsel %vm762, %v2072, 0
        %2125 = vmatprep.subr.bf16.mxu0 %v2074
        %2126 = vmatpush1.bf16.msra.mxu0 %v2073
        %2127 = vmatprep.subr.bf16.mxu0 0
        %2128 = vmatpush1.bf16.msra.mxu0 0
        %2129 = vmatprep.subr.bf16.mxu0 0
        %2130 = vmatpush1.bf16.msra.mxu0 0
        %2131 = vmatprep.subr.bf16.mxu0 0
        %2132 = vmatpush1.bf16.msra.mxu0 0
        %2133 = vmatprep.subr.bf16.mxu0 0
        %2134 = vmatpush1.bf16.msra.mxu0 0
        %2135 = vmatprep.subr.bf16.mxu0 0
        %2136 = vmatpush1.bf16.msra.mxu0 0
        %2137 = vmatprep.subr.bf16.mxu0 0
        %2138 = vmatpush1.bf16.msra.mxu0 0
        %2139 = vmatprep.subr.bf16.mxu0 0
        %2140 = vmatpush1.bf16.msra.mxu0 0
        %2141 = vmatprep.subr.bf16.mxu0 0
        %2142 = vmatpush1.bf16.msra.mxu0 0
        %2143 = vmatprep.subr.bf16.mxu0 0
        %2144 = vmatpush1.bf16.msra.mxu0 0
        %2145 = vmatprep.subr.bf16.mxu0 0
        %2146 = vmatpush1.bf16.msra.mxu0 0
        %2147 = vmatprep.subr.bf16.mxu0 0
        %2148 = vmatpush1.bf16.msra.mxu0 0
        %2149 = vmatprep.subr.bf16.mxu0 0
        %2150 = vmatpush1.bf16.msra.mxu0 0
        %2151 = vmatprep.subr.bf16.mxu0 0
        %2152 = vmatpush1.bf16.msra.mxu0 0
        %2153 = vmatprep.subr.bf16.mxu0 0
        %2154 = vmatpush1.bf16.msra.mxu0 0
        %2155 = vmatprep.subr.bf16.mxu0 0
        %2156 = vmatpush1.bf16.msra.mxu0 0
        %2157 = vmatprep.mubr.bf16.mxu0 0
        %2158 = vmatmul.mubr.bf16.gmra.mrb[0].mxu0 %v2123
        %v2159 = vpop.f32.mrb[0].mxu0
        %v2160 = vadd.f32 %v2116, %v2159
        %v2161 = vpop.f32.mrb[0].mxu0
        %v2162 = vadd.f32 %v2118, %v2161
        %v2163 = vpop.f32.mrb[0].mxu0
        %v2164 = vpop.f32.mrb[0].mxu0
        %2165 = vdwg.mxu0
        %v2166 = vld [vmem:[#allocation7 + $0xa8] sm:$0xff]
        %2168 = vset.pattern.permute.xlu0 0
        %2169 = vperm.xlu0 %2168, %v2166
        %v2170 = vpop.permute.xlu0 %2169
        %v2172 = vadd.f32 %v2160, %v2170
        %v2173 = vadd.f32 %v2162, %v2170
        %s2174 = sld [smem:[#allocation2 + $0xf]]
        %vm2175 = vcmp.ge.f32.partialorder %v2172, 0.0
        %vm2176 = vcmp.ge.f32.partialorder %v2173, 0.0
        %v2177 = vstv %s2174
        %v2178 = vmul.f32 %v2177, %v2172
        %v2179 = vmul.f32 %v2177, %v2173
        %v2180 = vsel %vm2175, %v2172, %v2178
        %v2181 = vsel %vm2176, %v2173, %v2179
        %2182 = vrot.lane.b32.xlu0 %v2180, 4
        %v2183 = vpop.permute.xlu0 %2182
        %2184 = vrot.lane.b32.xlu0 %v2181, 4
        %v2185 = vpop.permute.xlu0 %2184
        %v2186 = vsel %vm982, %v2183, %v2185
        %v2187 = vsel %vm982, %v2185, %v2183
        %v2188 = vsel %vm996, %v2187, 0.0
        %v2189 = vsel %vm997, %v2186, 0.0
        %v2190 = vld [vmem:[#allocation6 + $0xc8] sm:$0xf]
        %v2191 = vpack.c.bf16 %v2188, %v2188
        %v2192 = vpack.c.bf16 %v2189, %v2189
        %v2193 = vld [vmem:[#allocation6 + $0xd0] sm:$0xf]
        %v2194 = vpack.c.bf16 %v2180, %v2180
        %v2195 = vpack.c.bf16 %v2181, %v2181
        %v2197 = vsel %vm302, %v2193, 0
        %v2200 = vsel %vm306, %v2194, 0
        %v2203 = vsel %vm306, %v2195, 0
        %2205 = vmatprep.subr.bf16.mxu0 %v2203
        %2206 = vmatpush1.bf16.msra.mxu0 %v2200
        %2207 = vmatprep.subr.bf16.mxu0 0
        %2208 = vmatpush1.bf16.msra.mxu0 0
        %2209 = vmatprep.subr.bf16.mxu0 0
        %2210 = vmatpush1.bf16.msra.mxu0 0
        %2211 = vmatprep.subr.bf16.mxu0 0
        %2212 = vmatpush1.bf16.msra.mxu0 0
        %2213 = vmatprep.subr.bf16.mxu0 0
        %2214 = vmatpush1.bf16.msra.mxu0 0
        %2215 = vmatprep.subr.bf16.mxu0 0
        %2216 = vmatpush1.bf16.msra.mxu0 0
        %2217 = vmatprep.subr.bf16.mxu0 0
        %2218 = vmatpush1.bf16.msra.mxu0 0
        %2219 = vmatprep.subr.bf16.mxu0 0
        %2220 = vmatpush1.bf16.msra.mxu0 0
        %2221 = vmatprep.subr.bf16.mxu0 0
        %2222 = vmatpush1.bf16.msra.mxu0 0
        %2223 = vmatprep.subr.bf16.mxu0 0
        %2224 = vmatpush1.bf16.msra.mxu0 0
        %2225 = vmatprep.subr.bf16.mxu0 0
        %2226 = vmatpush1.bf16.msra.mxu0 0
        %2227 = vmatprep.subr.bf16.mxu0 0
        %2228 = vmatpush1.bf16.msra.mxu0 0
        %2229 = vmatprep.subr.bf16.mxu0 0
        %2230 = vmatpush1.bf16.msra.mxu0 0
        %2231 = vmatprep.subr.bf16.mxu0 0
        %2232 = vmatpush1.bf16.msra.mxu0 0
        %2233 = vmatprep.subr.bf16.mxu0 0
        %2234 = vmatpush1.bf16.msra.mxu0 0
        %2235 = vmatprep.subr.bf16.mxu0 0
        %2236 = vmatpush1.bf16.msra.mxu0 0
        %2237 = vmatprep.mubr.bf16.mxu0 0
        %2238 = vmatmul.mubr.bf16.gmra.mrb[0].mxu0 %v2197
        %v2239 = vpop.f32.mrb[0].mxu0
        %v2240 = vadd.f32 0.0, %v2239
        %v2241 = vpop.f32.mrb[0].mxu0
        %v2242 = vadd.f32 0.0, %v2241
        %v2243 = vpop.f32.mrb[0].mxu0
        %v2244 = vpop.f32.mrb[0].mxu0
        %2245 = vdwg.mxu0
        %v2247 = vsel %vm302, %v2190, 0
        %v2250 = vsel %vm306, %v2191, 0
        %v2253 = vsel %vm306, %v2192, 0
        %2255 = vmatprep.subr.bf16.mxu0 %v2253
        %2256 = vmatpush1.bf16.msra.mxu0 %v2250
        %2257 = vmatprep.subr.bf16.mxu0 0
        %2258 = vmatpush1.bf16.msra.mxu0 0
        %2259 = vmatprep.subr.bf16.mxu0 0
        %2260 = vmatpush1.bf16.msra.mxu0 0
        %2261 = vmatprep.subr.bf16.mxu0 0
        %2262 = vmatpush1.bf16.msra.mxu0 0
        %2263 = vmatprep.subr.bf16.mxu0 0
        %2264 = vmatpush1.bf16.msra.mxu0 0
        %2265 = vmatprep.subr.bf16.mxu0 0
        %2266 = vmatpush1.bf16.msra.mxu0 0
        %2267 = vmatprep.subr.bf16.mxu0 0
        %2268 = vmatpush1.bf16.msra.mxu0 0
        %2269 = vmatprep.subr.bf16.mxu0 0
        %2270 = vmatpush1.bf16.msra.mxu0 0
        %2271 = vmatprep.subr.bf16.mxu0 0
        %2272 = vmatpush1.bf16.msra.mxu0 0
        %2273 = vmatprep.subr.bf16.mxu0 0
        %2274 = vmatpush1.bf16.msra.mxu0 0
        %2275 = vmatprep.subr.bf16.mxu0 0
        %2276 = vmatpush1.bf16.msra.mxu0 0
        %2277 = vmatprep.subr.bf16.mxu0 0
        %2278 = vmatpush1.bf16.msra.mxu0 0
        %2279 = vmatprep.subr.bf16.mxu0 0
        %2280 = vmatpush1.bf16.msra.mxu0 0
        %2281 = vmatprep.subr.bf16.mxu0 0
        %2282 = vmatpush1.bf16.msra.mxu0 0
        %2283 = vmatprep.subr.bf16.mxu0 0
        %2284 = vmatpush1.bf16.msra.mxu0 0
        %2285 = vmatprep.subr.bf16.mxu0 0
        %2286 = vmatpush1.bf16.msra.mxu0 0
        %2287 = vmatprep.mubr.bf16.mxu0 0
        %2288 = vmatmul.mubr.bf16.gmra.mrb[0].mxu0 %v2247
        %v2289 = vpop.f32.mrb[0].mxu0
        %v2290 = vadd.f32 %v2240, %v2289
        %v2291 = vpop.f32.mrb[0].mxu0
        %v2292 = vadd.f32 %v2242, %v2291
        %v2293 = vpop.f32.mrb[0].mxu0
        %v2294 = vpop.f32.mrb[0].mxu0
        %2295 = vdwg.mxu0
        %v2296 = vld [vmem:[#allocation7 + $0xb0] sm:$0xff]
        %2298 = vset.pattern.permute.xlu0 0
        %2299 = vperm.xlu0 %2298, %v2296
        %v2300 = vpop.permute.xlu0 %2299
        %v2302 = vadd.f32 %v2290, %v2300
        %v2303 = vadd.f32 %v2292, %v2300
        %s2304 = sld [smem:[#allocation2 + $0x10]]
        %vm2305 = vcmp.ge.f32.partialorder %v2302, 0.0
        %vm2306 = vcmp.ge.f32.partialorder %v2303, 0.0
        %v2307 = vstv %s2304
        %v2308 = vmul.f32 %v2307, %v2302
        %v2309 = vmul.f32 %v2307, %v2303
        %v2310 = vsel %vm2305, %v2302, %v2308
        %v2311 = vsel %vm2306, %v2303, %v2309
        %v2312 = vld [vmem:[#allocation6 + $0xd8] sm:$0xf]
        %v2313 = vld [vmem:[#allocation7 + $0xb8] sm:$0xff]
        %2315 = vset.pattern.permute.xlu0 0
        %2316 = vperm.xlu0 %2315, %v2313
        %v2317 = vpop.permute.xlu0 %2316
        %v2320 = vsel %vm762, %v2312, 0
        %2322 = vmatprep.subr.bf16.mxu0 %v2077
        %2323 = vmatpush1.bf16.msra.mxu0 %v2076
        %2324 = vmatprep.subr.bf16.mxu0 0
        %2325 = vmatpush1.bf16.msra.mxu0 0
        %2326 = vmatprep.subr.bf16.mxu0 0
        %2327 = vmatpush1.bf16.msra.mxu0 0
        %2328 = vmatprep.subr.bf16.mxu0 0
        %2329 = vmatpush1.bf16.msra.mxu0 0
        %2330 = vmatprep.subr.bf16.mxu0 0
        %2331 = vmatpush1.bf16.msra.mxu0 0
        %2332 = vmatprep.subr.bf16.mxu0 0
        %2333 = vmatpush1.bf16.msra.mxu0 0
        %2334 = vmatprep.subr.bf16.mxu0 0
        %2335 = vmatpush1.bf16.msra.mxu0 0
        %2336 = vmatprep.subr.bf16.mxu0 0
        %2337 = vmatpush1.bf16.msra.mxu0 0
        %2338 = vmatprep.subr.bf16.mxu0 0
        %2339 = vmatpush1.bf16.msra.mxu0 0
        %2340 = vmatprep.subr.bf16.mxu0 0
        %2341 = vmatpush1.bf16.msra.mxu0 0
        %2342 = vmatprep.subr.bf16.mxu0 0
        %2343 = vmatpush1.bf16.msra.mxu0 0
        %2344 = vmatprep.subr.bf16.mxu0 0
        %2345 = vmatpush1.bf16.msra.mxu0 0
        %2346 = vmatprep.subr.bf16.mxu0 0
        %2347 = vmatpush1.bf16.msra.mxu0 0
        %2348 = vmatprep.subr.bf16.mxu0 0
        %2349 = vmatpush1.bf16.msra.mxu0 0
        %2350 = vmatprep.subr.bf16.mxu0 0
        %2351 = vmatpush1.bf16.msra.mxu0 0
        %2352 = vmatprep.subr.bf16.mxu0 0
        %2353 = vmatpush1.bf16.msra.mxu0 0
        %2354 = vmatprep.mubr.bf16.mxu0 0
        %2355 = vmatmul.mubr.bf16.gmra.mrb[0].mxu0 %v2320
        %v2356 = vpop.f32.mrb[0].mxu0
        %v2357 = vadd.f32 %v2317, %v2356
        %v2358 = vpop.f32.mrb[0].mxu0
        %v2359 = vadd.f32 %v2317, %v2358
        %v2360 = vpop.f32.mrb[0].mxu0
        %v2361 = vpop.f32.mrb[0].mxu0
        %2362 = vdwg.mxu0
        %v2363 = vadd.f32 %v2310, %v2357
        %v2364 = vadd.f32 %v2311, %v2359
        %s2365 = sld [smem:[#allocation2 + $0x11]]
        %vm2366 = vcmp.ge.f32.partialorder %v2363, 0.0
        %vm2367 = vcmp.ge.f32.partialorder %v2364, 0.0
        %v2368 = vstv %s2365
        %v2369 = vmul.f32 %v2368, %v2363
        %v2370 = vmul.f32 %v2368, %v2364
        %v2371 = vsel %vm2366, %v2363, %v2369
        %v2372 = vsel %vm2367, %v2364, %v2370
        %v2373 = vsel %vm1313, %v2371, 0.0
        %v2374 = vsel %vm1314, %v2372, 0.0
        %v2375 = vadd.f32 %v2373, %v2374
        %2376 = vadd.xlane.f32.xlu0 %v2375
        %v2377 = vpop.xlane.xlu0 %2376
        %v2378 = vmul.f32 %v2377, 0.0078125
        %v2379 = vsub.f32 %v2371, %v2378
        %v2380 = vsub.f32 %v2372, %v2378
        %v2381 = vsel %vm1313, %v2379, 0.0
        %v2382 = vsel %vm1314, %v2380, 0.0
        %v2383 = vmul.f32 %v2381, %v2381
        %v2384 = vmul.f32 %v2382, %v2382
        %v2385 = vadd.f32 %v2383, %v2384
        %2386 = vadd.xlane.f32.xlu0 %v2385
        %v2387 = vpop.xlane.xlu0 %2386
        %v2388 = vmul.f32 %v2387, 0.0078125
        %v2389 = vadd.f32 %v2388, 1e-05
        %v2390 = vrsqrt.pop %v2389
        %v2391 = vmul.f32 %v2381, %v2390
        %v2392 = vmul.f32 %v2382, %v2390
        %v2393 = vadd.f32 %v2391, 0.0
        %v2394 = vadd.f32 %v2392, 0.0
        %v2395 = vsel %vm1347, %v2371, 0.0
        %v2396 = vsel %vm1348, %v2372, 0.0
        %v2397 = vadd.f32 %v2395, %v2396
        %2398 = vadd.xlane.f32.xlu0 %v2397
        %v2399 = vpop.xlane.xlu0 %2398
        %v2400 = vmul.f32 %v2399, 0.0078125
        %v2401 = vsub.f32 %v2371, %v2400
        %v2402 = vsub.f32 %v2372, %v2400
        %v2403 = vsel %vm1347, %v2401, 0.0
        %v2404 = vsel %vm1348, %v2402, 0.0
        %v2405 = vmul.f32 %v2403, %v2403
        %v2406 = vmul.f32 %v2404, %v2404
        %v2407 = vadd.f32 %v2405, %v2406
        %2408 = vadd.xlane.f32.xlu0 %v2407
        %v2409 = vpop.xlane.xlu0 %2408
        %v2410 = vmul.f32 %v2409, 0.0078125
        %v2411 = vadd.f32 %v2410, 1e-05
        %v2412 = vrsqrt.pop %v2411
        %v2413 = vmul.f32 %v2403, %v2412
        %v2414 = vmul.f32 %v2404, %v2412
        %v2415 = vadd.f32 %v2393, %v2413
        %v2416 = vadd.f32 %v2394, %v2414
        %v2417 = vld [vmem:[#allocation7 + $0xc0] sm:$0xff]
        %2419 = vset.pattern.permute.xlu0 0
        %2420 = vperm.xlu0 %2419, %v2417
        %v2421 = vpop.permute.xlu0 %2420
        %v2423 = vmul.f32 %v2415, %v2421
        %v2424 = vmul.f32 %v2416, %v2421
        %v2425 = vld [vmem:[#allocation7 + $0xc8] sm:$0xff]
        %2427 = vset.pattern.permute.xlu0 0
        %2428 = vperm.xlu0 %2427, %v2425
        %v2429 = vpop.permute.xlu0 %2428
        %v2431 = vadd.f32 %v2423, %v2429
        %v2432 = vadd.f32 %v2424, %v2429
        %2433 = vrot.lane.b32.xlu0 %v2431, 1
        %v2434 = vpop.permute.xlu0 %2433
        %2435 = vrot.lane.b32.xlu0 %v2432, 1
        %v2436 = vpop.permute.xlu0 %2435
        %v2437 = vsel %vm280, %v2434, %v2436
        %v2438 = vsel %vm280, %v2436, %v2434
        %v2439 = vsel %vm292, %v2438, 0.0
        %v2440 = vsel %vm293, %v2437, 0.0
        %v2441 = vld [vmem:[#allocation6 + $0xe0] sm:$0xf]
        %v2442 = vpack.c.bf16 %v2439, %v2439
        %v2443 = vpack.c.bf16 %v2440, %v2440
        %v2444 = vld [vmem:[#allocation6 + $0xe8] sm:$0xf]
        %v2445 = vpack.c.bf16 %v2431, %v2431
        %v2446 = vpack.c.bf16 %v2432, %v2432
        %v2448 = vsel %vm302, %v2444, 0
        %v2451 = vsel %vm306, %v2445, 0
        %v2454 = vsel %vm306, %v2446, 0
        %2456 = vmatprep.subr.bf16.mxu0 %v2454
        %2457 = vmatpush1.bf16.msra.mxu0 %v2451
        %2458 = vmatprep.subr.bf16.mxu0 0
        %2459 = vmatpush1.bf16.msra.mxu0 0
        %2460 = vmatprep.subr.bf16.mxu0 0
        %2461 = vmatpush1.bf16.msra.mxu0 0
        %2462 = vmatprep.subr.bf16.mxu0 0
        %2463 = vmatpush1.bf16.msra.mxu0 0
        %2464 = vmatprep.subr.bf16.mxu0 0
        %2465 = vmatpush1.bf16.msra.mxu0 0
        %2466 = vmatprep.subr.bf16.mxu0 0
        %2467 = vmatpush1.bf16.msra.mxu0 0
        %2468 = vmatprep.subr.bf16.mxu0 0
        %2469 = vmatpush1.bf16.msra.mxu0 0
        %2470 = vmatprep.subr.bf16.mxu0 0
        %2471 = vmatpush1.bf16.msra.mxu0 0
        %2472 = vmatprep.subr.bf16.mxu0 0
        %2473 = vmatpush1.bf16.msra.mxu0 0
        %2474 = vmatprep.subr.bf16.mxu0 0
        %2475 = vmatpush1.bf16.msra.mxu0 0
        %2476 = vmatprep.subr.bf16.mxu0 0
        %2477 = vmatpush1.bf16.msra.mxu0 0
        %2478 = vmatprep.subr.bf16.mxu0 0
        %2479 = vmatpush1.bf16.msra.mxu0 0
        %2480 = vmatprep.subr.bf16.mxu0 0
        %2481 = vmatpush1.bf16.msra.mxu0 0
        %2482 = vmatprep.subr.bf16.mxu0 0
        %2483 = vmatpush1.bf16.msra.mxu0 0
        %2484 = vmatprep.subr.bf16.mxu0 0
        %2485 = vmatpush1.bf16.msra.mxu0 0
        %2486 = vmatprep.subr.bf16.mxu0 0
        %2487 = vmatpush1.bf16.msra.mxu0 0
        %2488 = vmatprep.mubr.bf16.mxu0 0
        %2489 = vmatmul.mubr.bf16.gmra.mrb[0].mxu0 %v2448
        %v2490 = vpop.f32.mrb[0].mxu0
        %v2491 = vadd.f32 0.0, %v2490
        %v2492 = vpop.f32.mrb[0].mxu0
        %v2493 = vadd.f32 0.0, %v2492
        %v2494 = vpop.f32.mrb[0].mxu0
        %v2495 = vpop.f32.mrb[0].mxu0
        %2496 = vdwg.mxu0
        %v2498 = vsel %vm302, %v2441, 0
        %v2501 = vsel %vm306, %v2442, 0
        %v2504 = vsel %vm306, %v2443, 0
        %2506 = vmatprep.subr.bf16.mxu0 %v2504
        %2507 = vmatpush1.bf16.msra.mxu0 %v2501
        %2508 = vmatprep.subr.bf16.mxu0 0
        %2509 = vmatpush1.bf16.msra.mxu0 0
        %2510 = vmatprep.subr.bf16.mxu0 0
        %2511 = vmatpush1.bf16.msra.mxu0 0
        %2512 = vmatprep.subr.bf16.mxu0 0
        %2513 = vmatpush1.bf16.msra.mxu0 0
        %2514 = vmatprep.subr.bf16.mxu0 0
        %2515 = vmatpush1.bf16.msra.mxu0 0
        %2516 = vmatprep.subr.bf16.mxu0 0
        %2517 = vmatpush1.bf16.msra.mxu0 0
        %2518 = vmatprep.subr.bf16.mxu0 0
        %2519 = vmatpush1.bf16.msra.mxu0 0
        %2520 = vmatprep.subr.bf16.mxu0 0
        %2521 = vmatpush1.bf16.msra.mxu0 0
        %2522 = vmatprep.subr.bf16.mxu0 0
        %2523 = vmatpush1.bf16.msra.mxu0 0
        %2524 = vmatprep.subr.bf16.mxu0 0
        %2525 = vmatpush1.bf16.msra.mxu0 0
        %2526 = vmatprep.subr.bf16.mxu0 0
        %2527 = vmatpush1.bf16.msra.mxu0 0
        %2528 = vmatprep.subr.bf16.mxu0 0
        %2529 = vmatpush1.bf16.msra.mxu0 0
        %2530 = vmatprep.subr.bf16.mxu0 0
        %2531 = vmatpush1.bf16.msra.mxu0 0
        %2532 = vmatprep.subr.bf16.mxu0 0
        %2533 = vmatpush1.bf16.msra.mxu0 0
        %2534 = vmatprep.subr.bf16.mxu0 0
        %2535 = vmatpush1.bf16.msra.mxu0 0
        %2536 = vmatprep.subr.bf16.mxu0 0
        %2537 = vmatpush1.bf16.msra.mxu0 0
        %2538 = vmatprep.mubr.bf16.mxu0 0
        %2539 = vmatmul.mubr.bf16.gmra.mrb[0].mxu0 %v2498
        %v2540 = vpop.f32.mrb[0].mxu0
        %v2541 = vadd.f32 %v2491, %v2540
        %v2542 = vpop.f32.mrb[0].mxu0
        %v2543 = vadd.f32 %v2493, %v2542
        %v2544 = vpop.f32.mrb[0].mxu0
        %v2545 = vpop.f32.mrb[0].mxu0
        %2546 = vdwg.mxu0
        %v2547 = vld [vmem:[#allocation7 + $0xd0] sm:$0xff]
        %2549 = vset.pattern.permute.xlu0 0
        %2550 = vperm.xlu0 %2549, %v2547
        %v2551 = vpop.permute.xlu0 %2550
        %v2553 = vadd.f32 %v2541, %v2551
        %v2554 = vadd.f32 %v2543, %v2551
        %s2555 = sld [smem:[#allocation2 + $0x12]]
        %vm2556 = vcmp.ge.f32.partialorder %v2553, 0.0
        %vm2557 = vcmp.ge.f32.partialorder %v2554, 0.0
        %v2558 = vstv %s2555
        %v2559 = vmul.f32 %v2558, %v2553
        %v2560 = vmul.f32 %v2558, %v2554
        %v2561 = vsel %vm2556, %v2553, %v2559
        %v2562 = vsel %vm2557, %v2554, %v2560
        %2563 = vrot.lane.b32.xlu0 %v2561, 1
        %v2564 = vpop.permute.xlu0 %2563
        %2565 = vrot.lane.b32.xlu0 %v2562, 1
        %v2566 = vpop.permute.xlu0 %2565
        %v2567 = vsel %vm280, %v2564, %v2566
        %v2568 = vsel %vm280, %v2566, %v2564
        %v2569 = vsel %vm292, %v2568, 0.0
        %v2570 = vsel %vm293, %v2567, 0.0
        %v2571 = vld [vmem:[#allocation6 + $0xf0] sm:$0xf]
        %v2572 = vpack.c.bf16 %v2569, %v2569
        %v2573 = vpack.c.bf16 %v2570, %v2570
        %v2574 = vld [vmem:[#allocation6 + $0xf8] sm:$0xf]
        %v2575 = vpack.c.bf16 %v2561, %v2561
        %v2576 = vpack.c.bf16 %v2562, %v2562
        %v2578 = vsel %vm302, %v2574, 0
        %v2581 = vsel %vm306, %v2575, 0
        %v2584 = vsel %vm306, %v2576, 0
        %2586 = vmatprep.subr.bf16.mxu0 %v2584
        %2587 = vmatpush1.bf16.msra.mxu0 %v2581
        %2588 = vmatprep.subr.bf16.mxu0 0
        %2589 = vmatpush1.bf16.msra.mxu0 0
        %2590 = vmatprep.subr.bf16.mxu0 0
        %2591 = vmatpush1.bf16.msra.mxu0 0
        %2592 = vmatprep.subr.bf16.mxu0 0
        %2593 = vmatpush1.bf16.msra.mxu0 0
        %2594 = vmatprep.subr.bf16.mxu0 0
        %2595 = vmatpush1.bf16.msra.mxu0 0
        %2596 = vmatprep.subr.bf16.mxu0 0
        %2597 = vmatpush1.bf16.msra.mxu0 0
        %2598 = vmatprep.subr.bf16.mxu0 0
        %2599 = vmatpush1.bf16.msra.mxu0 0
        %2600 = vmatprep.subr.bf16.mxu0 0
        %2601 = vmatpush1.bf16.msra.mxu0 0
        %2602 = vmatprep.subr.bf16.mxu0 0
        %2603 = vmatpush1.bf16.msra.mxu0 0
        %2604 = vmatprep.subr.bf16.mxu0 0
        %2605 = vmatpush1.bf16.msra.mxu0 0
        %2606 = vmatprep.subr.bf16.mxu0 0
        %2607 = vmatpush1.bf16.msra.mxu0 0
        %2608 = vmatprep.subr.bf16.mxu0 0
        %2609 = vmatpush1.bf16.msra.mxu0 0
        %2610 = vmatprep.subr.bf16.mxu0 0
        %2611 = vmatpush1.bf16.msra.mxu0 0
        %2612 = vmatprep.subr.bf16.mxu0 0
        %2613 = vmatpush1.bf16.msra.mxu0 0
        %2614 = vmatprep.subr.bf16.mxu0 0
        %2615 = vmatpush1.bf16.msra.mxu0 0
        %2616 = vmatprep.subr.bf16.mxu0 0
        %2617 = vmatpush1.bf16.msra.mxu0 0
        %2618 = vmatprep.mubr.bf16.mxu0 0
        %2619 = vmatmul.mubr.bf16.gmra.mrb[0].mxu0 %v2578
        %v2620 = vpop.f32.mrb[0].mxu0
        %v2621 = vadd.f32 0.0, %v2620
        %v2622 = vpop.f32.mrb[0].mxu0
        %v2623 = vadd.f32 0.0, %v2622
        %v2624 = vpop.f32.mrb[0].mxu0
        %v2625 = vpop.f32.mrb[0].mxu0
        %2626 = vdwg.mxu0
        %v2628 = vsel %vm302, %v2571, 0
        %v2631 = vsel %vm306, %v2572, 0
        %v2634 = vsel %vm306, %v2573, 0
        %2636 = vmatprep.subr.bf16.mxu0 %v2634
        %2637 = vmatpush1.bf16.msra.mxu0 %v2631
        %2638 = vmatprep.subr.bf16.mxu0 0
        %2639 = vmatpush1.bf16.msra.mxu0 0
        %2640 = vmatprep.subr.bf16.mxu0 0
        %2641 = vmatpush1.bf16.msra.mxu0 0
        %2642 = vmatprep.subr.bf16.mxu0 0
        %2643 = vmatpush1.bf16.msra.mxu0 0
        %2644 = vmatprep.subr.bf16.mxu0 0
        %2645 = vmatpush1.bf16.msra.mxu0 0
        %2646 = vmatprep.subr.bf16.mxu0 0
        %2647 = vmatpush1.bf16.msra.mxu0 0
        %2648 = vmatprep.subr.bf16.mxu0 0
        %2649 = vmatpush1.bf16.msra.mxu0 0
        %2650 = vmatprep.subr.bf16.mxu0 0
        %2651 = vmatpush1.bf16.msra.mxu0 0
        %2652 = vmatprep.subr.bf16.mxu0 0
        %2653 = vmatpush1.bf16.msra.mxu0 0
        %2654 = vmatprep.subr.bf16.mxu0 0
        %2655 = vmatpush1.bf16.msra.mxu0 0
        %2656 = vmatprep.subr.bf16.mxu0 0
        %2657 = vmatpush1.bf16.msra.mxu0 0
        %2658 = vmatprep.subr.bf16.mxu0 0
        %2659 = vmatpush1.bf16.msra.mxu0 0
        %2660 = vmatprep.subr.bf16.mxu0 0
        %2661 = vmatpush1.bf16.msra.mxu0 0
        %2662 = vmatprep.subr.bf16.mxu0 0
        %2663 = vmatpush1.bf16.msra.mxu0 0
        %2664 = vmatprep.subr.bf16.mxu0 0
        %2665 = vmatpush1.bf16.msra.mxu0 0
        %2666 = vmatprep.subr.bf16.mxu0 0
        %2667 = vmatpush1.bf16.msra.mxu0 0
        %2668 = vmatprep.mubr.bf16.mxu0 0
        %2669 = vmatmul.mubr.bf16.gmra.mrb[0].mxu0 %v2628
        %v2670 = vpop.f32.mrb[0].mxu0
        %v2671 = vadd.f32 %v2621, %v2670
        %v2672 = vpop.f32.mrb[0].mxu0
        %v2673 = vadd.f32 %v2623, %v2672
        %v2674 = vpop.f32.mrb[0].mxu0
        %v2675 = vpop.f32.mrb[0].mxu0
        %2676 = vdwg.mxu0
        %v2677 = vld [vmem:[#allocation7 + $0xd8] sm:$0xff]
        %2679 = vset.pattern.permute.xlu0 0
        %2680 = vperm.xlu0 %2679, %v2677
        %v2681 = vpop.permute.xlu0 %2680
        %v2683 = vadd.f32 %v2671, %v2681
        %v2684 = vadd.f32 %v2673, %v2681
        %s2685 = sld [smem:[#allocation2 + $0x13]]
        %vm2686 = vcmp.ge.f32.partialorder %v2683, 0.0
        %vm2687 = vcmp.ge.f32.partialorder %v2684, 0.0
        %v2688 = vstv %s2685
        %v2689 = vmul.f32 %v2688, %v2683
        %v2690 = vmul.f32 %v2688, %v2684
        %v2691 = vsel %vm2686, %v2683, %v2689
        %v2692 = vsel %vm2687, %v2684, %v2690
        %v2693 = vadd.f32 %v2691, %v2431
        %v2694 = vadd.f32 %v2692, %v2432
        %s2695 = sld [smem:[#allocation2 + $0x14]]
        %vm2696 = vcmp.ge.f32.partialorder %v2693, 0.0
        %vm2697 = vcmp.ge.f32.partialorder %v2694, 0.0
        %v2698 = vstv %s2695
        %v2699 = vmul.f32 %v2698, %v2693
        %v2700 = vmul.f32 %v2698, %v2694
        %v2701 = vsel %vm2696, %v2693, %v2699
        %v2702 = vsel %vm2697, %v2694, %v2700
        %2703 = vrot.lane.b32.xlu0 %v2701, 2
        %v2704 = vpop.permute.xlu0 %2703
        %2705 = vrot.lane.b32.xlu0 %v2702, 2
        %v2706 = vpop.permute.xlu0 %2705
        %v2707 = vsel %vm565, %v2704, %v2706
        %v2708 = vsel %vm565, %v2706, %v2704
        %v2709 = vsel %vm577, %v2708, 0.0
        %v2710 = vsel %vm578, %v2707, 0.0
        %v2711 = vld [vmem:[#allocation6 + $0x100] sm:$0xf]
        %v2712 = vld [vmem:[#allocation6 + $0x104] sm:$0xf]
        %v2713 = vpack.c.bf16 %v2709, %v2709
        %v2714 = vpack.c.bf16 %v2710, %v2710
        %v2715 = vld [vmem:[#allocation6 + $0x108] sm:$0xf]
        %v2716 = vld [vmem:[#allocation6 + $0x10c] sm:$0xf]
        %v2717 = vpack.c.bf16 %v2701, %v2701
        %v2718 = vpack.c.bf16 %v2702, %v2702
        %v2721 = vunpack.c.l.b16 %v2715
        %v2722 = vunpack.c.l.b16 %v2716
        %v2723 = vpack.c.b16 %v2722, %v2721
        %v2725 = vsel %vm302, %v2723, 0
        %v2728 = vsel %vm306, %v2717, 0
        %v2731 = vsel %vm306, %v2718, 0
        %2733 = vmatprep.subr.bf16.mxu0 %v2731
        %2734 = vmatpush1.bf16.msra.mxu0 %v2728
        %2735 = vmatprep.subr.bf16.mxu0 0
        %2736 = vmatpush1.bf16.msra.mxu0 0
        %2737 = vmatprep.subr.bf16.mxu0 0
        %2738 = vmatpush1.bf16.msra.mxu0 0
        %2739 = vmatprep.subr.bf16.mxu0 0
        %2740 = vmatpush1.bf16.msra.mxu0 0
        %2741 = vmatprep.subr.bf16.mxu0 0
        %2742 = vmatpush1.bf16.msra.mxu0 0
        %2743 = vmatprep.subr.bf16.mxu0 0
        %2744 = vmatpush1.bf16.msra.mxu0 0
        %2745 = vmatprep.subr.bf16.mxu0 0
        %2746 = vmatpush1.bf16.msra.mxu0 0
        %2747 = vmatprep.subr.bf16.mxu0 0
        %2748 = vmatpush1.bf16.msra.mxu0 0
        %2749 = vmatprep.subr.bf16.mxu0 0
        %2750 = vmatpush1.bf16.msra.mxu0 0
        %2751 = vmatprep.subr.bf16.mxu0 0
        %2752 = vmatpush1.bf16.msra.mxu0 0
        %2753 = vmatprep.subr.bf16.mxu0 0
        %2754 = vmatpush1.bf16.msra.mxu0 0
        %2755 = vmatprep.subr.bf16.mxu0 0
        %2756 = vmatpush1.bf16.msra.mxu0 0
        %2757 = vmatprep.subr.bf16.mxu0 0
        %2758 = vmatpush1.bf16.msra.mxu0 0
        %2759 = vmatprep.subr.bf16.mxu0 0
        %2760 = vmatpush1.bf16.msra.mxu0 0
        %2761 = vmatprep.subr.bf16.mxu0 0
        %2762 = vmatpush1.bf16.msra.mxu0 0
        %2763 = vmatprep.subr.bf16.mxu0 0
        %2764 = vmatpush1.bf16.msra.mxu0 0
        %2765 = vmatprep.mubr.bf16.mxu0 0
        %2766 = vmatmul.mubr.bf16.gmra.mrb[0].mxu0 %v2725
        %v2767 = vpop.f32.mrb[0].mxu0
        %v2768 = vadd.f32 0.0, %v2767
        %v2769 = vpop.f32.mrb[0].mxu0
        %v2770 = vadd.f32 0.0, %v2769
        %v2771 = vpop.f32.mrb[0].mxu0
        %v2772 = vadd.f32 0.0, %v2771
        %v2773 = vpop.f32.mrb[0].mxu0
        %v2774 = vadd.f32 0.0, %v2773
        %2775 = vdwg.mxu0
        %v2778 = vunpack.c.l.b16 %v2711
        %v2779 = vunpack.c.l.b16 %v2712
        %v2780 = vpack.c.b16 %v2779, %v2778
        %v2782 = vsel %vm302, %v2780, 0
        %v2785 = vsel %vm306, %v2713, 0
        %v2788 = vsel %vm306, %v2714, 0
        %2790 = vmatprep.subr.bf16.mxu0 %v2788
        %2791 = vmatpush1.bf16.msra.mxu0 %v2785
        %2792 = vmatprep.subr.bf16.mxu0 0
        %2793 = vmatpush1.bf16.msra.mxu0 0
        %2794 = vmatprep.subr.bf16.mxu0 0
        %2795 = vmatpush1.bf16.msra.mxu0 0
        %2796 = vmatprep.subr.bf16.mxu0 0
        %2797 = vmatpush1.bf16.msra.mxu0 0
        %2798 = vmatprep.subr.bf16.mxu0 0
        %2799 = vmatpush1.bf16.msra.mxu0 0
        %2800 = vmatprep.subr.bf16.mxu0 0
        %2801 = vmatpush1.bf16.msra.mxu0 0
        %2802 = vmatprep.subr.bf16.mxu0 0
        %2803 = vmatpush1.bf16.msra.mxu0 0
        %2804 = vmatprep.subr.bf16.mxu0 0
        %2805 = vmatpush1.bf16.msra.mxu0 0
        %2806 = vmatprep.subr.bf16.mxu0 0
        %2807 = vmatpush1.bf16.msra.mxu0 0
        %2808 = vmatprep.subr.bf16.mxu0 0
        %2809 = vmatpush1.bf16.msra.mxu0 0
        %2810 = vmatprep.subr.bf16.mxu0 0
        %2811 = vmatpush1.bf16.msra.mxu0 0
        %2812 = vmatprep.subr.bf16.mxu0 0
        %2813 = vmatpush1.bf16.msra.mxu0 0
        %2814 = vmatprep.subr.bf16.mxu0 0
        %2815 = vmatpush1.bf16.msra.mxu0 0
        %2816 = vmatprep.subr.bf16.mxu0 0
        %2817 = vmatpush1.bf16.msra.mxu0 0
        %2818 = vmatprep.subr.bf16.mxu0 0
        %2819 = vmatpush1.bf16.msra.mxu0 0
        %2820 = vmatprep.subr.bf16.mxu0 0
        %2821 = vmatpush1.bf16.msra.mxu0 0
        %2822 = vmatprep.mubr.bf16.mxu0 0
        %2823 = vmatmul.mubr.bf16.gmra.mrb[0].mxu0 %v2782
        %v2824 = vpop.f32.mrb[0].mxu0
        %v2825 = vadd.f32 %v2768, %v2824
        %v2826 = vpop.f32.mrb[0].mxu0
        %v2827 = vadd.f32 %v2770, %v2826
        %v2828 = vpop.f32.mrb[0].mxu0
        %v2829 = vadd.f32 %v2772, %v2828
        %v2830 = vpop.f32.mrb[0].mxu0
        %v2831 = vadd.f32 %v2774, %v2830
        %2832 = vdwg.mxu0
        %v2833 = vld [vmem:[#allocation7 + $0xe0] sm:$0xff]
        %v2834 = vld [vmem:[#allocation7 + $0xe8] sm:$0xff]
        %2836 = vset.pattern.permute.xlu0 0
        %2837 = vperm.xlu0 %2836, %v2833
        %v2838 = vpop.permute.xlu0 %2837
        %2841 = vset.pattern.permute.xlu0 0
        %2842 = vperm.xlu0 %2841, %v2834
        %v2843 = vpop.permute.xlu0 %2842
        %v2845 = vadd.f32 %v2825, %v2838
        %v2846 = vadd.f32 %v2827, %v2838
        %v2847 = vadd.f32 %v2829, %v2843
        %v2848 = vadd.f32 %v2831, %v2843
        %s2849 = sld [smem:[#allocation2 + $0x15]]
        %vm2850 = vcmp.ge.f32.partialorder %v2845, 0.0
        %vm2851 = vcmp.ge.f32.partialorder %v2846, 0.0
        %vm2852 = vcmp.ge.f32.partialorder %v2847, 0.0
        %vm2853 = vcmp.ge.f32.partialorder %v2848, 0.0
        %v2854 = vstv %s2849
        %v2855 = vmul.f32 %v2854, %v2845
        %v2856 = vmul.f32 %v2854, %v2846
        %v2857 = vmul.f32 %v2854, %v2847
        %v2858 = vmul.f32 %v2854, %v2848
        %v2859 = vsel %vm2850, %v2845, %v2855
        %v2860 = vsel %vm2851, %v2846, %v2856
        %v2861 = vsel %vm2852, %v2847, %v2857
        %v2862 = vsel %vm2853, %v2848, %v2858
        %2863 = vrot.lane.b32.xlu0 %v2859, 2
        %v2864 = vpop.permute.xlu0 %2863
        %2865 = vrot.lane.b32.xlu0 %v2861, 2
        %v2866 = vpop.permute.xlu0 %2865
        %2867 = vrot.lane.b32.xlu0 %v2860, 2
        %v2868 = vpop.permute.xlu0 %2867
        %2869 = vrot.lane.b32.xlu0 %v2862, 2
        %v2870 = vpop.permute.xlu0 %2869
        %v2871 = vsel %vm565, %v2864, %v2868
        %v2872 = vsel %vm565, %v2866, %v2870
        %v2873 = vsel %vm565, %v2868, %v2864
        %v2874 = vsel %vm565, %v2870, %v2866
        %v2875 = vsel %vm577, %v2873, 0.0
        %v2876 = vsel %vm578, %v2871, 0.0
        %v2877 = vsel %vm577, %v2874, 0.0
        %v2878 = vsel %vm578, %v2872, 0.0
        %v2879 = vld [vmem:[#allocation6 + $0x110] sm:$0xf]
        %v2880 = vld [vmem:[#allocation6 + $0x114] sm:$0xf]
        %v2881 = vpack.c.bf16 %v2877, %v2875
        %v2882 = vpack.c.bf16 %v2878, %v2876
        %v2883 = vld [vmem:[#allocation6 + $0x118] sm:$0xf]
        %v2884 = vld [vmem:[#allocation6 + $0x11c] sm:$0xf]
        %v2885 = vpack.c.bf16 %v2861, %v2859
        %v2886 = vpack.c.bf16 %v2862, %v2860
        %v2889 = vunpack.c.l.b16 %v2883
        %v2890 = vunpack.c.l.b16 %v2884
        %v2891 = vpack.c.b16 %v2890, %v2889
        %v2893 = vsel %vm762, %v2891, 0
        %2895 = vmatprep.subr.bf16.mxu0 %v2886
        %2896 = vmatpush1.bf16.msra.mxu0 %v2885
        %2897 = vmatprep.subr.bf16.mxu0 0
        %2898 = vmatpush1.bf16.msra.mxu0 0
        %2899 = vmatprep.subr.bf16.mxu0 0
        %2900 = vmatpush1.bf16.msra.mxu0 0
        %2901 = vmatprep.subr.bf16.mxu0 0
        %2902 = vmatpush1.bf16.msra.mxu0 0
        %2903 = vmatprep.subr.bf16.mxu0 0
        %2904 = vmatpush1.bf16.msra.mxu0 0
        %2905 = vmatprep.subr.bf16.mxu0 0
        %2906 = vmatpush1.bf16.msra.mxu0 0
        %2907 = vmatprep.subr.bf16.mxu0 0
        %2908 = vmatpush1.bf16.msra.mxu0 0
        %2909 = vmatprep.subr.bf16.mxu0 0
        %2910 = vmatpush1.bf16.msra.mxu0 0
        %2911 = vmatprep.subr.bf16.mxu0 0
        %2912 = vmatpush1.bf16.msra.mxu0 0
        %2913 = vmatprep.subr.bf16.mxu0 0
        %2914 = vmatpush1.bf16.msra.mxu0 0
        %2915 = vmatprep.subr.bf16.mxu0 0
        %2916 = vmatpush1.bf16.msra.mxu0 0
        %2917 = vmatprep.subr.bf16.mxu0 0
        %2918 = vmatpush1.bf16.msra.mxu0 0
        %2919 = vmatprep.subr.bf16.mxu0 0
        %2920 = vmatpush1.bf16.msra.mxu0 0
        %2921 = vmatprep.subr.bf16.mxu0 0
        %2922 = vmatpush1.bf16.msra.mxu0 0
        %2923 = vmatprep.subr.bf16.mxu0 0
        %2924 = vmatpush1.bf16.msra.mxu0 0
        %2925 = vmatprep.subr.bf16.mxu0 0
        %2926 = vmatpush1.bf16.msra.mxu0 0
        %2927 = vmatprep.mubr.bf16.mxu0 0
        %2928 = vmatmul.mubr.bf16.gmra.mrb[0].mxu0 %v2893
        %v2929 = vpop.f32.mrb[0].mxu0
        %v2930 = vadd.f32 0.0, %v2929
        %v2931 = vpop.f32.mrb[0].mxu0
        %v2932 = vadd.f32 0.0, %v2931
        %v2933 = vpop.f32.mrb[0].mxu0
        %v2934 = vadd.f32 0.0, %v2933
        %v2935 = vpop.f32.mrb[0].mxu0
        %v2936 = vadd.f32 0.0, %v2935
        %2937 = vdwg.mxu0
        %v2940 = vunpack.c.l.b16 %v2879
        %v2941 = vunpack.c.l.b16 %v2880
        %v2942 = vpack.c.b16 %v2941, %v2940
        %v2944 = vsel %vm762, %v2942, 0
        %2946 = vmatprep.subr.bf16.mxu0 %v2882
        %2947 = vmatpush1.bf16.msra.mxu0 %v2881
        %2948 = vmatprep.subr.bf16.mxu0 0
        %2949 = vmatpush1.bf16.msra.mxu0 0
        %2950 = vmatprep.subr.bf16.mxu0 0
        %2951 = vmatpush1.bf16.msra.mxu0 0
        %2952 = vmatprep.subr.bf16.mxu0 0
        %2953 = vmatpush1.bf16.msra.mxu0 0
        %2954 = vmatprep.subr.bf16.mxu0 0
        %2955 = vmatpush1.bf16.msra.mxu0 0
        %2956 = vmatprep.subr.bf16.mxu0 0
        %2957 = vmatpush1.bf16.msra.mxu0 0
        %2958 = vmatprep.subr.bf16.mxu0 0
        %2959 = vmatpush1.bf16.msra.mxu0 0
        %2960 = vmatprep.subr.bf16.mxu0 0
        %2961 = vmatpush1.bf16.msra.mxu0 0
        %2962 = vmatprep.subr.bf16.mxu0 0
        %2963 = vmatpush1.bf16.msra.mxu0 0
        %2964 = vmatprep.subr.bf16.mxu0 0
        %2965 = vmatpush1.bf16.msra.mxu0 0
        %2966 = vmatprep.subr.bf16.mxu0 0
        %2967 = vmatpush1.bf16.msra.mxu0 0
        %2968 = vmatprep.subr.bf16.mxu0 0
        %2969 = vmatpush1.bf16.msra.mxu0 0
        %2970 = vmatprep.subr.bf16.mxu0 0
        %2971 = vmatpush1.bf16.msra.mxu0 0
        %2972 = vmatprep.subr.bf16.mxu0 0
        %2973 = vmatpush1.bf16.msra.mxu0 0
        %2974 = vmatprep.subr.bf16.mxu0 0
        %2975 = vmatpush1.bf16.msra.mxu0 0
        %2976 = vmatprep.subr.bf16.mxu0 0
        %2977 = vmatpush1.bf16.msra.mxu0 0
        %2978 = vmatprep.mubr.bf16.mxu0 0
        %2979 = vmatmul.mubr.bf16.gmra.mrb[0].mxu0 %v2944
        %v2980 = vpop.f32.mrb[0].mxu0
        %v2981 = vadd.f32 %v2930, %v2980
        %v2982 = vpop.f32.mrb[0].mxu0
        %v2983 = vadd.f32 %v2932, %v2982
        %v2984 = vpop.f32.mrb[0].mxu0
        %v2985 = vadd.f32 %v2934, %v2984
        %v2986 = vpop.f32.mrb[0].mxu0
        %v2987 = vadd.f32 %v2936, %v2986
        %2988 = vdwg.mxu0
        %v2989 = vld [vmem:[#allocation7 + $0xf0] sm:$0xff]
        %v2990 = vld [vmem:[#allocation7 + $0xf8] sm:$0xff]
        %2992 = vset.pattern.permute.xlu0 0
        %2993 = vperm.xlu0 %2992, %v2989
        %v2994 = vpop.permute.xlu0 %2993
        %2997 = vset.pattern.permute.xlu0 0
        %2998 = vperm.xlu0 %2997, %v2990
        %v2999 = vpop.permute.xlu0 %2998
        %v3001 = vadd.f32 %v2981, %v2994
        %v3002 = vadd.f32 %v2983, %v2994
        %v3003 = vadd.f32 %v2985, %v2999
        %v3004 = vadd.f32 %v2987, %v2999
        %s3005 = sld [smem:[#allocation2 + $0x16]]
        %vm3006 = vcmp.ge.f32.partialorder %v3001, 0.0
        %vm3007 = vcmp.ge.f32.partialorder %v3002, 0.0
        %vm3008 = vcmp.ge.f32.partialorder %v3003, 0.0
        %vm3009 = vcmp.ge.f32.partialorder %v3004, 0.0
        %v3010 = vstv %s3005
        %v3011 = vmul.f32 %v3010, %v3001
        %v3012 = vmul.f32 %v3010, %v3002
        %v3013 = vmul.f32 %v3010, %v3003
        %v3014 = vmul.f32 %v3010, %v3004
        %v3015 = vsel %vm3006, %v3001, %v3011
        %v3016 = vsel %vm3007, %v3002, %v3012
        %v3017 = vsel %vm3008, %v3003, %v3013
        %v3018 = vsel %vm3009, %v3004, %v3014
        %v3019 = vld [vmem:[#allocation6 + $0x120] sm:$0xf]
        %v3020 = vld [vmem:[#allocation6 + $0x124] sm:$0xf]
        %v3021 = vld [vmem:[#allocation7 + $0x100] sm:$0xff]
        %v3022 = vld [vmem:[#allocation7 + $0x108] sm:$0xff]
        %3024 = vset.pattern.permute.xlu0 0
        %3025 = vperm.xlu0 %3024, %v3021
        %v3026 = vpop.permute.xlu0 %3025
        %3029 = vset.pattern.permute.xlu0 0
        %3030 = vperm.xlu0 %3029, %v3022
        %v3031 = vpop.permute.xlu0 %3030
        %v3035 = vunpack.c.l.b16 %v3019
        %v3036 = vunpack.c.l.b16 %v3020
        %v3037 = vpack.c.b16 %v3036, %v3035
        %v3039 = vsel %vm302, %v3037, 0
        %3041 = vmatprep.subr.bf16.mxu0 %v2731
        %3042 = vmatpush1.bf16.msra.mxu0 %v2728
        %3043 = vmatprep.subr.bf16.mxu0 0
        %3044 = vmatpush1.bf16.msra.mxu0 0
        %3045 = vmatprep.subr.bf16.mxu0 0
        %3046 = vmatpush1.bf16.msra.mxu0 0
        %3047 = vmatprep.subr.bf16.mxu0 0
        %3048 = vmatpush1.bf16.msra.mxu0 0
        %3049 = vmatprep.subr.bf16.mxu0 0
        %3050 = vmatpush1.bf16.msra.mxu0 0
        %3051 = vmatprep.subr.bf16.mxu0 0
        %3052 = vmatpush1.bf16.msra.mxu0 0
        %3053 = vmatprep.subr.bf16.mxu0 0
        %3054 = vmatpush1.bf16.msra.mxu0 0
        %3055 = vmatprep.subr.bf16.mxu0 0
        %3056 = vmatpush1.bf16.msra.mxu0 0
        %3057 = vmatprep.subr.bf16.mxu0 0
        %3058 = vmatpush1.bf16.msra.mxu0 0
        %3059 = vmatprep.subr.bf16.mxu0 0
        %3060 = vmatpush1.bf16.msra.mxu0 0
        %3061 = vmatprep.subr.bf16.mxu0 0
        %3062 = vmatpush1.bf16.msra.mxu0 0
        %3063 = vmatprep.subr.bf16.mxu0 0
        %3064 = vmatpush1.bf16.msra.mxu0 0
        %3065 = vmatprep.subr.bf16.mxu0 0
        %3066 = vmatpush1.bf16.msra.mxu0 0
        %3067 = vmatprep.subr.bf16.mxu0 0
        %3068 = vmatpush1.bf16.msra.mxu0 0
        %3069 = vmatprep.subr.bf16.mxu0 0
        %3070 = vmatpush1.bf16.msra.mxu0 0
        %3071 = vmatprep.subr.bf16.mxu0 0
        %3072 = vmatpush1.bf16.msra.mxu0 0
        %3073 = vmatprep.mubr.bf16.mxu0 0
        %3074 = vmatmul.mubr.bf16.gmra.mrb[0].mxu0 %v3039
        %v3075 = vpop.f32.mrb[0].mxu0
        %v3076 = vadd.f32 %v3026, %v3075
        %v3077 = vpop.f32.mrb[0].mxu0
        %v3078 = vadd.f32 %v3026, %v3077
        %v3079 = vpop.f32.mrb[0].mxu0
        %v3080 = vadd.f32 %v3031, %v3079
        %v3081 = vpop.f32.mrb[0].mxu0
        %v3082 = vadd.f32 %v3031, %v3081
        %3083 = vdwg.mxu0
        %v3084 = vadd.f32 %v3015, %v3076
        %v3085 = vadd.f32 %v3016, %v3078
        %v3086 = vadd.f32 %v3017, %v3080
        %v3087 = vadd.f32 %v3018, %v3082
        %s3088 = sld [smem:[#allocation2 + $0x17]]
        %vm3089 = vcmp.ge.f32.partialorder %v3084, 0.0
        %vm3090 = vcmp.ge.f32.partialorder %v3085, 0.0
        %vm3091 = vcmp.ge.f32.partialorder %v3086, 0.0
        %vm3092 = vcmp.ge.f32.partialorder %v3087, 0.0
        %v3093 = vstv %s3088
        %v3094 = vmul.f32 %v3093, %v3084
        %v3095 = vmul.f32 %v3093, %v3085
        %v3096 = vmul.f32 %v3093, %v3086
        %v3097 = vmul.f32 %v3093, %v3087
        %v3098 = vsel %vm3089, %v3084, %v3094
        %v3099 = vsel %vm3090, %v3085, %v3095
        %v3100 = vsel %vm3091, %v3086, %v3096
        %v3101 = vsel %vm3092, %v3087, %v3097
        %3102 = vrot.lane.b32.xlu0 %v3098, 4
        %v3103 = vpop.permute.xlu0 %3102
        %3104 = vrot.lane.b32.xlu0 %v3100, 4
        %v3105 = vpop.permute.xlu0 %3104
        %3106 = vrot.lane.b32.xlu0 %v3099, 4
        %v3107 = vpop.permute.xlu0 %3106
        %3108 = vrot.lane.b32.xlu0 %v3101, 4
        %v3109 = vpop.permute.xlu0 %3108
        %v3110 = vsel %vm982, %v3103, %v3107
        %v3111 = vsel %vm982, %v3105, %v3109
        %v3112 = vsel %vm982, %v3107, %v3103
        %v3113 = vsel %vm982, %v3109, %v3105
        %v3114 = vsel %vm996, %v3112, 0.0
        %v3115 = vsel %vm997, %v3110, 0.0
        %v3116 = vsel %vm996, %v3113, 0.0
        %v3117 = vsel %vm997, %v3111, 0.0
        %v3118 = vld [vmem:[#allocation6 + $0x128] sm:$0xf]
        %v3119 = vpack.c.bf16 %v3116, %v3114
        %v3120 = vpack.c.bf16 %v3117, %v3115
        %v3121 = vld [vmem:[#allocation6 + $0x130] sm:$0xf]
        %v3122 = vpack.c.bf16 %v3100, %v3098
        %v3123 = vpack.c.bf16 %v3101, %v3099
        %v3125 = vsel %vm762, %v3121, 0
        %3127 = vmatprep.subr.bf16.mxu0 %v3123
        %3128 = vmatpush1.bf16.msra.mxu0 %v3122
        %3129 = vmatprep.subr.bf16.mxu0 0
        %3130 = vmatpush1.bf16.msra.mxu0 0
        %3131 = vmatprep.subr.bf16.mxu0 0
        %3132 = vmatpush1.bf16.msra.mxu0 0
        %3133 = vmatprep.subr.bf16.mxu0 0
        %3134 = vmatpush1.bf16.msra.mxu0 0
        %3135 = vmatprep.subr.bf16.mxu0 0
        %3136 = vmatpush1.bf16.msra.mxu0 0
        %3137 = vmatprep.subr.bf16.mxu0 0
        %3138 = vmatpush1.bf16.msra.mxu0 0
        %3139 = vmatprep.subr.bf16.mxu0 0
        %3140 = vmatpush1.bf16.msra.mxu0 0
        %3141 = vmatprep.subr.bf16.mxu0 0
        %3142 = vmatpush1.bf16.msra.mxu0 0
        %3143 = vmatprep.subr.bf16.mxu0 0
        %3144 = vmatpush1.bf16.msra.mxu0 0
        %3145 = vmatprep.subr.bf16.mxu0 0
        %3146 = vmatpush1.bf16.msra.mxu0 0
        %3147 = vmatprep.subr.bf16.mxu0 0
        %3148 = vmatpush1.bf16.msra.mxu0 0
        %3149 = vmatprep.subr.bf16.mxu0 0
        %3150 = vmatpush1.bf16.msra.mxu0 0
        %3151 = vmatprep.subr.bf16.mxu0 0
        %3152 = vmatpush1.bf16.msra.mxu0 0
        %3153 = vmatprep.subr.bf16.mxu0 0
        %3154 = vmatpush1.bf16.msra.mxu0 0
        %3155 = vmatprep.subr.bf16.mxu0 0
        %3156 = vmatpush1.bf16.msra.mxu0 0
        %3157 = vmatprep.subr.bf16.mxu0 0
        %3158 = vmatpush1.bf16.msra.mxu0 0
        %3159 = vmatprep.mubr.bf16.mxu0 0
        %3160 = vmatmul.mubr.bf16.gmra.mrb[0].mxu0 %v3125
        %v3161 = vpop.f32.mrb[0].mxu0
        %v3162 = vadd.f32 0.0, %v3161
        %v3163 = vpop.f32.mrb[0].mxu0
        %v3164 = vadd.f32 0.0, %v3163
        %v3165 = vpop.f32.mrb[0].mxu0
        %v3166 = vpop.f32.mrb[0].mxu0
        %3167 = vdwg.mxu0
        %v3169 = vsel %vm762, %v3118, 0
        %3171 = vmatprep.subr.bf16.mxu0 %v3120
        %3172 = vmatpush1.bf16.msra.mxu0 %v3119
        %3173 = vmatprep.subr.bf16.mxu0 0
        %3174 = vmatpush1.bf16.msra.mxu0 0
        %3175 = vmatprep.subr.bf16.mxu0 0
        %3176 = vmatpush1.bf16.msra.mxu0 0
        %3177 = vmatprep.subr.bf16.mxu0 0
        %3178 = vmatpush1.bf16.msra.mxu0 0
        %3179 = vmatprep.subr.bf16.mxu0 0
        %3180 = vmatpush1.bf16.msra.mxu0 0
        %3181 = vmatprep.subr.bf16.mxu0 0
        %3182 = vmatpush1.bf16.msra.mxu0 0
        %3183 = vmatprep.subr.bf16.mxu0 0
        %3184 = vmatpush1.bf16.msra.mxu0 0
        %3185 = vmatprep.subr.bf16.mxu0 0
        %3186 = vmatpush1.bf16.msra.mxu0 0
        %3187 = vmatprep.subr.bf16.mxu0 0
        %3188 = vmatpush1.bf16.msra.mxu0 0
        %3189 = vmatprep.subr.bf16.mxu0 0
        %3190 = vmatpush1.bf16.msra.mxu0 0
        %3191 = vmatprep.subr.bf16.mxu0 0
        %3192 = vmatpush1.bf16.msra.mxu0 0
        %3193 = vmatprep.subr.bf16.mxu0 0
        %3194 = vmatpush1.bf16.msra.mxu0 0
        %3195 = vmatprep.subr.bf16.mxu0 0
        %3196 = vmatpush1.bf16.msra.mxu0 0
        %3197 = vmatprep.subr.bf16.mxu0 0
        %3198 = vmatpush1.bf16.msra.mxu0 0
        %3199 = vmatprep.subr.bf16.mxu0 0
        %3200 = vmatpush1.bf16.msra.mxu0 0
        %3201 = vmatprep.subr.bf16.mxu0 0
        %3202 = vmatpush1.bf16.msra.mxu0 0
        %3203 = vmatprep.mubr.bf16.mxu0 0
        %3204 = vmatmul.mubr.bf16.gmra.mrb[0].mxu0 %v3169
        %v3205 = vpop.f32.mrb[0].mxu0
        %v3206 = vadd.f32 %v3162, %v3205
        %v3207 = vpop.f32.mrb[0].mxu0
        %v3208 = vadd.f32 %v3164, %v3207
        %v3209 = vpop.f32.mrb[0].mxu0
        %v3210 = vpop.f32.mrb[0].mxu0
        %3211 = vdwg.mxu0
        %v3212 = vld [vmem:[#allocation7 + $0x110] sm:$0xff]
        %3214 = vset.pattern.permute.xlu0 0
        %3215 = vperm.xlu0 %3214, %v3212
        %v3216 = vpop.permute.xlu0 %3215
        %v3218 = vadd.f32 %v3206, %v3216
        %v3219 = vadd.f32 %v3208, %v3216
        %s3220 = sld [smem:[#allocation2 + $0x18]]
        %vm3221 = vcmp.ge.f32.partialorder %v3218, 0.0
        %vm3222 = vcmp.ge.f32.partialorder %v3219, 0.0
        %v3223 = vstv %s3220
        %v3224 = vmul.f32 %v3223, %v3218
        %v3225 = vmul.f32 %v3223, %v3219
        %v3226 = vsel %vm3221, %v3218, %v3224
        %v3227 = vsel %vm3222, %v3219, %v3225
        %3228 = vrot.lane.b32.xlu0 %v3226, 4
        %v3229 = vpop.permute.xlu0 %3228
        %3230 = vrot.lane.b32.xlu0 %v3227, 4
        %v3231 = vpop.permute.xlu0 %3230
        %v3232 = vsel %vm982, %v3229, %v3231
        %v3233 = vsel %vm982, %v3231, %v3229
        %v3234 = vsel %vm996, %v3233, 0.0
        %v3235 = vsel %vm997, %v3232, 0.0
        %v3236 = vld [vmem:[#allocation6 + $0x138] sm:$0xf]
        %v3237 = vpack.c.bf16 %v3234, %v3234
        %v3238 = vpack.c.bf16 %v3235, %v3235
        %v3239 = vld [vmem:[#allocation6 + $0x140] sm:$0xf]
        %v3240 = vpack.c.bf16 %v3226, %v3226
        %v3241 = vpack.c.bf16 %v3227, %v3227
        %v3243 = vsel %vm302, %v3239, 0
        %v3246 = vsel %vm306, %v3240, 0
        %v3249 = vsel %vm306, %v3241, 0
        %3251 = vmatprep.subr.bf16.mxu0 %v3249
        %3252 = vmatpush1.bf16.msra.mxu0 %v3246
        %3253 = vmatprep.subr.bf16.mxu0 0
        %3254 = vmatpush1.bf16.msra.mxu0 0
        %3255 = vmatprep.subr.bf16.mxu0 0
        %3256 = vmatpush1.bf16.msra.mxu0 0
        %3257 = vmatprep.subr.bf16.mxu0 0
        %3258 = vmatpush1.bf16.msra.mxu0 0
        %3259 = vmatprep.subr.bf16.mxu0 0
        %3260 = vmatpush1.bf16.msra.mxu0 0
        %3261 = vmatprep.subr.bf16.mxu0 0
        %3262 = vmatpush1.bf16.msra.mxu0 0
        %3263 = vmatprep.subr.bf16.mxu0 0
        %3264 = vmatpush1.bf16.msra.mxu0 0
        %3265 = vmatprep.subr.bf16.mxu0 0
        %3266 = vmatpush1.bf16.msra.mxu0 0
        %3267 = vmatprep.subr.bf16.mxu0 0
        %3268 = vmatpush1.bf16.msra.mxu0 0
        %3269 = vmatprep.subr.bf16.mxu0 0
        %3270 = vmatpush1.bf16.msra.mxu0 0
        %3271 = vmatprep.subr.bf16.mxu0 0
        %3272 = vmatpush1.bf16.msra.mxu0 0
        %3273 = vmatprep.subr.bf16.mxu0 0
        %3274 = vmatpush1.bf16.msra.mxu0 0
        %3275 = vmatprep.subr.bf16.mxu0 0
        %3276 = vmatpush1.bf16.msra.mxu0 0
        %3277 = vmatprep.subr.bf16.mxu0 0
        %3278 = vmatpush1.bf16.msra.mxu0 0
        %3279 = vmatprep.subr.bf16.mxu0 0
        %3280 = vmatpush1.bf16.msra.mxu0 0
        %3281 = vmatprep.subr.bf16.mxu0 0
        %3282 = vmatpush1.bf16.msra.mxu0 0
        %3283 = vmatprep.mubr.bf16.mxu0 0
        %3284 = vmatmul.mubr.bf16.gmra.mrb[0].mxu0 %v3243
        %v3285 = vpop.f32.mrb[0].mxu0
        %v3286 = vadd.f32 0.0, %v3285
        %v3287 = vpop.f32.mrb[0].mxu0
        %v3288 = vadd.f32 0.0, %v3287
        %v3289 = vpop.f32.mrb[0].mxu0
        %v3290 = vpop.f32.mrb[0].mxu0
        %3291 = vdwg.mxu0
        %v3293 = vsel %vm302, %v3236, 0
        %v3296 = vsel %vm306, %v3237, 0
        %v3299 = vsel %vm306, %v3238, 0
        %3301 = vmatprep.subr.bf16.mxu0 %v3299
        %3302 = vmatpush1.bf16.msra.mxu0 %v3296
        %3303 = vmatprep.subr.bf16.mxu0 0
        %3304 = vmatpush1.bf16.msra.mxu0 0
        %3305 = vmatprep.subr.bf16.mxu0 0
        %3306 = vmatpush1.bf16.msra.mxu0 0
        %3307 = vmatprep.subr.bf16.mxu0 0
        %3308 = vmatpush1.bf16.msra.mxu0 0
        %3309 = vmatprep.subr.bf16.mxu0 0
        %3310 = vmatpush1.bf16.msra.mxu0 0
        %3311 = vmatprep.subr.bf16.mxu0 0
        %3312 = vmatpush1.bf16.msra.mxu0 0
        %3313 = vmatprep.subr.bf16.mxu0 0
        %3314 = vmatpush1.bf16.msra.mxu0 0
        %3315 = vmatprep.subr.bf16.mxu0 0
        %3316 = vmatpush1.bf16.msra.mxu0 0
        %3317 = vmatprep.subr.bf16.mxu0 0
        %3318 = vmatpush1.bf16.msra.mxu0 0
        %3319 = vmatprep.subr.bf16.mxu0 0
        %3320 = vmatpush1.bf16.msra.mxu0 0
        %3321 = vmatprep.subr.bf16.mxu0 0
        %3322 = vmatpush1.bf16.msra.mxu0 0
        %3323 = vmatprep.subr.bf16.mxu0 0
        %3324 = vmatpush1.bf16.msra.mxu0 0
        %3325 = vmatprep.subr.bf16.mxu0 0
        %3326 = vmatpush1.bf16.msra.mxu0 0
        %3327 = vmatprep.subr.bf16.mxu0 0
        %3328 = vmatpush1.bf16.msra.mxu0 0
        %3329 = vmatprep.subr.bf16.mxu0 0
        %3330 = vmatpush1.bf16.msra.mxu0 0
        %3331 = vmatprep.subr.bf16.mxu0 0
        %3332 = vmatpush1.bf16.msra.mxu0 0
        %3333 = vmatprep.mubr.bf16.mxu0 0
        %3334 = vmatmul.mubr.bf16.gmra.mrb[0].mxu0 %v3293
        %v3335 = vpop.f32.mrb[0].mxu0
        %v3336 = vadd.f32 %v3286, %v3335
        %v3337 = vpop.f32.mrb[0].mxu0
        %v3338 = vadd.f32 %v3288, %v3337
        %v3339 = vpop.f32.mrb[0].mxu0
        %v3340 = vpop.f32.mrb[0].mxu0
        %3341 = vdwg.mxu0
        %v3342 = vld [vmem:[#allocation7 + $0x118] sm:$0xff]
        %3344 = vset.pattern.permute.xlu0 0
        %3345 = vperm.xlu0 %3344, %v3342
        %v3346 = vpop.permute.xlu0 %3345
        %v3348 = vadd.f32 %v3336, %v3346
        %v3349 = vadd.f32 %v3338, %v3346
        %s3350 = sld [smem:[#allocation2 + $0x19]]
        %vm3351 = vcmp.ge.f32.partialorder %v3348, 0.0
        %vm3352 = vcmp.ge.f32.partialorder %v3349, 0.0
        %v3353 = vstv %s3350
        %v3354 = vmul.f32 %v3353, %v3348
        %v3355 = vmul.f32 %v3353, %v3349
        %v3356 = vsel %vm3351, %v3348, %v3354
        %v3357 = vsel %vm3352, %v3349, %v3355
        %v3358 = vld [vmem:[#allocation6 + $0x148] sm:$0xf]
        %v3359 = vld [vmem:[#allocation7 + $0x120] sm:$0xff]
        %3361 = vset.pattern.permute.xlu0 0
        %3362 = vperm.xlu0 %3361, %v3359
        %v3363 = vpop.permute.xlu0 %3362
        %v3366 = vsel %vm762, %v3358, 0
        %3368 = vmatprep.subr.bf16.mxu0 %v3123
        %3369 = vmatpush1.bf16.msra.mxu0 %v3122
        %3370 = vmatprep.subr.bf16.mxu0 0
        %3371 = vmatpush1.bf16.msra.mxu0 0
        %3372 = vmatprep.subr.bf16.mxu0 0
        %3373 = vmatpush1.bf16.msra.mxu0 0
        %3374 = vmatprep.subr.bf16.mxu0 0
        %3375 = vmatpush1.bf16.msra.mxu0 0
        %3376 = vmatprep.subr.bf16.mxu0 0
        %3377 = vmatpush1.bf16.msra.mxu0 0
        %3378 = vmatprep.subr.bf16.mxu0 0
        %3379 = vmatpush1.bf16.msra.mxu0 0
        %3380 = vmatprep.subr.bf16.mxu0 0
        %3381 = vmatpush1.bf16.msra.mxu0 0
        %3382 = vmatprep.subr.bf16.mxu0 0
        %3383 = vmatpush1.bf16.msra.mxu0 0
        %3384 = vmatprep.subr.bf16.mxu0 0
        %3385 = vmatpush1.bf16.msra.mxu0 0
        %3386 = vmatprep.subr.bf16.mxu0 0
        %3387 = vmatpush1.bf16.msra.mxu0 0
        %3388 = vmatprep.subr.bf16.mxu0 0
        %3389 = vmatpush1.bf16.msra.mxu0 0
        %3390 = vmatprep.subr.bf16.mxu0 0
        %3391 = vmatpush1.bf16.msra.mxu0 0
        %3392 = vmatprep.subr.bf16.mxu0 0
        %3393 = vmatpush1.bf16.msra.mxu0 0
        %3394 = vmatprep.subr.bf16.mxu0 0
        %3395 = vmatpush1.bf16.msra.mxu0 0
        %3396 = vmatprep.subr.bf16.mxu0 0
        %3397 = vmatpush1.bf16.msra.mxu0 0
        %3398 = vmatprep.subr.bf16.mxu0 0
        %3399 = vmatpush1.bf16.msra.mxu0 0
        %3400 = vmatprep.mubr.bf16.mxu0 0
        %3401 = vmatmul.mubr.bf16.gmra.mrb[0].mxu0 %v3366
        %v3402 = vpop.f32.mrb[0].mxu0
        %v3403 = vadd.f32 %v3363, %v3402
        %v3404 = vpop.f32.mrb[0].mxu0
        %v3405 = vadd.f32 %v3363, %v3404
        %v3406 = vpop.f32.mrb[0].mxu0
        %v3407 = vpop.f32.mrb[0].mxu0
        %3408 = vdwg.mxu0
        %v3409 = vadd.f32 %v3356, %v3403
        %v3410 = vadd.f32 %v3357, %v3405
        %s3411 = sld [smem:[#allocation2 + $0x1a]]
        %vm3412 = vcmp.ge.f32.partialorder %v3409, 0.0
        %vm3413 = vcmp.ge.f32.partialorder %v3410, 0.0
        %v3414 = vstv %s3411
        %v3415 = vmul.f32 %v3414, %v3409
        %v3416 = vmul.f32 %v3414, %v3410
        %v3417 = vsel %vm3412, %v3409, %v3415
        %v3418 = vsel %vm3413, %v3410, %v3416
        %v3419 = vld [vmem:[#allocation6 + $0x150] sm:$0xf]
        %v3420 = vpack.c.bf16 %v3417, %v3417
        %v3421 = vpack.c.bf16 %v3418, %v3418
        %v3422 = vld [vmem:[#allocation7 + $0x128] sm:$0xff]
        %3424 = vset.pattern.permute.xlu0 0
        %3425 = vperm.xlu0 %3424, %v3422
        %v3426 = vpop.permute.xlu0 %3425
        %v3429 = vsel %vm302, %v3419, 0
        %v3432 = vsel %vm306, %v3420, 0
        %v3435 = vsel %vm306, %v3421, 0
        %3437 = vmatprep.subr.bf16.mxu0 %v3435
        %3438 = vmatpush1.bf16.msra.mxu0 %v3432
        %3439 = vmatprep.subr.bf16.mxu0 0
        %3440 = vmatpush1.bf16.msra.mxu0 0
        %3441 = vmatprep.subr.bf16.mxu0 0
        %3442 = vmatpush1.bf16.msra.mxu0 0
        %3443 = vmatprep.subr.bf16.mxu0 0
        %3444 = vmatpush1.bf16.msra.mxu0 0
        %3445 = vmatprep.subr.bf16.mxu0 0
        %3446 = vmatpush1.bf16.msra.mxu0 0
        %3447 = vmatprep.subr.bf16.mxu0 0
        %3448 = vmatpush1.bf16.msra.mxu0 0
        %3449 = vmatprep.subr.bf16.mxu0 0
        %3450 = vmatpush1.bf16.msra.mxu0 0
        %3451 = vmatprep.subr.bf16.mxu0 0
        %3452 = vmatpush1.bf16.msra.mxu0 0
        %3453 = vmatprep.subr.bf16.mxu0 0
        %3454 = vmatpush1.bf16.msra.mxu0 0
        %3455 = vmatprep.subr.bf16.mxu0 0
        %3456 = vmatpush1.bf16.msra.mxu0 0
        %3457 = vmatprep.subr.bf16.mxu0 0
        %3458 = vmatpush1.bf16.msra.mxu0 0
        %3459 = vmatprep.subr.bf16.mxu0 0
        %3460 = vmatpush1.bf16.msra.mxu0 0
        %3461 = vmatprep.subr.bf16.mxu0 0
        %3462 = vmatpush1.bf16.msra.mxu0 0
        %3463 = vmatprep.subr.bf16.mxu0 0
        %3464 = vmatpush1.bf16.msra.mxu0 0
        %3465 = vmatprep.subr.bf16.mxu0 0
        %3466 = vmatpush1.bf16.msra.mxu0 0
        %3467 = vmatprep.subr.bf16.mxu0 0
        %3468 = vmatpush1.bf16.msra.mxu0 0
        %3469 = vmatprep.mubr.bf16.mxu0 0
        %3470 = vmatmul.mubr.bf16.gmra.mrb[0].mxu0 %v3429
        %v3471 = vpop.f32.mrb[0].mxu0
        %v3472 = vadd.f32 %v3426, %v3471
        %v3473 = vpop.f32.mrb[0].mxu0
        %v3474 = vadd.f32 %v3426, %v3473
        %v3475 = vpop.f32.mrb[0].mxu0
        %v3476 = vpop.f32.mrb[0].mxu0
        %3477 = vdwg.mxu0
        %v3478 = vxor.u32 %v3472, 2147483648
        %v3479 = vxor.u32 %v3474, 2147483648
        %v3480 = vmul.f32 %v3478, 1.442695
        %v3481 = vpow.pop %v3480
        %v3482 = vmul.f32 %v3479, 1.442695
        %v3483 = vpow.pop %v3482
        %v3484 = vadd.f32 %v3481, 1.0
        %v3485 = vadd.f32 %v3483, 1.0
        %v3486 = vrcp.pop %v3484
        %v3487 = vmul.f32 1.0, %v3486
        %v3488 = vrcp.pop %v3485
        %v3489 = vmul.f32 1.0, %v3488
        %3490 = vst [vmem:[%s261] sm:$0xff] %v3487
        %3491 = vst [vmem:[%s261 + $0x8] sm:$0xff] %v3489
        %s3492 = sand.u32 %s140, 1
        %s3493 = scalar_lea.sflag [#allocation4], %s3492
        %s3494 = sand.u32 %s140, 1
        %s3495 = smul.addr %s3494, 16
        %s3496 = scalar_lea.vmem [#allocation9], %s3495
        // Predicated region
        $region53: #{_lambda_.1} parent=39 // pred_check
          %p3497 = pneg %p150
        $region54: #{_lambda_.1} parent=39 // pred_check_branch
          %3499 = sbr.rel (%p3497) target = $region56
        $region55: #{_lambda_.1} parent=39 // pred_region
          %s3501 = ssub.s32 256, 256
          %3502 = vsyncadd %s3493, %s3501
          %s3503 = smul.addr %s22, 2
          %s3504 = smul.addr %s3503, 128
          %s3505 = scalar_lea.hbm %s5, %s3504
          %s3507 = sshll.u32 %s3496, 4
          %s3508 = int_to_ptr.vmem [resolvable:$true] %s3507
          %3510 = dma.vmem_to_hbm [thread:$0]  %s3508, 256, %s3505, %s3493
        $region56: #{_lambda_.1} parent=39 // pred_fallthru
          _
      $region40: #{_lambda_.1} parent=5 // pred_fallthru
        _
      %p3511 = scmp.le.s32.totalorder 2, %s17
      // Predicated region
      $region57: #{_lambda_.1} parent=5 // pred_check
        %p3512 = pneg %p3511
      $region58: #{_lambda_.1} parent=5 // pred_check_branch
        %3514 = sbr.rel (%p3512) target = $region60
      $region59: #{_lambda_.1} parent=5 // pred_region
        %s3515 = ssub.s32 %s17, 2
        // Predicated region
        $region61: #{_lambda_.1} parent=59 // pred_check
          %p3516 = pneg %p156
        $region62: #{_lambda_.1} parent=59 // pred_check_branch
          %3518 = sbr.rel (%p3516) target = $region64
        $region63: #{_lambda_.1} parent=59 // pred_region
          %s3519 = sand.u32 %s141, 1
          %s3520 = scalar_lea.sflag [#allocation4], %s3519
          %s3521 = sand.u32 %s141, 1
          %s3522 = smul.addr %s3521, 16
          %s3523 = scalar_lea.vmem [#allocation9], %s3522
          %3524 = dma.done %s3520, 256
        $region64: #{_lambda_.1} parent=59 // pred_fallthru
          _
      $region60: #{_lambda_.1} parent=5 // pred_fallthru
        _
    $region6: #{_lambda_.1} parent=1 // loop_footer
      %s21 = sadd.s32 1, %s17
    $region7: #{_lambda_.1} parent=1 // loop_footer_branch
      %16 = sbr.rel target = $region3
    $region8: #{_lambda_.1} parent=1 // loop_exit
      _
    %3525 = vsyncpa [#allocation3], 1
    %s3526 = scalar_lea.sflag [#allocation3], 1
    %3527 = vsyncpa %s3526, 1
    %3528 = vsyncpa [#allocation8], 1
    %3529 = vsyncpa [#allocation4], 1
    %s3530 = scalar_lea.sflag [#allocation4], 1
    %3531 = vsyncpa %s3530, 1
    %3532 = vsyncpa [#allocation5], 1
    %s3533 = scalar_lea.sflag [#allocation5], 1
    %3534 = vsyncpa %s3533, 1

</llo_original>
